<compile_context>
chip_gen: v6e
topology: v6e:2x2x1
jax: 0.10.0
libtpu: 0.0.40
codegen_flags: <defaults>
</compile_context>

<pallas_src>
import functools

import numpy as np
import jax
import jax.numpy as jnp
from jax.experimental import pallas as pl
from jax.experimental.pallas import tpu as pltpu


def _gelu(x):
    # TODO(synk): PyTorch F.gelu default is the exact erf-based GELU; erf has
    # no guaranteed Mosaic lowering, so the tanh approximation is used here.
    return jax.nn.gelu(x, approximate=True)


def fno1d_kernel(x_ref, fdft_ref, fidft_ref,
                 fc0w_ref, fc0b_ref,
                 wbig_ref, cw_ref, cb_ref,
                 fc1w_ref, fc1b_ref, fc2wt_ref, fc2bt_ref,
                 out_ref,
                 s_cat, s_mix,
                 *, B, N, modes, C):
    f32 = jnp.float32
    m = modes

    # Lifting layer fc0, batch fused into the matmul M dimension: (B*N, C).
    h = jnp.dot(x_ref[...], fc0w_ref[...], preferred_element_type=f32) + fc0b_ref[...]

    fdft = fdft_ref[...]     # (2m, N)  stacked [cos; -sin]  (truncated rfft)
    fidft = fidft_ref[...]   # (N, 2m)  stacked [icos, -isin] (truncated irfft)

    for layer in range(4):
        wbig = wbig_ref[layer]   # (m, 2C, 2C) packed per-mode complex mixing
        cw = cw_ref[layer]       # (C, C)      1x1 conv weight (in, out)
        cb = cb_ref[layer]       # (1, C)

        # ---- SpectralConv1d: truncated rfft (one stacked matmul per batch) ----
        for b in range(B):
            hb = jnp.dot(fdft, h[b * N:(b + 1) * N, :],
                         preferred_element_type=f32)                # (2m, C) = [re; im]
            # mode-major staging: row k of s_cat[:, b, :] holds [re_k | im_k]
            s_cat[:, b, :] = jnp.concatenate([hb[:m], hb[m:]], axis=-1)

        # Per-mode complex channel mixing as ONE mode-batched MXU matmul.
        oc = jnp.einsum('kbi,kij->kbj', s_cat[...], wbig,
                        preferred_element_type=f32)                 # (m, B, 2C)
        s_mix[...] = oc

        # ---- 1x1 Conv1d: pointwise channel matmul, batch fused in M ----
        y_conv = jnp.dot(h, cw, preferred_element_type=f32) + cb    # (B*N, C)

        # ---- truncated irfft (one stacked matmul per batch) + residual add ----
        pieces = []
        for b in range(B):
            ob = s_mix[:, b, :]                                     # (m, 2C)
            ost = jnp.concatenate([ob[:, :C], ob[:, C:]], axis=0)   # (2m, C) = [re; im]
            y_spec = jnp.dot(fidft, ost, preferred_element_type=f32)  # (N, C)
            pieces.append(y_spec + y_conv[b * N:(b + 1) * N, :])
        h = jnp.concatenate(pieces, axis=0)                         # (B*N, C)
        if layer < 3:
            h = _gelu(h)

    # Projection head, still batch-fused.
    z = jnp.dot(h, fc1w_ref[...], preferred_element_type=f32) + fc1b_ref[...]
    z = _gelu(z)
    # Transposed final matmul -> lane-dense (out_d, B*N) output slab.
    zt = jnp.einsum('oj,rj->or', fc2wt_ref[...], z,
                    preferred_element_type=f32) + fc2bt_ref[...]
    out_ref[...] = zt


def fno1d_forward(x, params, modes):
    B, N, in_d = x.shape
    width = params["fc0_w"].shape[1]
    out_d = params["fc2_w"].shape[1]
    assert modes <= N // 2 + 1, "truncated DFT requires modes <= N//2 + 1"

    # ---- host-side operand prep (plain numpy / XLA glue) ----
    n = np.arange(N)[:, None].astype(np.float64)
    k = np.arange(modes)[None, :].astype(np.float64)
    ang = 2.0 * np.pi * n * k / N
    ct = np.cos(ang).T                                   # (m, N)
    st = np.sin(ang).T                                   # (m, N)
    sc = np.where((k == 0) | ((N % 2 == 0) & (k == N // 2)), 1.0, 2.0)
    ic = np.cos(ang) * sc / N                            # (N, m)
    isn = np.sin(ang) * sc / N                           # (N, m)
    fdft = jnp.asarray(np.concatenate([ct, -st], axis=0), jnp.float32)    # (2m, N)
    fidft = jnp.asarray(np.concatenate([ic, -isn], axis=1), jnp.float32)  # (N, 2m)

    # Pack the per-mode complex mixing as a real (2C_in, 2C_out) block matrix:
    #   [re_out | im_out] = [re_in | im_in] @ [[Wre, Wim], [-Wim, Wre]]
    wre_io = jnp.transpose(params["spec_wre"], (0, 1, 3, 2))   # (L, m, in, out)
    wim_io = jnp.transpose(params["spec_wim"], (0, 1, 3, 2))
    w_big = jnp.concatenate(
        [jnp.concatenate([wre_io, wim_io], axis=-1),
         jnp.concatenate([-wim_io, wre_io], axis=-1)], axis=-2)  # (L, m, 2C, 2C)

    x2 = x.reshape(B * N, in_d).astype(jnp.float32)
    fc2_wt = params["fc2_w"].T    # (out_d, 128)
    fc2_bt = params["fc2_b"].T    # (out_d, 1)

    kernel = functools.partial(fno1d_kernel, B=B, N=N, modes=modes, C=width)

    # No grid: a single invocation with whole-array VMEM blocks (everything is
    # tiny), so there is no per-step pipeline / double-buffering overhead.
    out_t = pl.pallas_call(
        kernel,
        out_shape=jax.ShapeDtypeStruct((out_d, B * N), jnp.float32),
        scratch_shapes=[
            pltpu.VMEM((modes, B, 2 * width), jnp.float32),   # rfft staging
            pltpu.VMEM((modes, B, 2 * width), jnp.float32),   # mixed spectrum
        ],
    )(x2, fdft, fidft,
      params["fc0_w"], params["fc0_b"],
      w_big, params["conv_w"], params["conv_b"],
      params["fc1_w"], params["fc1_b"], fc2_wt, fc2_bt)

    return jnp.transpose(out_t, (1, 0)).reshape(B, N, out_d)


def init_params(key, in_d=2, width=32, modes=8, out_d=1):
    ks = jax.random.split(key, 10)

    def uni(k, shape, bound):
        return jax.random.uniform(k, shape, jnp.float32, -bound, bound)

    p = {}
    b0 = 1.0 / np.sqrt(in_d)
    p["fc0_w"] = uni(ks[0], (in_d, width), b0)
    p["fc0_b"] = uni(ks[1], (1, width), b0)

    # SpectralConv1d: torch.rand(in, out, modes) * (1/(in*out)); stored here as
    # (layer, modes, out, in) to match the reference / kernel contraction.
    scale = 1.0 / (width * width)
    p["spec_wre"] = jax.random.uniform(ks[2], (4, modes, width, width), jnp.float32, 0.0, scale)
    p["spec_wim"] = jax.random.uniform(ks[3], (4, modes, width, width), jnp.float32, 0.0, scale)

    bc = 1.0 / np.sqrt(width)
    p["conv_w"] = uni(ks[4], (4, width, width), bc)      # (layer, C_in, C_out)
    p["conv_b"] = uni(ks[5], (4, 1, width), bc)

    b1 = 1.0 / np.sqrt(width)
    p["fc1_w"] = uni(ks[6], (width, 128), b1)
    p["fc1_b"] = uni(ks[7], (1, 128), b1)
    b2 = 1.0 / np.sqrt(128)
    p["fc2_w"] = uni(ks[8], (128, out_d), b2)
    p["fc2_b"] = uni(ks[9], (1, out_d), b2)
    return p


def fno1d_reference(x, params, modes):
    """Pure-JAX reference using jnp.fft, mirroring the PyTorch module."""
    N = x.shape[1]
    h = x @ params["fc0_w"] + params["fc0_b"]
    for layer in range(4):
        w = params["spec_wre"][layer] + 1j * params["spec_wim"][layer]   # (modes, o, i)
        hf = jnp.fft.rfft(h, axis=1)[:, :modes, :]                       # (B, modes, C_in)
        of = jnp.einsum("bki,koi->bko", hf, w)
        out_ft = jnp.zeros((h.shape[0], N // 2 + 1, h.shape[2]), dtype=of.dtype)
        out_ft = out_ft.at[:, :modes, :].set(of)
        y_spec = jnp.fft.irfft(out_ft, n=N, axis=1)
        y_conv = h @ params["conv_w"][layer] + params["conv_b"][layer]
        h = y_spec + y_conv
        if layer < 3:
            h = jax.nn.gelu(h, approximate=True)
    z = jax.nn.gelu(h @ params["fc1_w"] + params["fc1_b"], approximate=True)
    return z @ params["fc2_w"] + params["fc2_b"]


if __name__ == "__main__":
    B, N, in_d, width, modes, out_d = 2, 16, 2, 32, 8, 1

    key = jax.random.PRNGKey(0)
    kx, kp = jax.random.split(key)
    x = jax.random.normal(kx, (B, N, in_d), jnp.float32)
    params = init_params(kp, in_d=in_d, width=width, modes=modes, out_d=out_d)

    out = fno1d_forward(x, params, modes)
    out = jax.block_until_ready(out)
    assert out.shape == (B, N, out_d)

    ref = fno1d_reference(x, params, modes)
    err = float(jnp.max(jnp.abs(out - ref)))
    assert err < 1e-3, f"mismatch vs jnp.fft reference: {err}"

    print("KERNEL_OK")
</pallas_src>

<mosaic_0001>
module attributes {stable_mosaic.version = 11 : i64} {
  func.func @fno1d_kernel(%arg0: memref<32x2xf32, #tpu.memory_space<vmem>>, %arg1: memref<16x16xf32, #tpu.memory_space<vmem>>, %arg2: memref<16x16xf32, #tpu.memory_space<vmem>>, %arg3: memref<2x32xf32, #tpu.memory_space<vmem>>, %arg4: memref<1x32xf32, #tpu.memory_space<vmem>>, %arg5: memref<4x8x64x64xf32, #tpu.memory_space<vmem>>, %arg6: memref<4x32x32xf32, #tpu.memory_space<vmem>>, %arg7: memref<4x1x32xf32, #tpu.memory_space<vmem>>, %arg8: memref<32x128xf32, #tpu.memory_space<vmem>>, %arg9: memref<1x128xf32, #tpu.memory_space<vmem>>, %arg10: memref<1x128xf32, #tpu.memory_space<vmem>>, %arg11: memref<1x1xf32, #tpu.memory_space<vmem>>, %arg12: memref<1x32xf32, #tpu.memory_space<vmem>>, %arg13: memref<8x2x64xf32, #tpu.memory_space<vmem>>, %arg14: memref<8x2x64xf32, #tpu.memory_space<vmem>>) attributes {dimension_semantics = [], scalar_prefetch = 0 : i64, scratch_operands = 2 : i64, tpu.core_type = #tpu.core_type<tc>} {
    %c0 = arith.constant 0 : index
    %c0_0 = arith.constant 0 : index
    %0 = vector.load %arg0[%c0, %c0_0] : memref<32x2xf32, #tpu.memory_space<vmem>>, vector<32x2xf32>
    %c0_1 = arith.constant 0 : index
    %c0_2 = arith.constant 0 : index
    %1 = vector.load %arg3[%c0_1, %c0_2] : memref<2x32xf32, #tpu.memory_space<vmem>>, vector<2x32xf32>
    %cst = arith.constant dense<0.000000e+00> : vector<32x32xf32>
    %2 = tpu.matmul %0, %1, %cst {dimension_numbers = #tpu.dot_dimension_numbers<[1], [0], [0], [1], [0, 0, 1, 1], [], []>} : vector<32x2xf32>, vector<2x32xf32>, vector<32x32xf32> -> vector<32x32xf32>
    %c0_3 = arith.constant 0 : index
    %c0_4 = arith.constant 0 : index
    %3 = vector.load %arg4[%c0_3, %c0_4] : memref<1x32xf32, #tpu.memory_space<vmem>>, vector<1x32xf32>
    %4 = vector.broadcast %3 : vector<1x32xf32> to vector<32x32xf32>
    %5 = arith.addf %2, %4 : vector<32x32xf32>
    %c0_5 = arith.constant 0 : index
    %c0_6 = arith.constant 0 : index
    %6 = vector.load %arg1[%c0_5, %c0_6] : memref<16x16xf32, #tpu.memory_space<vmem>>, vector<16x16xf32>
    %c0_7 = arith.constant 0 : index
    %c0_8 = arith.constant 0 : index
    %7 = vector.load %arg2[%c0_7, %c0_8] : memref<16x16xf32, #tpu.memory_space<vmem>>, vector<16x16xf32>
    %c0_9 = arith.constant 0 : index
    %c0_10 = arith.constant 0 : index
    %c0_11 = arith.constant 0 : index
    %c0_12 = arith.constant 0 : index
    %8 = vector.load %arg5[%c0_9, %c0_10, %c0_11, %c0_12] : memref<4x8x64x64xf32, #tpu.memory_space<vmem>>, vector<1x8x64x64xf32>
    %9 = vector.shape_cast %8 : vector<1x8x64x64xf32> to vector<8x64x64xf32>
    %c0_13 = arith.constant 0 : index
    %c0_14 = arith.constant 0 : index
    %c0_15 = arith.constant 0 : index
    %10 = vector.load %arg6[%c0_13, %c0_14, %c0_15] : memref<4x32x32xf32, #tpu.memory_space<vmem>>, vector<1x32x32xf32>
    %11 = vector.shape_cast %10 : vector<1x32x32xf32> to vector<32x32xf32>
    %c0_16 = arith.constant 0 : index
    %c0_17 = arith.constant 0 : index
    %c0_18 = arith.constant 0 : index
    %12 = vector.load %arg7[%c0_16, %c0_17, %c0_18] : memref<4x1x32xf32, #tpu.memory_space<vmem>>, vector<1x1x32xf32>
    %13 = vector.shape_cast %12 : vector<1x1x32xf32> to vector<1x32xf32>
    %14 = vector.extract_strided_slice %5 {offsets = [0, 0], sizes = [16, 32], strides = [1, 1]} : vector<32x32xf32> to vector<16x32xf32>
    %cst_19 = arith.constant dense<0.000000e+00> : vector<16x32xf32>
    %15 = tpu.matmul %6, %14, %cst_19 {dimension_numbers = #tpu.dot_dimension_numbers<[1], [0], [0], [1], [0, 0, 1, 1], [], []>} : vector<16x16xf32>, vector<16x32xf32>, vector<16x32xf32> -> vector<16x32xf32>
    %16 = vector.extract_strided_slice %15 {offsets = [0, 0], sizes = [8, 32], strides = [1, 1]} : vector<16x32xf32> to vector<8x32xf32>
    %17 = vector.extract_strided_slice %15 {offsets = [8, 0], sizes = [8, 32], strides = [1, 1]} : vector<16x32xf32> to vector<8x32xf32>
    %18 = tpu.concatenate %16, %17 in 1 : vector<8x32xf32>, vector<8x32xf32> -> vector<8x64xf32>
    %c0_20 = arith.constant 0 : index
    %c0_21 = arith.constant 0 : index
    %c0_22 = arith.constant 0 : index
    %19 = vector.load %arg13[%c0_20, %c0_21, %c0_22] : memref<8x2x64xf32, #tpu.memory_space<vmem>>, vector<8x1x64xf32>
    %20 = vector.shape_cast %19 : vector<8x1x64xf32> to vector<8x64xf32>
    %21 = vector.shape_cast %18 : vector<8x64xf32> to vector<8x1x64xf32>
    tpu.vector_store %arg13[%c0_20, %c0_21, %c0_22], %21 {strides = array<i32>} : memref<8x2x64xf32, #tpu.memory_space<vmem>>, vector<8x1x64xf32>,
    %22 = vector.extract_strided_slice %5 {offsets = [16, 0], sizes = [16, 32], strides = [1, 1]} : vector<32x32xf32> to vector<16x32xf32>
    %cst_23 = arith.constant dense<0.000000e+00> : vector<16x32xf32>
    %23 = tpu.matmul %6, %22, %cst_23 {dimension_numbers = #tpu.dot_dimension_numbers<[1], [0], [0], [1], [0, 0, 1, 1], [], []>} : vector<16x16xf32>, vector<16x32xf32>, vector<16x32xf32> -> vector<16x32xf32>
    %24 = vector.extract_strided_slice %23 {offsets = [0, 0], sizes = [8, 32], strides = [1, 1]} : vector<16x32xf32> to vector<8x32xf32>
    %25 = vector.extract_strided_slice %23 {offsets = [8, 0], sizes = [8, 32], strides = [1, 1]} : vector<16x32xf32> to vector<8x32xf32>
    %26 = tpu.concatenate %24, %25 in 1 : vector<8x32xf32>, vector<8x32xf32> -> vector<8x64xf32>
    %c0_24 = arith.constant 0 : index
    %c1 = arith.constant 1 : index
    %c0_25 = arith.constant 0 : index
    %27 = vector.load %arg13[%c0_24, %c1, %c0_25] : memref<8x2x64xf32, #tpu.memory_space<vmem>>, vector<8x1x64xf32>
    %28 = vector.shape_cast %27 : vector<8x1x64xf32> to vector<8x64xf32>
    %29 = vector.shape_cast %26 : vector<8x64xf32> to vector<8x1x64xf32>
    tpu.vector_store %arg13[%c0_24, %c1, %c0_25], %29 {strides = array<i32>} : memref<8x2x64xf32, #tpu.memory_space<vmem>>, vector<8x1x64xf32>,
    %c0_26 = arith.constant 0 : index
    %c0_27 = arith.constant 0 : index
    %c0_28 = arith.constant 0 : index
    %30 = vector.load %arg13[%c0_26, %c0_27, %c0_28] : memref<8x2x64xf32, #tpu.memory_space<vmem>>, vector<8x2x64xf32>
    "tpu.trace_start"() <{level = 10 : i32, message = "kbi,kij->kbj"}> : () -> ()
    %cst_29 = arith.constant dense<0.000000e+00> : vector<8x2x64xf32>
    %31 = tpu.matmul %30, %9, %cst_29 {dimension_numbers = #tpu.dot_dimension_numbers<[2], [1], [1], [2], [0, 0, 0, 1, 1, 2], [0], [0]>} : vector<8x2x64xf32>, vector<8x64x64xf32>, vector<8x2x64xf32> -> vector<8x2x64xf32>
    "tpu.trace_stop"() : () -> ()
    %c0_30 = arith.constant 0 : index
    %c0_31 = arith.constant 0 : index
    %c0_32 = arith.constant 0 : index
    %32 = vector.load %arg14[%c0_30, %c0_31, %c0_32] : memref<8x2x64xf32, #tpu.memory_space<vmem>>, vector<8x2x64xf32>
    tpu.vector_store %arg14[%c0_30, %c0_31, %c0_32], %31 {strides = array<i32>} : memref<8x2x64xf32, #tpu.memory_space<vmem>>, vector<8x2x64xf32>,
    %cst_33 = arith.constant dense<0.000000e+00> : vector<32x32xf32>
    %33 = tpu.matmul %5, %11, %cst_33 {dimension_numbers = #tpu.dot_dimension_numbers<[1], [0], [0], [1], [0, 0, 1, 1], [], []>} : vector<32x32xf32>, vector<32x32xf32>, vector<32x32xf32> -> vector<32x32xf32>
    %34 = vector.broadcast %13 : vector<1x32xf32> to vector<32x32xf32>
    %35 = arith.addf %33, %34 : vector<32x32xf32>
    %c0_34 = arith.constant 0 : index
    %c0_35 = arith.constant 0 : index
    %c0_36 = arith.constant 0 : index
    %36 = vector.load %arg14[%c0_34, %c0_35, %c0_36] : memref<8x2x64xf32, #tpu.memory_space<vmem>>, vector<8x1x64xf32>
    %37 = vector.shape_cast %36 : vector<8x1x64xf32> to vector<8x64xf32>
    %38 = vector.extract_strided_slice %37 {offsets = [0, 0], sizes = [8, 32], strides = [1, 1]} : vector<8x64xf32> to vector<8x32xf32>
    %39 = vector.extract_strided_slice %37 {offsets = [0, 32], sizes = [8, 32], strides = [1, 1]} : vector<8x64xf32> to vector<8x32xf32>
    %40 = tpu.concatenate %38, %39 in 0 : vector<8x32xf32>, vector<8x32xf32> -> vector<16x32xf32>
    %cst_37 = arith.constant dense<0.000000e+00> : vector<16x32xf32>
    %41 = tpu.matmul %7, %40, %cst_37 {dimension_numbers = #tpu.dot_dimension_numbers<[1], [0], [0], [1], [0, 0, 1, 1], [], []>} : vector<16x16xf32>, vector<16x32xf32>, vector<16x32xf32> -> vector<16x32xf32>
    %42 = vector.extract_strided_slice %35 {offsets = [0, 0], sizes = [16, 32], strides = [1, 1]} : vector<32x32xf32> to vector<16x32xf32>
    %43 = arith.addf %41, %42 : vector<16x32xf32>
    %c0_38 = arith.constant 0 : index
    %c1_39 = arith.constant 1 : index
    %c0_40 = arith.constant 0 : index
    %44 = vector.load %arg14[%c0_38, %c1_39, %c0_40] : memref<8x2x64xf32, #tpu.memory_space<vmem>>, vector<8x1x64xf32>
    %45 = vector.shape_cast %44 : vector<8x1x64xf32> to vector<8x64xf32>
    %46 = vector.extract_strided_slice %45 {offsets = [0, 0], sizes = [8, 32], strides = [1, 1]} : vector<8x64xf32> to vector<8x32xf32>
    %47 = vector.extract_strided_slice %45 {offsets = [0, 32], sizes = [8, 32], strides = [1, 1]} : vector<8x64xf32> to vector<8x32xf32>
    %48 = tpu.concatenate %46, %47 in 0 : vector<8x32xf32>, vector<8x32xf32> -> vector<16x32xf32>
    %cst_41 = arith.constant dense<0.000000e+00> : vector<16x32xf32>
    %49 = tpu.matmul %7, %48, %cst_41 {dimension_numbers = #tpu.dot_dimension_numbers<[1], [0], [0], [1], [0, 0, 1, 1], [], []>} : vector<16x16xf32>, vector<16x32xf32>, vector<16x32xf32> -> vector<16x32xf32>
    %50 = vector.extract_strided_slice %35 {offsets = [16, 0], sizes = [16, 32], strides = [1, 1]} : vector<32x32xf32> to vector<16x32xf32>
    %51 = arith.addf %49, %50 : vector<16x32xf32>
    %52 = tpu.concatenate %43, %51 in 0 : vector<16x32xf32>, vector<16x32xf32> -> vector<32x32xf32>
    %53 = arith.mulf %52, %52 : vector<32x32xf32>
    %54 = arith.mulf %52, %53 : vector<32x32xf32>
    %cst_42 = arith.constant 4.471500e-02 : f32
    %55 = vector.broadcast %cst_42 : f32 to vector<32x32xf32>
    %56 = arith.mulf %55, %54 : vector<32x32xf32>
    %57 = arith.addf %52, %56 : vector<32x32xf32>
    %cst_43 = arith.constant 0.797884583 : f32
    %58 = vector.broadcast %cst_43 : f32 to vector<32x32xf32>
    %59 = arith.mulf %58, %57 : vector<32x32xf32>
    %60 = math.tanh %59 : vector<32x32xf32>
    %cst_44 = arith.constant 1.000000e+00 : f32
    %61 = vector.broadcast %cst_44 : f32 to vector<32x32xf32>
    %62 = arith.addf %61, %60 : vector<32x32xf32>
    %cst_45 = arith.constant 5.000000e-01 : f32
    %63 = vector.broadcast %cst_45 : f32 to vector<32x32xf32>
    %64 = arith.mulf %63, %62 : vector<32x32xf32>
    %65 = arith.mulf %52, %64 : vector<32x32xf32>
    %c1_46 = arith.constant 1 : index
    %c0_47 = arith.constant 0 : index
    %c0_48 = arith.constant 0 : index
    %c0_49 = arith.constant 0 : index
    %66 = vector.load %arg5[%c1_46, %c0_47, %c0_48, %c0_49] : memref<4x8x64x64xf32, #tpu.memory_space<vmem>>, vector<1x8x64x64xf32>
    %67 = vector.shape_cast %66 : vector<1x8x64x64xf32> to vector<8x64x64xf32>
    %c1_50 = arith.constant 1 : index
    %c0_51 = arith.constant 0 : index
    %c0_52 = arith.constant 0 : index
    %68 = vector.load %arg6[%c1_50, %c0_51, %c0_52] : memref<4x32x32xf32, #tpu.memory_space<vmem>>, vector<1x32x32xf32>
    %69 = vector.shape_cast %68 : vector<1x32x32xf32> to vector<32x32xf32>
    %c1_53 = arith.constant 1 : index
    %c0_54 = arith.constant 0 : index
    %c0_55 = arith.constant 0 : index
    %70 = vector.load %arg7[%c1_53, %c0_54, %c0_55] : memref<4x1x32xf32, #tpu.memory_space<vmem>>, vector<1x1x32xf32>
    %71 = vector.shape_cast %70 : vector<1x1x32xf32> to vector<1x32xf32>
    %72 = vector.extract_strided_slice %65 {offsets = [0, 0], sizes = [16, 32], strides = [1, 1]} : vector<32x32xf32> to vector<16x32xf32>
    %cst_56 = arith.constant dense<0.000000e+00> : vector<16x32xf32>
    %73 = tpu.matmul %6, %72, %cst_56 {dimension_numbers = #tpu.dot_dimension_numbers<[1], [0], [0], [1], [0, 0, 1, 1], [], []>} : vector<16x16xf32>, vector<16x32xf32>, vector<16x32xf32> -> vector<16x32xf32>
    %74 = vector.extract_strided_slice %73 {offsets = [0, 0], sizes = [8, 32], strides = [1, 1]} : vector<16x32xf32> to vector<8x32xf32>
    %75 = vector.extract_strided_slice %73 {offsets = [8, 0], sizes = [8, 32], strides = [1, 1]} : vector<16x32xf32> to vector<8x32xf32>
    %76 = tpu.concatenate %74, %75 in 1 : vector<8x32xf32>, vector<8x32xf32> -> vector<8x64xf32>
    %c0_57 = arith.constant 0 : index
    %c0_58 = arith.constant 0 : index
    %c0_59 = arith.constant 0 : index
    %77 = vector.load %arg13[%c0_57, %c0_58, %c0_59] : memref<8x2x64xf32, #tpu.memory_space<vmem>>, vector<8x1x64xf32>
    %78 = vector.shape_cast %77 : vector<8x1x64xf32> to vector<8x64xf32>
    %79 = vector.shape_cast %76 : vector<8x64xf32> to vector<8x1x64xf32>
    tpu.vector_store %arg13[%c0_57, %c0_58, %c0_59], %79 {strides = array<i32>} : memref<8x2x64xf32, #tpu.memory_space<vmem>>, vector<8x1x64xf32>,
    %80 = vector.extract_strided_slice %65 {offsets = [16, 0], sizes = [16, 32], strides = [1, 1]} : vector<32x32xf32> to vector<16x32xf32>
    %cst_60 = arith.constant dense<0.000000e+00> : vector<16x32xf32>
    %81 = tpu.matmul %6, %80, %cst_60 {dimension_numbers = #tpu.dot_dimension_numbers<[1], [0], [0], [1], [0, 0, 1, 1], [], []>} : vector<16x16xf32>, vector<16x32xf32>, vector<16x32xf32> -> vector<16x32xf32>
    %82 = vector.extract_strided_slice %81 {offsets = [0, 0], sizes = [8, 32], strides = [1, 1]} : vector<16x32xf32> to vector<8x32xf32>
    %83 = vector.extract_strided_slice %81 {offsets = [8, 0], sizes = [8, 32], strides = [1, 1]} : vector<16x32xf32> to vector<8x32xf32>
    %84 = tpu.concatenate %82, %83 in 1 : vector<8x32xf32>, vector<8x32xf32> -> vector<8x64xf32>
    %c0_61 = arith.constant 0 : index
    %c1_62 = arith.constant 1 : index
    %c0_63 = arith.constant 0 : index
    %85 = vector.load %arg13[%c0_61, %c1_62, %c0_63] : memref<8x2x64xf32, #tpu.memory_space<vmem>>, vector<8x1x64xf32>
    %86 = vector.shape_cast %85 : vector<8x1x64xf32> to vector<8x64xf32>
    %87 = vector.shape_cast %84 : vector<8x64xf32> to vector<8x1x64xf32>
    tpu.vector_store %arg13[%c0_61, %c1_62, %c0_63], %87 {strides = array<i32>} : memref<8x2x64xf32, #tpu.memory_space<vmem>>, vector<8x1x64xf32>,
    %c0_64 = arith.constant 0 : index
    %c0_65 = arith.constant 0 : index
    %c0_66 = arith.constant 0 : index
    %88 = vector.load %arg13[%c0_64, %c0_65, %c0_66] : memref<8x2x64xf32, #tpu.memory_space<vmem>>, vector<8x2x64xf32>
    "tpu.trace_start"() <{level = 10 : i32, message = "kbi,kij->kbj"}> : () -> ()
    %cst_67 = arith.constant dense<0.000000e+00> : vector<8x2x64xf32>
    %89 = tpu.matmul %88, %67, %cst_67 {dimension_numbers = #tpu.dot_dimension_numbers<[2], [1], [1], [2], [0, 0, 0, 1, 1, 2], [0], [0]>} : vector<8x2x64xf32>, vector<8x64x64xf32>, vector<8x2x64xf32> -> vector<8x2x64xf32>
    "tpu.trace_stop"() : () -> ()
    %c0_68 = arith.constant 0 : index
    %c0_69 = arith.constant 0 : index
    %c0_70 = arith.constant 0 : index
    %90 = vector.load %arg14[%c0_68, %c0_69, %c0_70] : memref<8x2x64xf32, #tpu.memory_space<vmem>>, vector<8x2x64xf32>
    tpu.vector_store %arg14[%c0_68, %c0_69, %c0_70], %89 {strides = array<i32>} : memref<8x2x64xf32, #tpu.memory_space<vmem>>, vector<8x2x64xf32>,
    %cst_71 = arith.constant dense<0.000000e+00> : vector<32x32xf32>
    %91 = tpu.matmul %65, %69, %cst_71 {dimension_numbers = #tpu.dot_dimension_numbers<[1], [0], [0], [1], [0, 0, 1, 1], [], []>} : vector<32x32xf32>, vector<32x32xf32>, vector<32x32xf32> -> vector<32x32xf32>
    %92 = vector.broadcast %71 : vector<1x32xf32> to vector<32x32xf32>
    %93 = arith.addf %91, %92 : vector<32x32xf32>
    %c0_72 = arith.constant 0 : index
    %c0_73 = arith.constant 0 : index
    %c0_74 = arith.constant 0 : index
    %94 = vector.load %arg14[%c0_72, %c0_73, %c0_74] : memref<8x2x64xf32, #tpu.memory_space<vmem>>, vector<8x1x64xf32>
    %95 = vector.shape_cast %94 : vector<8x1x64xf32> to vector<8x64xf32>
    %96 = vector.extract_strided_slice %95 {offsets = [0, 0], sizes = [8, 32], strides = [1, 1]} : vector<8x64xf32> to vector<8x32xf32>
    %97 = vector.extract_strided_slice %95 {offsets = [0, 32], sizes = [8, 32], strides = [1, 1]} : vector<8x64xf32> to vector<8x32xf32>
    %98 = tpu.concatenate %96, %97 in 0 : vector<8x32xf32>, vector<8x32xf32> -> vector<16x32xf32>
    %cst_75 = arith.constant dense<0.000000e+00> : vector<16x32xf32>
    %99 = tpu.matmul %7, %98, %cst_75 {dimension_numbers = #tpu.dot_dimension_numbers<[1], [0], [0], [1], [0, 0, 1, 1], [], []>} : vector<16x16xf32>, vector<16x32xf32>, vector<16x32xf32> -> vector<16x32xf32>
    %100 = vector.extract_strided_slice %93 {offsets = [0, 0], sizes = [16, 32], strides = [1, 1]} : vector<32x32xf32> to vector<16x32xf32>
    %101 = arith.addf %99, %100 : vector<16x32xf32>
    %c0_76 = arith.constant 0 : index
    %c1_77 = arith.constant 1 : index
    %c0_78 = arith.constant 0 : index
    %102 = vector.load %arg14[%c0_76, %c1_77, %c0_78] : memref<8x2x64xf32, #tpu.memory_space<vmem>>, vector<8x1x64xf32>
    %103 = vector.shape_cast %102 : vector<8x1x64xf32> to vector<8x64xf32>
    %104 = vector.extract_strided_slice %103 {offsets = [0, 0], sizes = [8, 32], strides = [1, 1]} : vector<8x64xf32> to vector<8x32xf32>
    %105 = vector.extract_strided_slice %103 {offsets = [0, 32], sizes = [8, 32], strides = [1, 1]} : vector<8x64xf32> to vector<8x32xf32>
    %106 = tpu.concatenate %104, %105 in 0 : vector<8x32xf32>, vector<8x32xf32> -> vector<16x32xf32>
    %cst_79 = arith.constant dense<0.000000e+00> : vector<16x32xf32>
    %107 = tpu.matmul %7, %106, %cst_79 {dimension_numbers = #tpu.dot_dimension_numbers<[1], [0], [0], [1], [0, 0, 1, 1], [], []>} : vector<16x16xf32>, vector<16x32xf32>, vector<16x32xf32> -> vector<16x32xf32>
    %108 = vector.extract_strided_slice %93 {offsets = [16, 0], sizes = [16, 32], strides = [1, 1]} : vector<32x32xf32> to vector<16x32xf32>
    %109 = arith.addf %107, %108 : vector<16x32xf32>
    %110 = tpu.concatenate %101, %109 in 0 : vector<16x32xf32>, vector<16x32xf32> -> vector<32x32xf32>
    %111 = arith.mulf %110, %110 : vector<32x32xf32>
    %112 = arith.mulf %110, %111 : vector<32x32xf32>
    %cst_80 = arith.constant 4.471500e-02 : f32
    %113 = vector.broadcast %cst_80 : f32 to vector<32x32xf32>
    %114 = arith.mulf %113, %112 : vector<32x32xf32>
    %115 = arith.addf %110, %114 : vector<32x32xf32>
    %cst_81 = arith.constant 0.797884583 : f32
    %116 = vector.broadcast %cst_81 : f32 to vector<32x32xf32>
    %117 = arith.mulf %116, %115 : vector<32x32xf32>
    %118 = math.tanh %117 : vector<32x32xf32>
    %cst_82 = arith.constant 1.000000e+00 : f32
    %119 = vector.broadcast %cst_82 : f32 to vector<32x32xf32>
    %120 = arith.addf %119, %118 : vector<32x32xf32>
    %cst_83 = arith.constant 5.000000e-01 : f32
    %121 = vector.broadcast %cst_83 : f32 to vector<32x32xf32>
    %122 = arith.mulf %121, %120 : vector<32x32xf32>
    %123 = arith.mulf %110, %122 : vector<32x32xf32>
    %c2 = arith.constant 2 : index
    %c0_84 = arith.constant 0 : index
    %c0_85 = arith.constant 0 : index
    %c0_86 = arith.constant 0 : index
    %124 = vector.load %arg5[%c2, %c0_84, %c0_85, %c0_86] : memref<4x8x64x64xf32, #tpu.memory_space<vmem>>, vector<1x8x64x64xf32>
    %125 = vector.shape_cast %124 : vector<1x8x64x64xf32> to vector<8x64x64xf32>
    %c2_87 = arith.constant 2 : index
    %c0_88 = arith.constant 0 : index
    %c0_89 = arith.constant 0 : index
    %126 = vector.load %arg6[%c2_87, %c0_88, %c0_89] : memref<4x32x32xf32, #tpu.memory_space<vmem>>, vector<1x32x32xf32>
    %127 = vector.shape_cast %126 : vector<1x32x32xf32> to vector<32x32xf32>
    %c2_90 = arith.constant 2 : index
    %c0_91 = arith.constant 0 : index
    %c0_92 = arith.constant 0 : index
    %128 = vector.load %arg7[%c2_90, %c0_91, %c0_92] : memref<4x1x32xf32, #tpu.memory_space<vmem>>, vector<1x1x32xf32>
    %129 = vector.shape_cast %128 : vector<1x1x32xf32> to vector<1x32xf32>
    %130 = vector.extract_strided_slice %123 {offsets = [0, 0], sizes = [16, 32], strides = [1, 1]} : vector<32x32xf32> to vector<16x32xf32>
    %cst_93 = arith.constant dense<0.000000e+00> : vector<16x32xf32>
    %131 = tpu.matmul %6, %130, %cst_93 {dimension_numbers = #tpu.dot_dimension_numbers<[1], [0], [0], [1], [0, 0, 1, 1], [], []>} : vector<16x16xf32>, vector<16x32xf32>, vector<16x32xf32> -> vector<16x32xf32>
    %132 = vector.extract_strided_slice %131 {offsets = [0, 0], sizes = [8, 32], strides = [1, 1]} : vector<16x32xf32> to vector<8x32xf32>
    %133 = vector.extract_strided_slice %131 {offsets = [8, 0], sizes = [8, 32], strides = [1, 1]} : vector<16x32xf32> to vector<8x32xf32>
    %134 = tpu.concatenate %132, %133 in 1 : vector<8x32xf32>, vector<8x32xf32> -> vector<8x64xf32>
    %c0_94 = arith.constant 0 : index
    %c0_95 = arith.constant 0 : index
    %c0_96 = arith.constant 0 : index
    %135 = vector.load %arg13[%c0_94, %c0_95, %c0_96] : memref<8x2x64xf32, #tpu.memory_space<vmem>>, vector<8x1x64xf32>
    %136 = vector.shape_cast %135 : vector<8x1x64xf32> to vector<8x64xf32>
    %137 = vector.shape_cast %134 : vector<8x64xf32> to vector<8x1x64xf32>
    tpu.vector_store %arg13[%c0_94, %c0_95, %c0_96], %137 {strides = array<i32>} : memref<8x2x64xf32, #tpu.memory_space<vmem>>, vector<8x1x64xf32>,
    %138 = vector.extract_strided_slice %123 {offsets = [16, 0], sizes = [16, 32], strides = [1, 1]} : vector<32x32xf32> to vector<16x32xf32>
    %cst_97 = arith.constant dense<0.000000e+00> : vector<16x32xf32>
    %139 = tpu.matmul %6, %138, %cst_97 {dimension_numbers = #tpu.dot_dimension_numbers<[1], [0], [0], [1], [0, 0, 1, 1], [], []>} : vector<16x16xf32>, vector<16x32xf32>, vector<16x32xf32> -> vector<16x32xf32>
    %140 = vector.extract_strided_slice %139 {offsets = [0, 0], sizes = [8, 32], strides = [1, 1]} : vector<16x32xf32> to vector<8x32xf32>
    %141 = vector.extract_strided_slice %139 {offsets = [8, 0], sizes = [8, 32], strides = [1, 1]} : vector<16x32xf32> to vector<8x32xf32>
    %142 = tpu.concatenate %140, %141 in 1 : vector<8x32xf32>, vector<8x32xf32> -> vector<8x64xf32>
    %c0_98 = arith.constant 0 : index
    %c1_99 = arith.constant 1 : index
    %c0_100 = arith.constant 0 : index
    %143 = vector.load %arg13[%c0_98, %c1_99, %c0_100] : memref<8x2x64xf32, #tpu.memory_space<vmem>>, vector<8x1x64xf32>
    %144 = vector.shape_cast %143 : vector<8x1x64xf32> to vector<8x64xf32>
    %145 = vector.shape_cast %142 : vector<8x64xf32> to vector<8x1x64xf32>
    tpu.vector_store %arg13[%c0_98, %c1_99, %c0_100], %145 {strides = array<i32>} : memref<8x2x64xf32, #tpu.memory_space<vmem>>, vector<8x1x64xf32>,
    %c0_101 = arith.constant 0 : index
    %c0_102 = arith.constant 0 : index
    %c0_103 = arith.constant 0 : index
    %146 = vector.load %arg13[%c0_101, %c0_102, %c0_103] : memref<8x2x64xf32, #tpu.memory_space<vmem>>, vector<8x2x64xf32>
    "tpu.trace_start"() <{level = 10 : i32, message = "kbi,kij->kbj"}> : () -> ()
    %cst_104 = arith.constant dense<0.000000e+00> : vector<8x2x64xf32>
    %147 = tpu.matmul %146, %125, %cst_104 {dimension_numbers = #tpu.dot_dimension_numbers<[2], [1], [1], [2], [0, 0, 0, 1, 1, 2], [0], [0]>} : vector<8x2x64xf32>, vector<8x64x64xf32>, vector<8x2x64xf32> -> vector<8x2x64xf32>
    "tpu.trace_stop"() : () -> ()
    %c0_105 = arith.constant 0 : index
    %c0_106 = arith.constant 0 : index
    %c0_107 = arith.constant 0 : index
    %148 = vector.load %arg14[%c0_105, %c0_106, %c0_107] : memref<8x2x64xf32, #tpu.memory_space<vmem>>, vector<8x2x64xf32>
    tpu.vector_store %arg14[%c0_105, %c0_106, %c0_107], %147 {strides = array<i32>} : memref<8x2x64xf32, #tpu.memory_space<vmem>>, vector<8x2x64xf32>,
    %cst_108 = arith.constant dense<0.000000e+00> : vector<32x32xf32>
    %149 = tpu.matmul %123, %127, %cst_108 {dimension_numbers = #tpu.dot_dimension_numbers<[1], [0], [0], [1], [0, 0, 1, 1], [], []>} : vector<32x32xf32>, vector<32x32xf32>, vector<32x32xf32> -> vector<32x32xf32>
    %150 = vector.broadcast %129 : vector<1x32xf32> to vector<32x32xf32>
    %151 = arith.addf %149, %150 : vector<32x32xf32>
    %c0_109 = arith.constant 0 : index
    %c0_110 = arith.constant 0 : index
    %c0_111 = arith.constant 0 : index
    %152 = vector.load %arg14[%c0_109, %c0_110, %c0_111] : memref<8x2x64xf32, #tpu.memory_space<vmem>>, vector<8x1x64xf32>
    %153 = vector.shape_cast %152 : vector<8x1x64xf32> to vector<8x64xf32>
    %154 = vector.extract_strided_slice %153 {offsets = [0, 0], sizes = [8, 32], strides = [1, 1]} : vector<8x64xf32> to vector<8x32xf32>
    %155 = vector.extract_strided_slice %153 {offsets = [0, 32], sizes = [8, 32], strides = [1, 1]} : vector<8x64xf32> to vector<8x32xf32>
    %156 = tpu.concatenate %154, %155 in 0 : vector<8x32xf32>, vector<8x32xf32> -> vector<16x32xf32>
    %cst_112 = arith.constant dense<0.000000e+00> : vector<16x32xf32>
    %157 = tpu.matmul %7, %156, %cst_112 {dimension_numbers = #tpu.dot_dimension_numbers<[1], [0], [0], [1], [0, 0, 1, 1], [], []>} : vector<16x16xf32>, vector<16x32xf32>, vector<16x32xf32> -> vector<16x32xf32>
    %158 = vector.extract_strided_slice %151 {offsets = [0, 0], sizes = [16, 32], strides = [1, 1]} : vector<32x32xf32> to vector<16x32xf32>
    %159 = arith.addf %157, %158 : vector<16x32xf32>
    %c0_113 = arith.constant 0 : index
    %c1_114 = arith.constant 1 : index
    %c0_115 = arith.constant 0 : index
    %160 = vector.load %arg14[%c0_113, %c1_114, %c0_115] : memref<8x2x64xf32, #tpu.memory_space<vmem>>, vector<8x1x64xf32>
    %161 = vector.shape_cast %160 : vector<8x1x64xf32> to vector<8x64xf32>
    %162 = vector.extract_strided_slice %161 {offsets = [0, 0], sizes = [8, 32], strides = [1, 1]} : vector<8x64xf32> to vector<8x32xf32>
    %163 = vector.extract_strided_slice %161 {offsets = [0, 32], sizes = [8, 32], strides = [1, 1]} : vector<8x64xf32> to vector<8x32xf32>
    %164 = tpu.concatenate %162, %163 in 0 : vector<8x32xf32>, vector<8x32xf32> -> vector<16x32xf32>
    %cst_116 = arith.constant dense<0.000000e+00> : vector<16x32xf32>
    %165 = tpu.matmul %7, %164, %cst_116 {dimension_numbers = #tpu.dot_dimension_numbers<[1], [0], [0], [1], [0, 0, 1, 1], [], []>} : vector<16x16xf32>, vector<16x32xf32>, vector<16x32xf32> -> vector<16x32xf32>
    %166 = vector.extract_strided_slice %151 {offsets = [16, 0], sizes = [16, 32], strides = [1, 1]} : vector<32x32xf32> to vector<16x32xf32>
    %167 = arith.addf %165, %166 : vector<16x32xf32>
    %168 = tpu.concatenate %159, %167 in 0 : vector<16x32xf32>, vector<16x32xf32> -> vector<32x32xf32>
    %169 = arith.mulf %168, %168 : vector<32x32xf32>
    %170 = arith.mulf %168, %169 : vector<32x32xf32>
    %cst_117 = arith.constant 4.471500e-02 : f32
    %171 = vector.broadcast %cst_117 : f32 to vector<32x32xf32>
    %172 = arith.mulf %171, %170 : vector<32x32xf32>
    %173 = arith.addf %168, %172 : vector<32x32xf32>
    %cst_118 = arith.constant 0.797884583 : f32
    %174 = vector.broadcast %cst_118 : f32 to vector<32x32xf32>
    %175 = arith.mulf %174, %173 : vector<32x32xf32>
    %176 = math.tanh %175 : vector<32x32xf32>
    %cst_119 = arith.constant 1.000000e+00 : f32
    %177 = vector.broadcast %cst_119 : f32 to vector<32x32xf32>
    %178 = arith.addf %177, %176 : vector<32x32xf32>
    %cst_120 = arith.constant 5.000000e-01 : f32
    %179 = vector.broadcast %cst_120 : f32 to vector<32x32xf32>
    %180 = arith.mulf %179, %178 : vector<32x32xf32>
    %181 = arith.mulf %168, %180 : vector<32x32xf32>
    %c3 = arith.constant 3 : index
    %c0_121 = arith.constant 0 : index
    %c0_122 = arith.constant 0 : index
    %c0_123 = arith.constant 0 : index
    %182 = vector.load %arg5[%c3, %c0_121, %c0_122, %c0_123] : memref<4x8x64x64xf32, #tpu.memory_space<vmem>>, vector<1x8x64x64xf32>
    %183 = vector.shape_cast %182 : vector<1x8x64x64xf32> to vector<8x64x64xf32>
    %c3_124 = arith.constant 3 : index
    %c0_125 = arith.constant 0 : index
    %c0_126 = arith.constant 0 : index
    %184 = vector.load %arg6[%c3_124, %c0_125, %c0_126] : memref<4x32x32xf32, #tpu.memory_space<vmem>>, vector<1x32x32xf32>
    %185 = vector.shape_cast %184 : vector<1x32x32xf32> to vector<32x32xf32>
    %c3_127 = arith.constant 3 : index
    %c0_128 = arith.constant 0 : index
    %c0_129 = arith.constant 0 : index
    %186 = vector.load %arg7[%c3_127, %c0_128, %c0_129] : memref<4x1x32xf32, #tpu.memory_space<vmem>>, vector<1x1x32xf32>
    %187 = vector.shape_cast %186 : vector<1x1x32xf32> to vector<1x32xf32>
    %188 = vector.extract_strided_slice %181 {offsets = [0, 0], sizes = [16, 32], strides = [1, 1]} : vector<32x32xf32> to vector<16x32xf32>
    %cst_130 = arith.constant dense<0.000000e+00> : vector<16x32xf32>
    %189 = tpu.matmul %6, %188, %cst_130 {dimension_numbers = #tpu.dot_dimension_numbers<[1], [0], [0], [1], [0, 0, 1, 1], [], []>} : vector<16x16xf32>, vector<16x32xf32>, vector<16x32xf32> -> vector<16x32xf32>
    %190 = vector.extract_strided_slice %189 {offsets = [0, 0], sizes = [8, 32], strides = [1, 1]} : vector<16x32xf32> to vector<8x32xf32>
    %191 = vector.extract_strided_slice %189 {offsets = [8, 0], sizes = [8, 32], strides = [1, 1]} : vector<16x32xf32> to vector<8x32xf32>
    %192 = tpu.concatenate %190, %191 in 1 : vector<8x32xf32>, vector<8x32xf32> -> vector<8x64xf32>
    %c0_131 = arith.constant 0 : index
    %c0_132 = arith.constant 0 : index
    %c0_133 = arith.constant 0 : index
    %193 = vector.load %arg13[%c0_131, %c0_132, %c0_133] : memref<8x2x64xf32, #tpu.memory_space<vmem>>, vector<8x1x64xf32>
    %194 = vector.shape_cast %193 : vector<8x1x64xf32> to vector<8x64xf32>
    %195 = vector.shape_cast %192 : vector<8x64xf32> to vector<8x1x64xf32>
    tpu.vector_store %arg13[%c0_131, %c0_132, %c0_133], %195 {strides = array<i32>} : memref<8x2x64xf32, #tpu.memory_space<vmem>>, vector<8x1x64xf32>,
    %196 = vector.extract_strided_slice %181 {offsets = [16, 0], sizes = [16, 32], strides = [1, 1]} : vector<32x32xf32> to vector<16x32xf32>
    %cst_134 = arith.constant dense<0.000000e+00> : vector<16x32xf32>
    %197 = tpu.matmul %6, %196, %cst_134 {dimension_numbers = #tpu.dot_dimension_numbers<[1], [0], [0], [1], [0, 0, 1, 1], [], []>} : vector<16x16xf32>, vector<16x32xf32>, vector<16x32xf32> -> vector<16x32xf32>
    %198 = vector.extract_strided_slice %197 {offsets = [0, 0], sizes = [8, 32], strides = [1, 1]} : vector<16x32xf32> to vector<8x32xf32>
    %199 = vector.extract_strided_slice %197 {offsets = [8, 0], sizes = [8, 32], strides = [1, 1]} : vector<16x32xf32> to vector<8x32xf32>
    %200 = tpu.concatenate %198, %199 in 1 : vector<8x32xf32>, vector<8x32xf32> -> vector<8x64xf32>
    %c0_135 = arith.constant 0 : index
    %c1_136 = arith.constant 1 : index
    %c0_137 = arith.constant 0 : index
    %201 = vector.load %arg13[%c0_135, %c1_136, %c0_137] : memref<8x2x64xf32, #tpu.memory_space<vmem>>, vector<8x1x64xf32>
    %202 = vector.shape_cast %201 : vector<8x1x64xf32> to vector<8x64xf32>
    %203 = vector.shape_cast %200 : vector<8x64xf32> to vector<8x1x64xf32>
    tpu.vector_store %arg13[%c0_135, %c1_136, %c0_137], %203 {strides = array<i32>} : memref<8x2x64xf32, #tpu.memory_space<vmem>>, vector<8x1x64xf32>,
    %c0_138 = arith.constant 0 : index
    %c0_139 = arith.constant 0 : index
    %c0_140 = arith.constant 0 : index
    %204 = vector.load %arg13[%c0_138, %c0_139, %c0_140] : memref<8x2x64xf32, #tpu.memory_space<vmem>>, vector<8x2x64xf32>
    "tpu.trace_start"() <{level = 10 : i32, message = "kbi,kij->kbj"}> : () -> ()
    %cst_141 = arith.constant dense<0.000000e+00> : vector<8x2x64xf32>
    %205 = tpu.matmul %204, %183, %cst_141 {dimension_numbers = #tpu.dot_dimension_numbers<[2], [1], [1], [2], [0, 0, 0, 1, 1, 2], [0], [0]>} : vector<8x2x64xf32>, vector<8x64x64xf32>, vector<8x2x64xf32> -> vector<8x2x64xf32>
    "tpu.trace_stop"() : () -> ()
    %c0_142 = arith.constant 0 : index
    %c0_143 = arith.constant 0 : index
    %c0_144 = arith.constant 0 : index
    %206 = vector.load %arg14[%c0_142, %c0_143, %c0_144] : memref<8x2x64xf32, #tpu.memory_space<vmem>>, vector<8x2x64xf32>
    tpu.vector_store %arg14[%c0_142, %c0_143, %c0_144], %205 {strides = array<i32>} : memref<8x2x64xf32, #tpu.memory_space<vmem>>, vector<8x2x64xf32>,
    %cst_145 = arith.constant dense<0.000000e+00> : vector<32x32xf32>
    %207 = tpu.matmul %181, %185, %cst_145 {dimension_numbers = #tpu.dot_dimension_numbers<[1], [0], [0], [1], [0, 0, 1, 1], [], []>} : vector<32x32xf32>, vector<32x32xf32>, vector<32x32xf32> -> vector<32x32xf32>
    %208 = vector.broadcast %187 : vector<1x32xf32> to vector<32x32xf32>
    %209 = arith.addf %207, %208 : vector<32x32xf32>
    %c0_146 = arith.constant 0 : index
    %c0_147 = arith.constant 0 : index
    %c0_148 = arith.constant 0 : index
    %210 = vector.load %arg14[%c0_146, %c0_147, %c0_148] : memref<8x2x64xf32, #tpu.memory_space<vmem>>, vector<8x1x64xf32>
    %211 = vector.shape_cast %210 : vector<8x1x64xf32> to vector<8x64xf32>
    %212 = vector.extract_strided_slice %211 {offsets = [0, 0], sizes = [8, 32], strides = [1, 1]} : vector<8x64xf32> to vector<8x32xf32>
    %213 = vector.extract_strided_slice %211 {offsets = [0, 32], sizes = [8, 32], strides = [1, 1]} : vector<8x64xf32> to vector<8x32xf32>
    %214 = tpu.concatenate %212, %213 in 0 : vector<8x32xf32>, vector<8x32xf32> -> vector<16x32xf32>
    %cst_149 = arith.constant dense<0.000000e+00> : vector<16x32xf32>
    %215 = tpu.matmul %7, %214, %cst_149 {dimension_numbers = #tpu.dot_dimension_numbers<[1], [0], [0], [1], [0, 0, 1, 1], [], []>} : vector<16x16xf32>, vector<16x32xf32>, vector<16x32xf32> -> vector<16x32xf32>
    %216 = vector.extract_strided_slice %209 {offsets = [0, 0], sizes = [16, 32], strides = [1, 1]} : vector<32x32xf32> to vector<16x32xf32>
    %217 = arith.addf %215, %216 : vector<16x32xf32>
    %c0_150 = arith.constant 0 : index
    %c1_151 = arith.constant 1 : index
    %c0_152 = arith.constant 0 : index
    %218 = vector.load %arg14[%c0_150, %c1_151, %c0_152] : memref<8x2x64xf32, #tpu.memory_space<vmem>>, vector<8x1x64xf32>
    %219 = vector.shape_cast %218 : vector<8x1x64xf32> to vector<8x64xf32>
    %220 = vector.extract_strided_slice %219 {offsets = [0, 0], sizes = [8, 32], strides = [1, 1]} : vector<8x64xf32> to vector<8x32xf32>
    %221 = vector.extract_strided_slice %219 {offsets = [0, 32], sizes = [8, 32], strides = [1, 1]} : vector<8x64xf32> to vector<8x32xf32>
    %222 = tpu.concatenate %220, %221 in 0 : vector<8x32xf32>, vector<8x32xf32> -> vector<16x32xf32>
    %cst_153 = arith.constant dense<0.000000e+00> : vector<16x32xf32>
    %223 = tpu.matmul %7, %222, %cst_153 {dimension_numbers = #tpu.dot_dimension_numbers<[1], [0], [0], [1], [0, 0, 1, 1], [], []>} : vector<16x16xf32>, vector<16x32xf32>, vector<16x32xf32> -> vector<16x32xf32>
    %224 = vector.extract_strided_slice %209 {offsets = [16, 0], sizes = [16, 32], strides = [1, 1]} : vector<32x32xf32> to vector<16x32xf32>
    %225 = arith.addf %223, %224 : vector<16x32xf32>
    %226 = tpu.concatenate %217, %225 in 0 : vector<16x32xf32>, vector<16x32xf32> -> vector<32x32xf32>
    %c0_154 = arith.constant 0 : index
    %c0_155 = arith.constant 0 : index
    %227 = vector.load %arg8[%c0_154, %c0_155] : memref<32x128xf32, #tpu.memory_space<vmem>>, vector<32x128xf32>
    %cst_156 = arith.constant dense<0.000000e+00> : vector<32x128xf32>
    %228 = tpu.matmul %226, %227, %cst_156 {dimension_numbers = #tpu.dot_dimension_numbers<[1], [0], [0], [1], [0, 0, 1, 1], [], []>} : vector<32x32xf32>, vector<32x128xf32>, vector<32x128xf32> -> vector<32x128xf32>
    %c0_157 = arith.constant 0 : index
    %c0_158 = arith.constant 0 : index
    %229 = vector.load %arg9[%c0_157, %c0_158] : memref<1x128xf32, #tpu.memory_space<vmem>>, vector<1x128xf32>
    %230 = vector.broadcast %229 : vector<1x128xf32> to vector<32x128xf32>
    %231 = arith.addf %228, %230 : vector<32x128xf32>
    %232 = arith.mulf %231, %231 : vector<32x128xf32>
    %233 = arith.mulf %231, %232 : vector<32x128xf32>
    %cst_159 = arith.constant 4.471500e-02 : f32
    %234 = vector.broadcast %cst_159 : f32 to vector<32x128xf32>
    %235 = arith.mulf %234, %233 : vector<32x128xf32>
    %236 = arith.addf %231, %235 : vector<32x128xf32>
    %cst_160 = arith.constant 0.797884583 : f32
    %237 = vector.broadcast %cst_160 : f32 to vector<32x128xf32>
    %238 = arith.mulf %237, %236 : vector<32x128xf32>
    %239 = math.tanh %238 : vector<32x128xf32>
    %cst_161 = arith.constant 1.000000e+00 : f32
    %240 = vector.broadcast %cst_161 : f32 to vector<32x128xf32>
    %241 = arith.addf %240, %239 : vector<32x128xf32>
    %cst_162 = arith.constant 5.000000e-01 : f32
    %242 = vector.broadcast %cst_162 : f32 to vector<32x128xf32>
    %243 = arith.mulf %242, %241 : vector<32x128xf32>
    %244 = arith.mulf %231, %243 : vector<32x128xf32>
    %c0_163 = arith.constant 0 : index
    %c0_164 = arith.constant 0 : index
    %245 = vector.load %arg10[%c0_163, %c0_164] : memref<1x128xf32, #tpu.memory_space<vmem>>, vector<1x128xf32>
    "tpu.trace_start"() <{level = 10 : i32, message = "oj,rj->or"}> : () -> ()
    %cst_165 = arith.constant dense<0.000000e+00> : vector<1x32xf32>
    %246 = tpu.matmul %245, %244, %cst_165 {dimension_numbers = #tpu.dot_dimension_numbers<[1], [1], [0], [0], [0, 0, 1, 0], [], []>} : vector<1x128xf32>, vector<32x128xf32>, vector<1x32xf32> -> vector<1x32xf32>
    "tpu.trace_stop"() : () -> ()
    %c0_166 = arith.constant 0 : index
    %c0_167 = arith.constant 0 : index
    %247 = vector.load %arg11[%c0_166, %c0_167] : memref<1x1xf32, #tpu.memory_space<vmem>>, vector<1x1xf32>
    %248 = vector.broadcast %247 : vector<1x1xf32> to vector<1x32xf32>
    %249 = arith.addf %246, %248 : vector<1x32xf32>
    %c0_168 = arith.constant 0 : index
    %c0_169 = arith.constant 0 : index
    %250 = vector.load %arg12[%c0_168, %c0_169] : memref<1x32xf32, #tpu.memory_space<vmem>>, vector<1x32xf32>
    tpu.vector_store %arg12[%c0_168, %c0_169], %249 {strides = array<i32>} : memref<1x32xf32, #tpu.memory_space<vmem>>, vector<1x32xf32>,
    return
  }
}

</mosaic_0001>

<llo_original>
// kernel: tpu_custom_call.1
$region0: #{tpu_custom_call.1}
  #allocation0 [shape = 'u32[]', space=smem, size = 0x4, offset = 0x4, fixed_abs, tag = 'smem constant byte address 0x4 - core index']
  #allocation1 [shape = 'u32[144,128]{1,0:T(1,128)}', space=vmem, size = 0x12000, scoped, tag = 'internal scratch']
  #allocation2 [shape = 'f32[8,2,64]{2,1,0:T(2,128)}', space=vmem, size = 0x2000, scoped, tag = 'scratch operand']
  #allocation3 [shape = 'f32[8,2,64]{2,1,0:T(2,128)}', space=vmem, size = 0x2000, scoped, tag = 'scratch operand']
  #allocation4 [shape = 'f32[1,1]{1,0:T(1,128)S(1)}', space=vmem, size = 0x200, scoped, tag = 'scoped memory for tpu_custom_call.1']
  %s0 = inlined_call_operand.vmem [shape: f32[32,2], index: 0, kind: input, shape index: {}]
  %s1 = inlined_call_operand.vmem [shape: f32[16,16], index: 1, kind: input, shape index: {}]
  %s2 = inlined_call_operand.hbm [shape: f32[16,16], index: 2, kind: input, shape index: {}]
  %s3 = inlined_call_operand.vmem [shape: f32[2,32], index: 3, kind: input, shape index: {}]
  %s4 = inlined_call_operand.hbm [shape: f32[1,32], index: 4, kind: input, shape index: {}]
  %s5 = inlined_call_operand.hbm [shape: f32[4,8,64,64], index: 5, kind: input, shape index: {}]
  %s6 = inlined_call_operand.hbm [shape: f32[4,32,32], index: 6, kind: input, shape index: {}]
  %s7 = inlined_call_operand.hbm [shape: f32[4,1,32], index: 7, kind: input, shape index: {}]
  %s8 = inlined_call_operand.vmem [shape: f32[32,128], index: 8, kind: input, shape index: {}]
  %s9 = inlined_call_operand.vmem [shape: f32[1,128], index: 9, kind: input, shape index: {}]
  %s10 = inlined_call_operand.vmem [shape: f32[1,128], index: 10, kind: input, shape index: {}]
  %s11 = inlined_call_operand.<no memory space> [shape: f32[1,1], index: 11, kind: input, shape index: {}]
  %s12 = inlined_call_operand.hbm [shape: f32[1,32], index: 12, kind: output, shape index: {}]
  %s13 = sld [smem:[#allocation0]]
  $region78: #{tpu_custom_call.1} parent=0
    _
  %s15 = ssub.s32 1, %s13
  %s16 = scalar_select 0, %s15, %s13
  %v17 = vstv %s11
  %18 = vst [vmem:[#allocation4] sm:$0x1] %v17
  $region1: #{tpu_custom_call.1} parent=0
    #allocation5 [shape = 'u8[8192]{0}', space=vmem, size = 0x2000, scoped, tag = 'input window, operand 2, single buffered']
    #allocation6 [shape = 's32[1]{0}', space=sflag, size = 0x4, scoped, tag = 'scoped memory for tpu_custom_call.1']
    #allocation7 [shape = 's32[1]{0}', space=sflag, size = 0x4, scoped, tag = 'scoped memory for tpu_custom_call.1']
    #allocation8 [shape = 'u8[512]{0}', space=vmem, size = 0x400, scoped, tag = 'input window, operand 4, single buffered']
    #allocation9 [shape = 's32[1]{0}', space=sflag, size = 0x4, scoped, tag = 'scoped memory for tpu_custom_call.1']
    #allocation10 [shape = 'u8[1048576]{0}', space=vmem, size = 0x100000, scoped, tag = 'input window, operand 5, single buffered']
    #allocation11 [shape = 'u8[65536]{0}', space=vmem, size = 0x10000, scoped, tag = 'input window, operand 6, single buffered']
    #allocation12 [shape = 's32[1]{0}', space=sflag, size = 0x4, scoped, tag = 'scoped memory for tpu_custom_call.1']
    #allocation13 [shape = 'u8[2048]{0}', space=vmem, size = 0x800, scoped, tag = 'input window, operand 7, single buffered']
    #allocation14 [shape = 'u8[512]{0}', space=vmem, size = 0x400, scoped, tag = 'output window, operand 0, single buffered']
    %19 = vsyncpa [#allocation6], 0
    %20 = vsyncpa [#allocation9], 0
    %21 = vsyncpa [#allocation12], 0
    %22 = vsyncpa [#allocation7], 0
    // Predicated region
    $region2: #{tpu_custom_call.1} parent=1 // pred_check
      _
    $region3: #{tpu_custom_call.1} parent=1 // pred_check_branch
      %24 = sbr.rel (0) target = $region5
    $region4: #{tpu_custom_call.1} parent=1 // pred_region
      _
    $region5: #{tpu_custom_call.1} parent=1 // pred_fallthru
      _
    // Predicated region
    $region6: #{tpu_custom_call.1} parent=1 // pred_check
      _
    $region7: #{tpu_custom_call.1} parent=1 // pred_check_branch
      %26 = sbr.rel (0) target = $region9
    $region8: #{tpu_custom_call.1} parent=1 // pred_region
      _
    $region9: #{tpu_custom_call.1} parent=1 // pred_fallthru
      _
    // Predicated region
    $region10: #{tpu_custom_call.1} parent=1 // pred_check
      _
    $region11: #{tpu_custom_call.1} parent=1 // pred_check_branch
      %28 = sbr.rel (0) target = $region13
    $region12: #{tpu_custom_call.1} parent=1 // pred_region
      %s30 = ssub.s32 256, 256
      %31 = vsyncadd [#allocation6], %s30
      %s32 = sshll.u32 [#allocation5], 4
      %s33 = int_to_ptr.vmem [resolvable:$true] %s32
      %38 = dma.hbm_to_vmem [thread:$0]  %s2, 256, %s33, [#allocation6], 128, 128, 8
    $region13: #{tpu_custom_call.1} parent=1 // pred_fallthru
      _
    // Predicated region
    $region14: #{tpu_custom_call.1} parent=1 // pred_check
      _
    $region15: #{tpu_custom_call.1} parent=1 // pred_check_branch
      %40 = sbr.rel (0) target = $region17
    $region16: #{tpu_custom_call.1} parent=1 // pred_region
      _
    $region17: #{tpu_custom_call.1} parent=1 // pred_fallthru
      _
    // Predicated region
    $region18: #{tpu_custom_call.1} parent=1 // pred_check
      _
    $region19: #{tpu_custom_call.1} parent=1 // pred_check_branch
      %42 = sbr.rel (0) target = $region21
    $region20: #{tpu_custom_call.1} parent=1 // pred_region
      %s44 = ssub.s32 16, 16
      %45 = vsyncadd [#allocation9], %s44
      %s47 = sshll.u32 [#allocation8], 4
      %s48 = int_to_ptr.vmem [resolvable:$true] %s47
      %50 = dma.hbm_to_vmem [thread:$0]  %s4, 16, %s48, [#allocation9]
    $region21: #{tpu_custom_call.1} parent=1 // pred_fallthru
      _
    // Predicated region
    $region22: #{tpu_custom_call.1} parent=1 // pred_check
      _
    $region23: #{tpu_custom_call.1} parent=1 // pred_check_branch
      %52 = sbr.rel (0) target = $region25
    $region24: #{tpu_custom_call.1} parent=1 // pred_region
      %s54 = ssub.s32 32768, 32768
      %55 = vsyncadd [#allocation9], %s54
      %s56 = sshll.u32 [#allocation10], 4
      %s57 = int_to_ptr.vmem [resolvable:$true] %s56
      %62 = dma.hbm_to_vmem [thread:$0]  %s5, 32768, %s57, [#allocation9], 128, 128, 8
    $region25: #{tpu_custom_call.1} parent=1 // pred_fallthru
      _
    // Predicated region
    $region26: #{tpu_custom_call.1} parent=1 // pred_check
      _
    $region27: #{tpu_custom_call.1} parent=1 // pred_check_branch
      %64 = sbr.rel (0) target = $region29
    $region28: #{tpu_custom_call.1} parent=1 // pred_region
      %s66 = ssub.s32 2048, 2048
      %67 = vsyncadd [#allocation12], %s66
      %s68 = sshll.u32 [#allocation11], 4
      %s69 = int_to_ptr.vmem [resolvable:$true] %s68
      %74 = dma.hbm_to_vmem [thread:$0]  %s6, 2048, %s69, [#allocation12], 128, 128, 8
    $region29: #{tpu_custom_call.1} parent=1 // pred_fallthru
      _
    // Predicated region
    $region30: #{tpu_custom_call.1} parent=1 // pred_check
      _
    $region31: #{tpu_custom_call.1} parent=1 // pred_check_branch
      %76 = sbr.rel (0) target = $region33
    $region32: #{tpu_custom_call.1} parent=1 // pred_region
      %s78 = ssub.s32 64, 64
      %79 = vsyncadd [#allocation12], %s78
      %s80 = sshll.u32 [#allocation13], 4
      %s81 = int_to_ptr.vmem [resolvable:$true] %s80
      %86 = dma.hbm_to_vmem [thread:$0]  %s7, 64, %s81, [#allocation12], 16, 16, 1
    $region33: #{tpu_custom_call.1} parent=1 // pred_fallthru
      _
    // Predicated region
    $region34: #{tpu_custom_call.1} parent=1 // pred_check
      _
    $region35: #{tpu_custom_call.1} parent=1 // pred_check_branch
      %88 = sbr.rel (0) target = $region37
    $region36: #{tpu_custom_call.1} parent=1 // pred_region
      _
    $region37: #{tpu_custom_call.1} parent=1 // pred_fallthru
      _
    // Predicated region
    $region38: #{tpu_custom_call.1} parent=1 // pred_check
      _
    $region39: #{tpu_custom_call.1} parent=1 // pred_check_branch
      %90 = sbr.rel (0) target = $region41
    $region40: #{tpu_custom_call.1} parent=1 // pred_region
      _
    $region41: #{tpu_custom_call.1} parent=1 // pred_fallthru
      _
    // Predicated region
    $region42: #{tpu_custom_call.1} parent=1 // pred_check
      _
    $region43: #{tpu_custom_call.1} parent=1 // pred_check_branch
      %92 = sbr.rel (0) target = $region45
    $region44: #{tpu_custom_call.1} parent=1 // pred_region
      _
    $region45: #{tpu_custom_call.1} parent=1 // pred_fallthru
      _
    // Predicated region
    $region46: #{tpu_custom_call.1} parent=1 // pred_check
      _
    $region47: #{tpu_custom_call.1} parent=1 // pred_check_branch
      %94 = sbr.rel (0) target = $region49
    $region48: #{tpu_custom_call.1} parent=1 // pred_region
      _
    $region49: #{tpu_custom_call.1} parent=1 // pred_fallthru
      _
    // Predicated region
    $region50: #{tpu_custom_call.1} parent=1 // pred_check
      _
    $region51: #{tpu_custom_call.1} parent=1 // pred_check_branch
      %96 = sbr.rel (0) target = $region53
    $region52: #{tpu_custom_call.1} parent=1 // pred_region
      %97 = dma.done [#allocation6], 256
    $region53: #{tpu_custom_call.1} parent=1 // pred_fallthru
      _
    // Predicated region
    $region54: #{tpu_custom_call.1} parent=1 // pred_check
      _
    $region55: #{tpu_custom_call.1} parent=1 // pred_check_branch
      %99 = sbr.rel (0) target = $region57
    $region56: #{tpu_custom_call.1} parent=1 // pred_region
      %100 = dma.done [#allocation9], 16
    $region57: #{tpu_custom_call.1} parent=1 // pred_fallthru
      _
    // Predicated region
    $region58: #{tpu_custom_call.1} parent=1 // pred_check
      _
    $region59: #{tpu_custom_call.1} parent=1 // pred_check_branch
      %102 = sbr.rel (0) target = $region61
    $region60: #{tpu_custom_call.1} parent=1 // pred_region
      %103 = dma.done [#allocation9], 32768
    $region61: #{tpu_custom_call.1} parent=1 // pred_fallthru
      _
    // Predicated region
    $region62: #{tpu_custom_call.1} parent=1 // pred_check
      _
    $region63: #{tpu_custom_call.1} parent=1 // pred_check_branch
      %105 = sbr.rel (0) target = $region65
    $region64: #{tpu_custom_call.1} parent=1 // pred_region
      %106 = dma.done [#allocation12], 2048
    $region65: #{tpu_custom_call.1} parent=1 // pred_fallthru
      _
    // Predicated region
    $region66: #{tpu_custom_call.1} parent=1 // pred_check
      _
    $region67: #{tpu_custom_call.1} parent=1 // pred_check_branch
      %108 = sbr.rel (0) target = $region69
    $region68: #{tpu_custom_call.1} parent=1 // pred_region
      %109 = dma.done [#allocation12], 64
    $region69: #{tpu_custom_call.1} parent=1 // pred_fallthru
      _
    %v110 = vld [vmem:[%s0] sm:$0xff]
    %v111 = vld [vmem:[%s0 + $0x8] sm:$0xff]
    %v112 = vld [vmem:[%s0 + $0x10] sm:$0xff]
    %v113 = vld [vmem:[%s0 + $0x18] sm:$0xff]
    %v114 = vld [vmem:[%s3] sm:$0x3]
    %v115 = vld [vmem:[#allocation8] sm:$0x1]
    %v117 = vlaneseq
    %v118 = vshrl.u32 %v117, 7
    %v119 = vsub.s32 0, %v118
    %v120 = vrot.slane %v115, %v119
    %vm122 = vcmask 15360
    %v124 = vsel %vm122, %v110, 0
    %v127 = vsel %vm122, %v111, 0
    %v130 = vsel %vm122, %v112, 0
    %v133 = vsel %vm122, %v113, 0
    %vm135 = vcmask 1041408
    %v137 = vsel %vm135, %v114, 0
    %139 = vmatprep.subr.mxu0 0.0
    %140 = vmatpush1.msra.mxu0 0.0
    %141 = vmatprep.subr.mxu0 0.0
    %142 = vmatpush1.msra.mxu0 0.0
    %143 = vmatprep.subr.mxu0 0.0
    %144 = vmatpush1.msra.mxu0 0.0
    %145 = vmatprep.subr.mxu0 0.0
    %146 = vmatpush1.msra.mxu0 0.0
    %147 = vmatprep.subr.mxu0 0.0
    %148 = vmatpush1.msra.mxu0 0.0
    %149 = vmatprep.subr.mxu0 0.0
    %150 = vmatpush1.msra.mxu0 0.0
    %151 = vmatprep.subr.mxu0 0.0
    %152 = vmatpush1.msra.mxu0 0.0
    %153 = vmatprep.subr.mxu0 0.0
    %154 = vmatpush1.msra.mxu0 0.0
    %155 = vmatprep.subr.mxu0 0.0
    %156 = vmatpush1.msra.mxu0 0.0
    %157 = vmatprep.subr.mxu0 0.0
    %158 = vmatpush1.msra.mxu0 0.0
    %159 = vmatprep.subr.mxu0 0.0
    %160 = vmatpush1.msra.mxu0 0.0
    %161 = vmatprep.subr.mxu0 0.0
    %162 = vmatpush1.msra.mxu0 0.0
    %163 = vmatprep.subr.mxu0 0.0
    %164 = vmatpush1.msra.mxu0 0.0
    %165 = vmatprep.subr.mxu0 0.0
    %166 = vmatpush1.msra.mxu0 0.0
    %167 = vmatprep.subr.mxu0 0.0
    %168 = vmatpush1.msra.mxu0 0.0
    %169 = vmatprep.subr.mxu0 0.0
    %170 = vmatpush1.msra.mxu0 %v137
    %171 = vmatprep.subr.mxu0 0.0
    %172 = vmatpush2.msra.mxu0 0.0
    %173 = vmatprep.subr.mxu0 0.0
    %174 = vmatpush2.msra.mxu0 0.0
    %175 = vmatprep.subr.mxu0 0.0
    %176 = vmatpush2.msra.mxu0 0.0
    %177 = vmatprep.subr.mxu0 0.0
    %178 = vmatpush2.msra.mxu0 0.0
    %179 = vmatprep.subr.mxu0 0.0
    %180 = vmatpush2.msra.mxu0 0.0
    %181 = vmatprep.subr.mxu0 0.0
    %182 = vmatpush2.msra.mxu0 0.0
    %183 = vmatprep.subr.mxu0 0.0
    %184 = vmatpush2.msra.mxu0 0.0
    %185 = vmatprep.subr.mxu0 0.0
    %186 = vmatpush2.msra.mxu0 0.0
    %187 = vmatprep.subr.mxu0 0.0
    %188 = vmatpush2.msra.mxu0 0.0
    %189 = vmatprep.subr.mxu0 0.0
    %190 = vmatpush2.msra.mxu0 0.0
    %191 = vmatprep.subr.mxu0 0.0
    %192 = vmatpush2.msra.mxu0 0.0
    %193 = vmatprep.subr.mxu0 0.0
    %194 = vmatpush2.msra.mxu0 0.0
    %195 = vmatprep.subr.mxu0 0.0
    %196 = vmatpush2.msra.mxu0 0.0
    %197 = vmatprep.subr.mxu0 0.0
    %198 = vmatpush2.msra.mxu0 0.0
    %199 = vmatprep.subr.mxu0 0.0
    %200 = vmatpush2.msra.mxu0 0.0
    %201 = vmatprep.subr.mxu0 0.0
    %202 = vmatpush2.msra.mxu0 0.0
    %203 = vmatprep.mubr.f32.mxu0 0.0
    %204 = vmatmul.mubr.f32.gmra.mxu0 %v124
    %v205 = vpop.f32.mrf.mxu0
    %v206 = vadd.f32 %v120, %v205
    %v207 = vpop.f32.mrf.mxu0
    %208 = vmatprep.mubr.f32.mxu0 0.0
    %209 = vmatmul.mubr.f32.gmra.mxu0 %v127
    %v210 = vpop.f32.mrf.mxu0
    %v211 = vadd.f32 %v120, %v210
    %v212 = vpop.f32.mrf.mxu0
    %213 = vmatprep.mubr.f32.mxu0 0.0
    %214 = vmatmul.mubr.f32.gmra.mxu0 %v130
    %v215 = vpop.f32.mrf.mxu0
    %v216 = vadd.f32 %v120, %v215
    %v217 = vpop.f32.mrf.mxu0
    %218 = vmatprep.mubr.f32.mxu0 0.0
    %219 = vmatmul.mubr.f32.gmra.mxu0 %v133
    %v220 = vpop.f32.mrf.mxu0
    %v221 = vadd.f32 %v120, %v220
    %v222 = vpop.f32.mrf.mxu0
    %223 = vdwg.mxu0
    %v224 = vld [vmem:[%s1] sm:$0xff]
    %v225 = vld [vmem:[%s1 + $0x8] sm:$0xff]
    %v226 = vld [vmem:[#allocation5] sm:$0xff]
    %v227 = vld [vmem:[#allocation5 + $0x8] sm:$0xff]
    %v228 = vld [vmem:[#allocation10] sm:$0xff]
    %v229 = vld [vmem:[#allocation10 + $0x8] sm:$0xff]
    %v230 = vld [vmem:[#allocation10 + $0x10] sm:$0xff]
    %v231 = vld [vmem:[#allocation10 + $0x18] sm:$0xff]
    %v232 = vld [vmem:[#allocation10 + $0x20] sm:$0xff]
    %v233 = vld [vmem:[#allocation10 + $0x28] sm:$0xff]
    %v234 = vld [vmem:[#allocation10 + $0x30] sm:$0xff]
    %v235 = vld [vmem:[#allocation10 + $0x38] sm:$0xff]
    %v236 = vld [vmem:[#allocation10 + $0x40] sm:$0xff]
    %v237 = vld [vmem:[#allocation10 + $0x48] sm:$0xff]
    %v238 = vld [vmem:[#allocation10 + $0x50] sm:$0xff]
    %v239 = vld [vmem:[#allocation10 + $0x58] sm:$0xff]
    %v240 = vld [vmem:[#allocation10 + $0x60] sm:$0xff]
    %v241 = vld [vmem:[#allocation10 + $0x68] sm:$0xff]
    %v242 = vld [vmem:[#allocation10 + $0x70] sm:$0xff]
    %v243 = vld [vmem:[#allocation10 + $0x78] sm:$0xff]
    %v244 = vld [vmem:[#allocation10 + $0x80] sm:$0xff]
    %v245 = vld [vmem:[#allocation10 + $0x88] sm:$0xff]
    %v246 = vld [vmem:[#allocation10 + $0x90] sm:$0xff]
    %v247 = vld [vmem:[#allocation10 + $0x98] sm:$0xff]
    %v248 = vld [vmem:[#allocation10 + $0xa0] sm:$0xff]
    %v249 = vld [vmem:[#allocation10 + $0xa8] sm:$0xff]
    %v250 = vld [vmem:[#allocation10 + $0xb0] sm:$0xff]
    %v251 = vld [vmem:[#allocation10 + $0xb8] sm:$0xff]
    %v252 = vld [vmem:[#allocation10 + $0xc0] sm:$0xff]
    %v253 = vld [vmem:[#allocation10 + $0xc8] sm:$0xff]
    %v254 = vld [vmem:[#allocation10 + $0xd0] sm:$0xff]
    %v255 = vld [vmem:[#allocation10 + $0xd8] sm:$0xff]
    %v256 = vld [vmem:[#allocation10 + $0xe0] sm:$0xff]
    %v257 = vld [vmem:[#allocation10 + $0xe8] sm:$0xff]
    %v258 = vld [vmem:[#allocation10 + $0xf0] sm:$0xff]
    %v259 = vld [vmem:[#allocation10 + $0xf8] sm:$0xff]
    %v260 = vld [vmem:[#allocation10 + $0x100] sm:$0xff]
    %v261 = vld [vmem:[#allocation10 + $0x108] sm:$0xff]
    %v262 = vld [vmem:[#allocation10 + $0x110] sm:$0xff]
    %v263 = vld [vmem:[#allocation10 + $0x118] sm:$0xff]
    %v264 = vld [vmem:[#allocation10 + $0x120] sm:$0xff]
    %v265 = vld [vmem:[#allocation10 + $0x128] sm:$0xff]
    %v266 = vld [vmem:[#allocation10 + $0x130] sm:$0xff]
    %v267 = vld [vmem:[#allocation10 + $0x138] sm:$0xff]
    %v268 = vld [vmem:[#allocation10 + $0x140] sm:$0xff]
    %v269 = vld [vmem:[#allocation10 + $0x148] sm:$0xff]
    %v270 = vld [vmem:[#allocation10 + $0x150] sm:$0xff]
    %v271 = vld [vmem:[#allocation10 + $0x158] sm:$0xff]
    %v272 = vld [vmem:[#allocation10 + $0x160] sm:$0xff]
    %v273 = vld [vmem:[#allocation10 + $0x168] sm:$0xff]
    %v274 = vld [vmem:[#allocation10 + $0x170] sm:$0xff]
    %v275 = vld [vmem:[#allocation10 + $0x178] sm:$0xff]
    %v276 = vld [vmem:[#allocation10 + $0x180] sm:$0xff]
    %v277 = vld [vmem:[#allocation10 + $0x188] sm:$0xff]
    %v278 = vld [vmem:[#allocation10 + $0x190] sm:$0xff]
    %v279 = vld [vmem:[#allocation10 + $0x198] sm:$0xff]
    %v280 = vld [vmem:[#allocation10 + $0x1a0] sm:$0xff]
    %v281 = vld [vmem:[#allocation10 + $0x1a8] sm:$0xff]
    %v282 = vld [vmem:[#allocation10 + $0x1b0] sm:$0xff]
    %v283 = vld [vmem:[#allocation10 + $0x1b8] sm:$0xff]
    %v284 = vld [vmem:[#allocation10 + $0x1c0] sm:$0xff]
    %v285 = vld [vmem:[#allocation10 + $0x1c8] sm:$0xff]
    %v286 = vld [vmem:[#allocation10 + $0x1d0] sm:$0xff]
    %v287 = vld [vmem:[#allocation10 + $0x1d8] sm:$0xff]
    %v288 = vld [vmem:[#allocation10 + $0x1e0] sm:$0xff]
    %v289 = vld [vmem:[#allocation10 + $0x1e8] sm:$0xff]
    %v290 = vld [vmem:[#allocation10 + $0x1f0] sm:$0xff]
    %v291 = vld [vmem:[#allocation10 + $0x1f8] sm:$0xff]
    %v292 = vld [vmem:[#allocation11] sm:$0xff]
    %v293 = vld [vmem:[#allocation11 + $0x8] sm:$0xff]
    %v294 = vld [vmem:[#allocation11 + $0x10] sm:$0xff]
    %v295 = vld [vmem:[#allocation11 + $0x18] sm:$0xff]
    %v296 = vld [vmem:[#allocation13] sm:$0x1]
    %vm297 = vcmask 130048
    %v299 = vsel %vm297, %v224, 0
    %v302 = vsel %vm297, %v225, 0
    %304 = vmatprep.subr.mxu0 0.0
    %305 = vmatpush1.msra.mxu0 0.0
    %306 = vmatprep.subr.mxu0 0.0
    %307 = vmatpush1.msra.mxu0 0.0
    %308 = vmatprep.subr.mxu0 0.0
    %309 = vmatpush1.msra.mxu0 0.0
    %310 = vmatprep.subr.mxu0 0.0
    %311 = vmatpush1.msra.mxu0 0.0
    %312 = vmatprep.subr.mxu0 0.0
    %313 = vmatpush1.msra.mxu0 0.0
    %314 = vmatprep.subr.mxu0 0.0
    %315 = vmatpush1.msra.mxu0 0.0
    %316 = vmatprep.subr.mxu0 0.0
    %317 = vmatpush1.msra.mxu0 0.0
    %318 = vmatprep.subr.mxu0 0.0
    %319 = vmatpush1.msra.mxu0 0.0
    %320 = vmatprep.subr.mxu0 0.0
    %321 = vmatpush1.msra.mxu0 0.0
    %322 = vmatprep.subr.mxu0 0.0
    %323 = vmatpush1.msra.mxu0 0.0
    %324 = vmatprep.subr.mxu0 0.0
    %325 = vmatpush1.msra.mxu0 0.0
    %326 = vmatprep.subr.mxu0 0.0
    %327 = vmatpush1.msra.mxu0 0.0
    %328 = vmatprep.subr.mxu0 0.0
    %329 = vmatpush1.msra.mxu0 0.0
    %330 = vmatprep.subr.mxu0 0.0
    %331 = vmatpush1.msra.mxu0 0.0
    %332 = vmatprep.subr.mxu0 0.0
    %333 = vmatpush1.msra.mxu0 %v211
    %334 = vmatprep.subr.mxu0 0.0
    %335 = vmatpush1.msra.mxu0 %v206
    %336 = vmatprep.subr.mxu0 0.0
    %337 = vmatpush2.msra.mxu0 0.0
    %338 = vmatprep.subr.mxu0 0.0
    %339 = vmatpush2.msra.mxu0 0.0
    %340 = vmatprep.subr.mxu0 0.0
    %341 = vmatpush2.msra.mxu0 0.0
    %342 = vmatprep.subr.mxu0 0.0
    %343 = vmatpush2.msra.mxu0 0.0
    %344 = vmatprep.subr.mxu0 0.0
    %345 = vmatpush2.msra.mxu0 0.0
    %346 = vmatprep.subr.mxu0 0.0
    %347 = vmatpush2.msra.mxu0 0.0
    %348 = vmatprep.subr.mxu0 0.0
    %349 = vmatpush2.msra.mxu0 0.0
    %350 = vmatprep.subr.mxu0 0.0
    %351 = vmatpush2.msra.mxu0 0.0
    %352 = vmatprep.subr.mxu0 0.0
    %353 = vmatpush2.msra.mxu0 0.0
    %354 = vmatprep.subr.mxu0 0.0
    %355 = vmatpush2.msra.mxu0 0.0
    %356 = vmatprep.subr.mxu0 0.0
    %357 = vmatpush2.msra.mxu0 0.0
    %358 = vmatprep.subr.mxu0 0.0
    %359 = vmatpush2.msra.mxu0 0.0
    %360 = vmatprep.subr.mxu0 0.0
    %361 = vmatpush2.msra.mxu0 0.0
    %362 = vmatprep.subr.mxu0 0.0
    %363 = vmatpush2.msra.mxu0 0.0
    %364 = vmatprep.subr.mxu0 0.0
    %365 = vmatpush2.msra.mxu0 0.0
    %366 = vmatprep.subr.mxu0 0.0
    %367 = vmatpush2.msra.mxu0 0.0
    %368 = vmatprep.mubr.f32.mxu0 0.0
    %369 = vmatmul.mubr.f32.gmra.mxu0 %v299
    %v370 = vpop.f32.mrf.mxu0
    %v371 = vadd.f32 0.0, %v370
    %v372 = vpop.f32.mrf.mxu0
    %373 = vmatprep.mubr.f32.mxu0 0.0
    %374 = vmatmul.mubr.f32.gmra.mxu0 %v302
    %v375 = vpop.f32.mrf.mxu0
    %v376 = vadd.f32 0.0, %v375
    %v377 = vpop.f32.mrf.mxu0
    %378 = vdwg.mxu0
    %380 = vrot.lane.b32.xlu0 %v376, 32
    %v381 = vpop.permute.xlu0 %380
    %vm383 = vcmask 261120
    %v384 = vsel %vm383, %v371, %v381
    %v386 = vcombine.high %v384, %v384
    %v388 = vunpack.c.l.s4 1966171168
    %v389 = vunpack.c.0.s8 %v388
    %v390 = vlaneseq
    %v391 = vshrl.u32 %v390, 7
    %v392 = vsub.s32 %v389, %v391
    %v393 = vrot.slane %v384, %v392
    %v395 = vunpack.c.l.s4 1966171168
    %v396 = vunpack.c.0.s8 %v395
    %v397 = vlaneseq
    %v398 = vshrl.u32 %v397, 7
    %v399 = vsub.s32 %v396, %v398
    %v400 = vrot.slane %v386, %v399
    %v401 = vcombine.high %v393, %v393
    %v402 = vcombine.high %v400, %v400
    %v404 = vunpack.c.l.s4 1966171168
    %v405 = vunpack.c.0.s8 %v404
    %v406 = vlaneseq
    %v407 = vshrl.u32 %v406, 7
    %v408 = vsub.s32 %v405, %v407
    %v409 = vrot.slane %v393, %v408
    %v411 = vunpack.c.l.s4 1966171168
    %v412 = vunpack.c.0.s8 %v411
    %v413 = vlaneseq
    %v414 = vshrl.u32 %v413, 7
    %v415 = vsub.s32 %v412, %v414
    %v416 = vrot.slane %v400, %v415
    %v418 = vunpack.c.l.s4 1966171168
    %v419 = vunpack.c.0.s8 %v418
    %v420 = vlaneseq
    %v421 = vshrl.u32 %v420, 7
    %v422 = vsub.s32 %v419, %v421
    %v423 = vrot.slane %v401, %v422
    %v425 = vunpack.c.l.s4 1966171168
    %v426 = vunpack.c.0.s8 %v425
    %v427 = vlaneseq
    %v428 = vshrl.u32 %v427, 7
    %v429 = vsub.s32 %v426, %v428
    %v430 = vrot.slane %v402, %v429
    %v431 = vcombine.high %v409, %v409
    %v432 = vcombine.high %v416, %v416
    %v433 = vcombine.high %v423, %v423
    %v434 = vcombine.high %v430, %v430
    %vm443 = vcmask 516096
    %444 = vst.msk [vmem:[#allocation2] sm:$0x1] %vm443, %v409
    %445 = vst.msk [vmem:[#allocation2 + $0x2] sm:$0x1] %vm443, %v423
    %446 = vst.msk [vmem:[#allocation2 + $0x4] sm:$0x1] %vm443, %v431
    %447 = vst.msk [vmem:[#allocation2 + $0x6] sm:$0x1] %vm443, %v433
    %448 = vst.msk [vmem:[#allocation2 + $0x8] sm:$0x1] %vm443, %v416
    %449 = vst.msk [vmem:[#allocation2 + $0xa] sm:$0x1] %vm443, %v430
    %450 = vst.msk [vmem:[#allocation2 + $0xc] sm:$0x1] %vm443, %v432
    %451 = vst.msk [vmem:[#allocation2 + $0xe] sm:$0x1] %vm443, %v434
    %452 = vmatprep.subr.mxu0 0.0
    %453 = vmatpush1.msra.mxu0 0.0
    %454 = vmatprep.subr.mxu0 0.0
    %455 = vmatpush1.msra.mxu0 0.0
    %456 = vmatprep.subr.mxu0 0.0
    %457 = vmatpush1.msra.mxu0 0.0
    %458 = vmatprep.subr.mxu0 0.0
    %459 = vmatpush1.msra.mxu0 0.0
    %460 = vmatprep.subr.mxu0 0.0
    %461 = vmatpush1.msra.mxu0 0.0
    %462 = vmatprep.subr.mxu0 0.0
    %463 = vmatpush1.msra.mxu0 0.0
    %464 = vmatprep.subr.mxu0 0.0
    %465 = vmatpush1.msra.mxu0 0.0
    %466 = vmatprep.subr.mxu0 0.0
    %467 = vmatpush1.msra.mxu0 0.0
    %468 = vmatprep.subr.mxu0 0.0
    %469 = vmatpush1.msra.mxu0 0.0
    %470 = vmatprep.subr.mxu0 0.0
    %471 = vmatpush1.msra.mxu0 0.0
    %472 = vmatprep.subr.mxu0 0.0
    %473 = vmatpush1.msra.mxu0 0.0
    %474 = vmatprep.subr.mxu0 0.0
    %475 = vmatpush1.msra.mxu0 0.0
    %476 = vmatprep.subr.mxu0 0.0
    %477 = vmatpush1.msra.mxu0 0.0
    %478 = vmatprep.subr.mxu0 0.0
    %479 = vmatpush1.msra.mxu0 0.0
    %480 = vmatprep.subr.mxu0 0.0
    %481 = vmatpush1.msra.mxu0 %v221
    %482 = vmatprep.subr.mxu0 0.0
    %483 = vmatpush1.msra.mxu0 %v216
    %484 = vmatprep.subr.mxu0 0.0
    %485 = vmatpush2.msra.mxu0 0.0
    %486 = vmatprep.subr.mxu0 0.0
    %487 = vmatpush2.msra.mxu0 0.0
    %488 = vmatprep.subr.mxu0 0.0
    %489 = vmatpush2.msra.mxu0 0.0
    %490 = vmatprep.subr.mxu0 0.0
    %491 = vmatpush2.msra.mxu0 0.0
    %492 = vmatprep.subr.mxu0 0.0
    %493 = vmatpush2.msra.mxu0 0.0
    %494 = vmatprep.subr.mxu0 0.0
    %495 = vmatpush2.msra.mxu0 0.0
    %496 = vmatprep.subr.mxu0 0.0
    %497 = vmatpush2.msra.mxu0 0.0
    %498 = vmatprep.subr.mxu0 0.0
    %499 = vmatpush2.msra.mxu0 0.0
    %500 = vmatprep.subr.mxu0 0.0
    %501 = vmatpush2.msra.mxu0 0.0
    %502 = vmatprep.subr.mxu0 0.0
    %503 = vmatpush2.msra.mxu0 0.0
    %504 = vmatprep.subr.mxu0 0.0
    %505 = vmatpush2.msra.mxu0 0.0
    %506 = vmatprep.subr.mxu0 0.0
    %507 = vmatpush2.msra.mxu0 0.0
    %508 = vmatprep.subr.mxu0 0.0
    %509 = vmatpush2.msra.mxu0 0.0
    %510 = vmatprep.subr.mxu0 0.0
    %511 = vmatpush2.msra.mxu0 0.0
    %512 = vmatprep.subr.mxu0 0.0
    %513 = vmatpush2.msra.mxu0 0.0
    %514 = vmatprep.subr.mxu0 0.0
    %515 = vmatpush2.msra.mxu0 0.0
    %516 = vmatprep.mubr.f32.mxu0 0.0
    %517 = vmatmul.mubr.f32.gmra.mxu0 %v299
    %v518 = vpop.f32.mrf.mxu0
    %v519 = vadd.f32 0.0, %v518
    %v520 = vpop.f32.mrf.mxu0
    %521 = vmatprep.mubr.f32.mxu0 0.0
    %522 = vmatmul.mubr.f32.gmra.mxu0 %v302
    %v523 = vpop.f32.mrf.mxu0
    %v524 = vadd.f32 0.0, %v523
    %v525 = vpop.f32.mrf.mxu0
    %526 = vdwg.mxu0
    %528 = vrot.lane.b32.xlu0 %v524, 32
    %v529 = vpop.permute.xlu0 %528
    %v531 = vsel %vm383, %v519, %v529
    %v533 = vcombine.high %v531, %v531
    %v535 = vunpack.c.l.s4 1966171168
    %v536 = vunpack.c.0.s8 %v535
    %v537 = vlaneseq
    %v538 = vshrl.u32 %v537, 7
    %v539 = vsub.s32 %v536, %v538
    %v540 = vrot.slane %v531, %v539
    %v542 = vunpack.c.l.s4 1966171168
    %v543 = vunpack.c.0.s8 %v542
    %v544 = vlaneseq
    %v545 = vshrl.u32 %v544, 7
    %v546 = vsub.s32 %v543, %v545
    %v547 = vrot.slane %v533, %v546
    %v548 = vcombine.high %v540, %v540
    %v549 = vcombine.high %v547, %v547
    %v551 = vunpack.c.l.s4 1966171168
    %v552 = vunpack.c.0.s8 %v551
    %v553 = vlaneseq
    %v554 = vshrl.u32 %v553, 7
    %v555 = vsub.s32 %v552, %v554
    %v556 = vrot.slane %v540, %v555
    %v558 = vunpack.c.l.s4 1966171168
    %v559 = vunpack.c.0.s8 %v558
    %v560 = vlaneseq
    %v561 = vshrl.u32 %v560, 7
    %v562 = vsub.s32 %v559, %v561
    %v563 = vrot.slane %v547, %v562
    %v565 = vunpack.c.l.s4 1966171168
    %v566 = vunpack.c.0.s8 %v565
    %v567 = vlaneseq
    %v568 = vshrl.u32 %v567, 7
    %v569 = vsub.s32 %v566, %v568
    %v570 = vrot.slane %v548, %v569
    %v572 = vunpack.c.l.s4 1966171168
    %v573 = vunpack.c.0.s8 %v572
    %v574 = vlaneseq
    %v575 = vshrl.u32 %v574, 7
    %v576 = vsub.s32 %v573, %v575
    %v577 = vrot.slane %v549, %v576
    %v578 = vcombine.high %v556, %v556
    %v579 = vcombine.high %v563, %v563
    %v580 = vcombine.high %v570, %v570
    %v581 = vcombine.high %v577, %v577
    %590 = vst.msk [vmem:[#allocation2 + $0x1] sm:$0x1] %vm443, %v556
    %591 = vst.msk [vmem:[#allocation2 + $0x3] sm:$0x1] %vm443, %v570
    %592 = vst.msk [vmem:[#allocation2 + $0x5] sm:$0x1] %vm443, %v578
    %593 = vst.msk [vmem:[#allocation2 + $0x7] sm:$0x1] %vm443, %v580
    %594 = vst.msk [vmem:[#allocation2 + $0x9] sm:$0x1] %vm443, %v563
    %595 = vst.msk [vmem:[#allocation2 + $0xb] sm:$0x1] %vm443, %v577
    %596 = vst.msk [vmem:[#allocation2 + $0xd] sm:$0x1] %vm443, %v579
    %597 = vst.msk [vmem:[#allocation2 + $0xf] sm:$0x1] %vm443, %v581
    %v598 = vld [vmem:[#allocation2] sm:$0x3]
    %v599 = vld [vmem:[#allocation2 + $0x2] sm:$0x3]
    %v600 = vld [vmem:[#allocation2 + $0x4] sm:$0x3]
    %v601 = vld [vmem:[#allocation2 + $0x6] sm:$0x3]
    %v602 = vld [vmem:[#allocation2 + $0x8] sm:$0x3]
    %v603 = vld [vmem:[#allocation2 + $0xa] sm:$0x3]
    %v604 = vld [vmem:[#allocation2 + $0xc] sm:$0x3]
    %v605 = vld [vmem:[#allocation2 + $0xe] sm:$0x3]
    %vm606 = vcmask 523264
    %v608 = vsel %vm606, %v598, 0
    %610 = vmatprep.subr.mxu0 0.0
    %611 = vmatpush1.msra.mxu0 0.0
    %612 = vmatprep.subr.mxu0 0.0
    %613 = vmatpush1.msra.mxu0 0.0
    %614 = vmatprep.subr.mxu0 0.0
    %615 = vmatpush1.msra.mxu0 0.0
    %616 = vmatprep.subr.mxu0 0.0
    %617 = vmatpush1.msra.mxu0 0.0
    %618 = vmatprep.subr.mxu0 0.0
    %619 = vmatpush1.msra.mxu0 0.0
    %620 = vmatprep.subr.mxu0 0.0
    %621 = vmatpush1.msra.mxu0 0.0
    %622 = vmatprep.subr.mxu0 0.0
    %623 = vmatpush1.msra.mxu0 0.0
    %624 = vmatprep.subr.mxu0 0.0
    %625 = vmatpush1.msra.mxu0 0.0
    %626 = vmatprep.subr.mxu0 0.0
    %627 = vmatpush1.msra.mxu0 %v235
    %628 = vmatprep.subr.mxu0 0.0
    %629 = vmatpush1.msra.mxu0 %v234
    %630 = vmatprep.subr.mxu0 0.0
    %631 = vmatpush1.msra.mxu0 %v233
    %632 = vmatprep.subr.mxu0 0.0
    %633 = vmatpush1.msra.mxu0 %v232
    %634 = vmatprep.subr.mxu0 0.0
    %635 = vmatpush1.msra.mxu0 %v231
    %636 = vmatprep.subr.mxu0 0.0
    %637 = vmatpush1.msra.mxu0 %v230
    %638 = vmatprep.subr.mxu0 0.0
    %639 = vmatpush1.msra.mxu0 %v229
    %640 = vmatprep.subr.mxu0 0.0
    %641 = vmatpush1.msra.mxu0 %v228
    %642 = vmatprep.subr.mxu0 0.0
    %643 = vmatpush2.msra.mxu0 0.0
    %644 = vmatprep.subr.mxu0 0.0
    %645 = vmatpush2.msra.mxu0 0.0
    %646 = vmatprep.subr.mxu0 0.0
    %647 = vmatpush2.msra.mxu0 0.0
    %648 = vmatprep.subr.mxu0 0.0
    %649 = vmatpush2.msra.mxu0 0.0
    %650 = vmatprep.subr.mxu0 0.0
    %651 = vmatpush2.msra.mxu0 0.0
    %652 = vmatprep.subr.mxu0 0.0
    %653 = vmatpush2.msra.mxu0 0.0
    %654 = vmatprep.subr.mxu0 0.0
    %655 = vmatpush2.msra.mxu0 0.0
    %656 = vmatprep.subr.mxu0 0.0
    %657 = vmatpush2.msra.mxu0 0.0
    %658 = vmatprep.subr.mxu0 0.0
    %659 = vmatpush2.msra.mxu0 0.0
    %660 = vmatprep.subr.mxu0 0.0
    %661 = vmatpush2.msra.mxu0 0.0
    %662 = vmatprep.subr.mxu0 0.0
    %663 = vmatpush2.msra.mxu0 0.0
    %664 = vmatprep.subr.mxu0 0.0
    %665 = vmatpush2.msra.mxu0 0.0
    %666 = vmatprep.subr.mxu0 0.0
    %667 = vmatpush2.msra.mxu0 0.0
    %668 = vmatprep.subr.mxu0 0.0
    %669 = vmatpush2.msra.mxu0 0.0
    %670 = vmatprep.subr.mxu0 0.0
    %671 = vmatpush2.msra.mxu0 0.0
    %672 = vmatprep.subr.mxu0 0.0
    %673 = vmatpush2.msra.mxu0 0.0
    %674 = vmatprep.mubr.f32.mxu0 0.0
    %675 = vmatmul.mubr.f32.gmra.mxu0 %v608
    %v676 = vpop.f32.mrf.mxu0
    %v677 = vadd.f32 0.0, %v676
    %v678 = vpop.f32.mrf.mxu0
    %679 = vdwg.mxu0
    %v681 = vsel %vm606, %v599, 0
    %683 = vmatprep.subr.mxu0 0.0
    %684 = vmatpush1.msra.mxu0 0.0
    %685 = vmatprep.subr.mxu0 0.0
    %686 = vmatpush1.msra.mxu0 0.0
    %687 = vmatprep.subr.mxu0 0.0
    %688 = vmatpush1.msra.mxu0 0.0
    %689 = vmatprep.subr.mxu0 0.0
    %690 = vmatpush1.msra.mxu0 0.0
    %691 = vmatprep.subr.mxu0 0.0
    %692 = vmatpush1.msra.mxu0 0.0
    %693 = vmatprep.subr.mxu0 0.0
    %694 = vmatpush1.msra.mxu0 0.0
    %695 = vmatprep.subr.mxu0 0.0
    %696 = vmatpush1.msra.mxu0 0.0
    %697 = vmatprep.subr.mxu0 0.0
    %698 = vmatpush1.msra.mxu0 0.0
    %699 = vmatprep.subr.mxu0 0.0
    %700 = vmatpush1.msra.mxu0 %v243
    %701 = vmatprep.subr.mxu0 0.0
    %702 = vmatpush1.msra.mxu0 %v242
    %703 = vmatprep.subr.mxu0 0.0
    %704 = vmatpush1.msra.mxu0 %v241
    %705 = vmatprep.subr.mxu0 0.0
    %706 = vmatpush1.msra.mxu0 %v240
    %707 = vmatprep.subr.mxu0 0.0
    %708 = vmatpush1.msra.mxu0 %v239
    %709 = vmatprep.subr.mxu0 0.0
    %710 = vmatpush1.msra.mxu0 %v238
    %711 = vmatprep.subr.mxu0 0.0
    %712 = vmatpush1.msra.mxu0 %v237
    %713 = vmatprep.subr.mxu0 0.0
    %714 = vmatpush1.msra.mxu0 %v236
    %715 = vmatprep.subr.mxu0 0.0
    %716 = vmatpush2.msra.mxu0 0.0
    %717 = vmatprep.subr.mxu0 0.0
    %718 = vmatpush2.msra.mxu0 0.0
    %719 = vmatprep.subr.mxu0 0.0
    %720 = vmatpush2.msra.mxu0 0.0
    %721 = vmatprep.subr.mxu0 0.0
    %722 = vmatpush2.msra.mxu0 0.0
    %723 = vmatprep.subr.mxu0 0.0
    %724 = vmatpush2.msra.mxu0 0.0
    %725 = vmatprep.subr.mxu0 0.0
    %726 = vmatpush2.msra.mxu0 0.0
    %727 = vmatprep.subr.mxu0 0.0
    %728 = vmatpush2.msra.mxu0 0.0
    %729 = vmatprep.subr.mxu0 0.0
    %730 = vmatpush2.msra.mxu0 0.0
    %731 = vmatprep.subr.mxu0 0.0
    %732 = vmatpush2.msra.mxu0 0.0
    %733 = vmatprep.subr.mxu0 0.0
    %734 = vmatpush2.msra.mxu0 0.0
    %735 = vmatprep.subr.mxu0 0.0
    %736 = vmatpush2.msra.mxu0 0.0
    %737 = vmatprep.subr.mxu0 0.0
    %738 = vmatpush2.msra.mxu0 0.0
    %739 = vmatprep.subr.mxu0 0.0
    %740 = vmatpush2.msra.mxu0 0.0
    %741 = vmatprep.subr.mxu0 0.0
    %742 = vmatpush2.msra.mxu0 0.0
    %743 = vmatprep.subr.mxu0 0.0
    %744 = vmatpush2.msra.mxu0 0.0
    %745 = vmatprep.subr.mxu0 0.0
    %746 = vmatpush2.msra.mxu0 0.0
    %747 = vmatprep.mubr.f32.mxu0 0.0
    %748 = vmatmul.mubr.f32.gmra.mxu0 %v681
    %v749 = vpop.f32.mrf.mxu0
    %v750 = vadd.f32 0.0, %v749
    %v751 = vpop.f32.mrf.mxu0
    %752 = vdwg.mxu0
    %v754 = vsel %vm606, %v600, 0
    %756 = vmatprep.subr.mxu0 0.0
    %757 = vmatpush1.msra.mxu0 0.0
    %758 = vmatprep.subr.mxu0 0.0
    %759 = vmatpush1.msra.mxu0 0.0
    %760 = vmatprep.subr.mxu0 0.0
    %761 = vmatpush1.msra.mxu0 0.0
    %762 = vmatprep.subr.mxu0 0.0
    %763 = vmatpush1.msra.mxu0 0.0
    %764 = vmatprep.subr.mxu0 0.0
    %765 = vmatpush1.msra.mxu0 0.0
    %766 = vmatprep.subr.mxu0 0.0
    %767 = vmatpush1.msra.mxu0 0.0
    %768 = vmatprep.subr.mxu0 0.0
    %769 = vmatpush1.msra.mxu0 0.0
    %770 = vmatprep.subr.mxu0 0.0
    %771 = vmatpush1.msra.mxu0 0.0
    %772 = vmatprep.subr.mxu0 0.0
    %773 = vmatpush1.msra.mxu0 %v251
    %774 = vmatprep.subr.mxu0 0.0
    %775 = vmatpush1.msra.mxu0 %v250
    %776 = vmatprep.subr.mxu0 0.0
    %777 = vmatpush1.msra.mxu0 %v249
    %778 = vmatprep.subr.mxu0 0.0
    %779 = vmatpush1.msra.mxu0 %v248
    %780 = vmatprep.subr.mxu0 0.0
    %781 = vmatpush1.msra.mxu0 %v247
    %782 = vmatprep.subr.mxu0 0.0
    %783 = vmatpush1.msra.mxu0 %v246
    %784 = vmatprep.subr.mxu0 0.0
    %785 = vmatpush1.msra.mxu0 %v245
    %786 = vmatprep.subr.mxu0 0.0
    %787 = vmatpush1.msra.mxu0 %v244
    %788 = vmatprep.subr.mxu0 0.0
    %789 = vmatpush2.msra.mxu0 0.0
    %790 = vmatprep.subr.mxu0 0.0
    %791 = vmatpush2.msra.mxu0 0.0
    %792 = vmatprep.subr.mxu0 0.0
    %793 = vmatpush2.msra.mxu0 0.0
    %794 = vmatprep.subr.mxu0 0.0
    %795 = vmatpush2.msra.mxu0 0.0
    %796 = vmatprep.subr.mxu0 0.0
    %797 = vmatpush2.msra.mxu0 0.0
    %798 = vmatprep.subr.mxu0 0.0
    %799 = vmatpush2.msra.mxu0 0.0
    %800 = vmatprep.subr.mxu0 0.0
    %801 = vmatpush2.msra.mxu0 0.0
    %802 = vmatprep.subr.mxu0 0.0
    %803 = vmatpush2.msra.mxu0 0.0
    %804 = vmatprep.subr.mxu0 0.0
    %805 = vmatpush2.msra.mxu0 0.0
    %806 = vmatprep.subr.mxu0 0.0
    %807 = vmatpush2.msra.mxu0 0.0
    %808 = vmatprep.subr.mxu0 0.0
    %809 = vmatpush2.msra.mxu0 0.0
    %810 = vmatprep.subr.mxu0 0.0
    %811 = vmatpush2.msra.mxu0 0.0
    %812 = vmatprep.subr.mxu0 0.0
    %813 = vmatpush2.msra.mxu0 0.0
    %814 = vmatprep.subr.mxu0 0.0
    %815 = vmatpush2.msra.mxu0 0.0
    %816 = vmatprep.subr.mxu0 0.0
    %817 = vmatpush2.msra.mxu0 0.0
    %818 = vmatprep.subr.mxu0 0.0
    %819 = vmatpush2.msra.mxu0 0.0
    %820 = vmatprep.mubr.f32.mxu0 0.0
    %821 = vmatmul.mubr.f32.gmra.mxu0 %v754
    %v822 = vpop.f32.mrf.mxu0
    %v823 = vadd.f32 0.0, %v822
    %v824 = vpop.f32.mrf.mxu0
    %825 = vdwg.mxu0
    %v827 = vsel %vm606, %v601, 0
    %829 = vmatprep.subr.mxu0 0.0
    %830 = vmatpush1.msra.mxu0 0.0
    %831 = vmatprep.subr.mxu0 0.0
    %832 = vmatpush1.msra.mxu0 0.0
    %833 = vmatprep.subr.mxu0 0.0
    %834 = vmatpush1.msra.mxu0 0.0
    %835 = vmatprep.subr.mxu0 0.0
    %836 = vmatpush1.msra.mxu0 0.0
    %837 = vmatprep.subr.mxu0 0.0
    %838 = vmatpush1.msra.mxu0 0.0
    %839 = vmatprep.subr.mxu0 0.0
    %840 = vmatpush1.msra.mxu0 0.0
    %841 = vmatprep.subr.mxu0 0.0
    %842 = vmatpush1.msra.mxu0 0.0
    %843 = vmatprep.subr.mxu0 0.0
    %844 = vmatpush1.msra.mxu0 0.0
    %845 = vmatprep.subr.mxu0 0.0
    %846 = vmatpush1.msra.mxu0 %v259
    %847 = vmatprep.subr.mxu0 0.0
    %848 = vmatpush1.msra.mxu0 %v258
    %849 = vmatprep.subr.mxu0 0.0
    %850 = vmatpush1.msra.mxu0 %v257
    %851 = vmatprep.subr.mxu0 0.0
    %852 = vmatpush1.msra.mxu0 %v256
    %853 = vmatprep.subr.mxu0 0.0
    %854 = vmatpush1.msra.mxu0 %v255
    %855 = vmatprep.subr.mxu0 0.0
    %856 = vmatpush1.msra.mxu0 %v254
    %857 = vmatprep.subr.mxu0 0.0
    %858 = vmatpush1.msra.mxu0 %v253
    %859 = vmatprep.subr.mxu0 0.0
    %860 = vmatpush1.msra.mxu0 %v252
    %861 = vmatprep.subr.mxu0 0.0
    %862 = vmatpush2.msra.mxu0 0.0
    %863 = vmatprep.subr.mxu0 0.0
    %864 = vmatpush2.msra.mxu0 0.0
    %865 = vmatprep.subr.mxu0 0.0
    %866 = vmatpush2.msra.mxu0 0.0
    %867 = vmatprep.subr.mxu0 0.0
    %868 = vmatpush2.msra.mxu0 0.0
    %869 = vmatprep.subr.mxu0 0.0
    %870 = vmatpush2.msra.mxu0 0.0
    %871 = vmatprep.subr.mxu0 0.0
    %872 = vmatpush2.msra.mxu0 0.0
    %873 = vmatprep.subr.mxu0 0.0
    %874 = vmatpush2.msra.mxu0 0.0
    %875 = vmatprep.subr.mxu0 0.0
    %876 = vmatpush2.msra.mxu0 0.0
    %877 = vmatprep.subr.mxu0 0.0
    %878 = vmatpush2.msra.mxu0 0.0
    %879 = vmatprep.subr.mxu0 0.0
    %880 = vmatpush2.msra.mxu0 0.0
    %881 = vmatprep.subr.mxu0 0.0
    %882 = vmatpush2.msra.mxu0 0.0
    %883 = vmatprep.subr.mxu0 0.0
    %884 = vmatpush2.msra.mxu0 0.0
    %885 = vmatprep.subr.mxu0 0.0
    %886 = vmatpush2.msra.mxu0 0.0
    %887 = vmatprep.subr.mxu0 0.0
    %888 = vmatpush2.msra.mxu0 0.0
    %889 = vmatprep.subr.mxu0 0.0
    %890 = vmatpush2.msra.mxu0 0.0
    %891 = vmatprep.subr.mxu0 0.0
    %892 = vmatpush2.msra.mxu0 0.0
    %893 = vmatprep.mubr.f32.mxu0 0.0
    %894 = vmatmul.mubr.f32.gmra.mxu0 %v827
    %v895 = vpop.f32.mrf.mxu0
    %v896 = vadd.f32 0.0, %v895
    %v897 = vpop.f32.mrf.mxu0
    %898 = vdwg.mxu0
    %v900 = vsel %vm606, %v602, 0
    %902 = vmatprep.subr.mxu0 0.0
    %903 = vmatpush1.msra.mxu0 0.0
    %904 = vmatprep.subr.mxu0 0.0
    %905 = vmatpush1.msra.mxu0 0.0
    %906 = vmatprep.subr.mxu0 0.0
    %907 = vmatpush1.msra.mxu0 0.0
    %908 = vmatprep.subr.mxu0 0.0
    %909 = vmatpush1.msra.mxu0 0.0
    %910 = vmatprep.subr.mxu0 0.0
    %911 = vmatpush1.msra.mxu0 0.0
    %912 = vmatprep.subr.mxu0 0.0
    %913 = vmatpush1.msra.mxu0 0.0
    %914 = vmatprep.subr.mxu0 0.0
    %915 = vmatpush1.msra.mxu0 0.0
    %916 = vmatprep.subr.mxu0 0.0
    %917 = vmatpush1.msra.mxu0 0.0
    %918 = vmatprep.subr.mxu0 0.0
    %919 = vmatpush1.msra.mxu0 %v267
    %920 = vmatprep.subr.mxu0 0.0
    %921 = vmatpush1.msra.mxu0 %v266
    %922 = vmatprep.subr.mxu0 0.0
    %923 = vmatpush1.msra.mxu0 %v265
    %924 = vmatprep.subr.mxu0 0.0
    %925 = vmatpush1.msra.mxu0 %v264
    %926 = vmatprep.subr.mxu0 0.0
    %927 = vmatpush1.msra.mxu0 %v263
    %928 = vmatprep.subr.mxu0 0.0
    %929 = vmatpush1.msra.mxu0 %v262
    %930 = vmatprep.subr.mxu0 0.0
    %931 = vmatpush1.msra.mxu0 %v261
    %932 = vmatprep.subr.mxu0 0.0
    %933 = vmatpush1.msra.mxu0 %v260
    %934 = vmatprep.subr.mxu0 0.0
    %935 = vmatpush2.msra.mxu0 0.0
    %936 = vmatprep.subr.mxu0 0.0
    %937 = vmatpush2.msra.mxu0 0.0
    %938 = vmatprep.subr.mxu0 0.0
    %939 = vmatpush2.msra.mxu0 0.0
    %940 = vmatprep.subr.mxu0 0.0
    %941 = vmatpush2.msra.mxu0 0.0
    %942 = vmatprep.subr.mxu0 0.0
    %943 = vmatpush2.msra.mxu0 0.0
    %944 = vmatprep.subr.mxu0 0.0
    %945 = vmatpush2.msra.mxu0 0.0
    %946 = vmatprep.subr.mxu0 0.0
    %947 = vmatpush2.msra.mxu0 0.0
    %948 = vmatprep.subr.mxu0 0.0
    %949 = vmatpush2.msra.mxu0 0.0
    %950 = vmatprep.subr.mxu0 0.0
    %951 = vmatpush2.msra.mxu0 0.0
    %952 = vmatprep.subr.mxu0 0.0
    %953 = vmatpush2.msra.mxu0 0.0
    %954 = vmatprep.subr.mxu0 0.0
    %955 = vmatpush2.msra.mxu0 0.0
    %956 = vmatprep.subr.mxu0 0.0
    %957 = vmatpush2.msra.mxu0 0.0
    %958 = vmatprep.subr.mxu0 0.0
    %959 = vmatpush2.msra.mxu0 0.0
    %960 = vmatprep.subr.mxu0 0.0
    %961 = vmatpush2.msra.mxu0 0.0
    %962 = vmatprep.subr.mxu0 0.0
    %963 = vmatpush2.msra.mxu0 0.0
    %964 = vmatprep.subr.mxu0 0.0
    %965 = vmatpush2.msra.mxu0 0.0
    %966 = vmatprep.mubr.f32.mxu0 0.0
    %967 = vmatmul.mubr.f32.gmra.mxu0 %v900
    %v968 = vpop.f32.mrf.mxu0
    %v969 = vadd.f32 0.0, %v968
    %v970 = vpop.f32.mrf.mxu0
    %971 = vdwg.mxu0
    %v973 = vsel %vm606, %v603, 0
    %975 = vmatprep.subr.mxu0 0.0
    %976 = vmatpush1.msra.mxu0 0.0
    %977 = vmatprep.subr.mxu0 0.0
    %978 = vmatpush1.msra.mxu0 0.0
    %979 = vmatprep.subr.mxu0 0.0
    %980 = vmatpush1.msra.mxu0 0.0
    %981 = vmatprep.subr.mxu0 0.0
    %982 = vmatpush1.msra.mxu0 0.0
    %983 = vmatprep.subr.mxu0 0.0
    %984 = vmatpush1.msra.mxu0 0.0
    %985 = vmatprep.subr.mxu0 0.0
    %986 = vmatpush1.msra.mxu0 0.0
    %987 = vmatprep.subr.mxu0 0.0
    %988 = vmatpush1.msra.mxu0 0.0
    %989 = vmatprep.subr.mxu0 0.0
    %990 = vmatpush1.msra.mxu0 0.0
    %991 = vmatprep.subr.mxu0 0.0
    %992 = vmatpush1.msra.mxu0 %v275
    %993 = vmatprep.subr.mxu0 0.0
    %994 = vmatpush1.msra.mxu0 %v274
    %995 = vmatprep.subr.mxu0 0.0
    %996 = vmatpush1.msra.mxu0 %v273
    %997 = vmatprep.subr.mxu0 0.0
    %998 = vmatpush1.msra.mxu0 %v272
    %999 = vmatprep.subr.mxu0 0.0
    %1000 = vmatpush1.msra.mxu0 %v271
    %1001 = vmatprep.subr.mxu0 0.0
    %1002 = vmatpush1.msra.mxu0 %v270
    %1003 = vmatprep.subr.mxu0 0.0
    %1004 = vmatpush1.msra.mxu0 %v269
    %1005 = vmatprep.subr.mxu0 0.0
    %1006 = vmatpush1.msra.mxu0 %v268
    %1007 = vmatprep.subr.mxu0 0.0
    %1008 = vmatpush2.msra.mxu0 0.0
    %1009 = vmatprep.subr.mxu0 0.0
    %1010 = vmatpush2.msra.mxu0 0.0
    %1011 = vmatprep.subr.mxu0 0.0
    %1012 = vmatpush2.msra.mxu0 0.0
    %1013 = vmatprep.subr.mxu0 0.0
    %1014 = vmatpush2.msra.mxu0 0.0
    %1015 = vmatprep.subr.mxu0 0.0
    %1016 = vmatpush2.msra.mxu0 0.0
    %1017 = vmatprep.subr.mxu0 0.0
    %1018 = vmatpush2.msra.mxu0 0.0
    %1019 = vmatprep.subr.mxu0 0.0
    %1020 = vmatpush2.msra.mxu0 0.0
    %1021 = vmatprep.subr.mxu0 0.0
    %1022 = vmatpush2.msra.mxu0 0.0
    %1023 = vmatprep.subr.mxu0 0.0
    %1024 = vmatpush2.msra.mxu0 0.0
    %1025 = vmatprep.subr.mxu0 0.0
    %1026 = vmatpush2.msra.mxu0 0.0
    %1027 = vmatprep.subr.mxu0 0.0
    %1028 = vmatpush2.msra.mxu0 0.0
    %1029 = vmatprep.subr.mxu0 0.0
    %1030 = vmatpush2.msra.mxu0 0.0
    %1031 = vmatprep.subr.mxu0 0.0
    %1032 = vmatpush2.msra.mxu0 0.0
    %1033 = vmatprep.subr.mxu0 0.0
    %1034 = vmatpush2.msra.mxu0 0.0
    %1035 = vmatprep.subr.mxu0 0.0
    %1036 = vmatpush2.msra.mxu0 0.0
    %1037 = vmatprep.subr.mxu0 0.0
    %1038 = vmatpush2.msra.mxu0 0.0
    %1039 = vmatprep.mubr.f32.mxu0 0.0
    %1040 = vmatmul.mubr.f32.gmra.mxu0 %v973
    %v1041 = vpop.f32.mrf.mxu0
    %v1042 = vadd.f32 0.0, %v1041
    %v1043 = vpop.f32.mrf.mxu0
    %1044 = vdwg.mxu0
    %v1046 = vsel %vm606, %v604, 0
    %1048 = vmatprep.subr.mxu0 0.0
    %1049 = vmatpush1.msra.mxu0 0.0
    %1050 = vmatprep.subr.mxu0 0.0
    %1051 = vmatpush1.msra.mxu0 0.0
    %1052 = vmatprep.subr.mxu0 0.0
    %1053 = vmatpush1.msra.mxu0 0.0
    %1054 = vmatprep.subr.mxu0 0.0
    %1055 = vmatpush1.msra.mxu0 0.0
    %1056 = vmatprep.subr.mxu0 0.0
    %1057 = vmatpush1.msra.mxu0 0.0
    %1058 = vmatprep.subr.mxu0 0.0
    %1059 = vmatpush1.msra.mxu0 0.0
    %1060 = vmatprep.subr.mxu0 0.0
    %1061 = vmatpush1.msra.mxu0 0.0
    %1062 = vmatprep.subr.mxu0 0.0
    %1063 = vmatpush1.msra.mxu0 0.0
    %1064 = vmatprep.subr.mxu0 0.0
    %1065 = vmatpush1.msra.mxu0 %v283
    %1066 = vmatprep.subr.mxu0 0.0
    %1067 = vmatpush1.msra.mxu0 %v282
    %1068 = vmatprep.subr.mxu0 0.0
    %1069 = vmatpush1.msra.mxu0 %v281
    %1070 = vmatprep.subr.mxu0 0.0
    %1071 = vmatpush1.msra.mxu0 %v280
    %1072 = vmatprep.subr.mxu0 0.0
    %1073 = vmatpush1.msra.mxu0 %v279
    %1074 = vmatprep.subr.mxu0 0.0
    %1075 = vmatpush1.msra.mxu0 %v278
    %1076 = vmatprep.subr.mxu0 0.0
    %1077 = vmatpush1.msra.mxu0 %v277
    %1078 = vmatprep.subr.mxu0 0.0
    %1079 = vmatpush1.msra.mxu0 %v276
    %1080 = vmatprep.subr.mxu0 0.0
    %1081 = vmatpush2.msra.mxu0 0.0
    %1082 = vmatprep.subr.mxu0 0.0
    %1083 = vmatpush2.msra.mxu0 0.0
    %1084 = vmatprep.subr.mxu0 0.0
    %1085 = vmatpush2.msra.mxu0 0.0
    %1086 = vmatprep.subr.mxu0 0.0
    %1087 = vmatpush2.msra.mxu0 0.0
    %1088 = vmatprep.subr.mxu0 0.0
    %1089 = vmatpush2.msra.mxu0 0.0
    %1090 = vmatprep.subr.mxu0 0.0
    %1091 = vmatpush2.msra.mxu0 0.0
    %1092 = vmatprep.subr.mxu0 0.0
    %1093 = vmatpush2.msra.mxu0 0.0
    %1094 = vmatprep.subr.mxu0 0.0
    %1095 = vmatpush2.msra.mxu0 0.0
    %1096 = vmatprep.subr.mxu0 0.0
    %1097 = vmatpush2.msra.mxu0 0.0
    %1098 = vmatprep.subr.mxu0 0.0
    %1099 = vmatpush2.msra.mxu0 0.0
    %1100 = vmatprep.subr.mxu0 0.0
    %1101 = vmatpush2.msra.mxu0 0.0
    %1102 = vmatprep.subr.mxu0 0.0
    %1103 = vmatpush2.msra.mxu0 0.0
    %1104 = vmatprep.subr.mxu0 0.0
    %1105 = vmatpush2.msra.mxu0 0.0
    %1106 = vmatprep.subr.mxu0 0.0
    %1107 = vmatpush2.msra.mxu0 0.0
    %1108 = vmatprep.subr.mxu0 0.0
    %1109 = vmatpush2.msra.mxu0 0.0
    %1110 = vmatprep.subr.mxu0 0.0
    %1111 = vmatpush2.msra.mxu0 0.0
    %1112 = vmatprep.mubr.f32.mxu0 0.0
    %1113 = vmatmul.mubr.f32.gmra.mxu0 %v1046
    %v1114 = vpop.f32.mrf.mxu0
    %v1115 = vadd.f32 0.0, %v1114
    %v1116 = vpop.f32.mrf.mxu0
    %1117 = vdwg.mxu0
    %v1119 = vsel %vm606, %v605, 0
    %1121 = vmatprep.subr.mxu0 0.0
    %1122 = vmatpush1.msra.mxu0 0.0
    %1123 = vmatprep.subr.mxu0 0.0
    %1124 = vmatpush1.msra.mxu0 0.0
    %1125 = vmatprep.subr.mxu0 0.0
    %1126 = vmatpush1.msra.mxu0 0.0
    %1127 = vmatprep.subr.mxu0 0.0
    %1128 = vmatpush1.msra.mxu0 0.0
    %1129 = vmatprep.subr.mxu0 0.0
    %1130 = vmatpush1.msra.mxu0 0.0
    %1131 = vmatprep.subr.mxu0 0.0
    %1132 = vmatpush1.msra.mxu0 0.0
    %1133 = vmatprep.subr.mxu0 0.0
    %1134 = vmatpush1.msra.mxu0 0.0
    %1135 = vmatprep.subr.mxu0 0.0
    %1136 = vmatpush1.msra.mxu0 0.0
    %1137 = vmatprep.subr.mxu0 0.0
    %1138 = vmatpush1.msra.mxu0 %v291
    %1139 = vmatprep.subr.mxu0 0.0
    %1140 = vmatpush1.msra.mxu0 %v290
    %1141 = vmatprep.subr.mxu0 0.0
    %1142 = vmatpush1.msra.mxu0 %v289
    %1143 = vmatprep.subr.mxu0 0.0
    %1144 = vmatpush1.msra.mxu0 %v288
    %1145 = vmatprep.subr.mxu0 0.0
    %1146 = vmatpush1.msra.mxu0 %v287
    %1147 = vmatprep.subr.mxu0 0.0
    %1148 = vmatpush1.msra.mxu0 %v286
    %1149 = vmatprep.subr.mxu0 0.0
    %1150 = vmatpush1.msra.mxu0 %v285
    %1151 = vmatprep.subr.mxu0 0.0
    %1152 = vmatpush1.msra.mxu0 %v284
    %1153 = vmatprep.subr.mxu0 0.0
    %1154 = vmatpush2.msra.mxu0 0.0
    %1155 = vmatprep.subr.mxu0 0.0
    %1156 = vmatpush2.msra.mxu0 0.0
    %1157 = vmatprep.subr.mxu0 0.0
    %1158 = vmatpush2.msra.mxu0 0.0
    %1159 = vmatprep.subr.mxu0 0.0
    %1160 = vmatpush2.msra.mxu0 0.0
    %1161 = vmatprep.subr.mxu0 0.0
    %1162 = vmatpush2.msra.mxu0 0.0
    %1163 = vmatprep.subr.mxu0 0.0
    %1164 = vmatpush2.msra.mxu0 0.0
    %1165 = vmatprep.subr.mxu0 0.0
    %1166 = vmatpush2.msra.mxu0 0.0
    %1167 = vmatprep.subr.mxu0 0.0
    %1168 = vmatpush2.msra.mxu0 0.0
    %1169 = vmatprep.subr.mxu0 0.0
    %1170 = vmatpush2.msra.mxu0 0.0
    %1171 = vmatprep.subr.mxu0 0.0
    %1172 = vmatpush2.msra.mxu0 0.0
    %1173 = vmatprep.subr.mxu0 0.0
    %1174 = vmatpush2.msra.mxu0 0.0
    %1175 = vmatprep.subr.mxu0 0.0
    %1176 = vmatpush2.msra.mxu0 0.0
    %1177 = vmatprep.subr.mxu0 0.0
    %1178 = vmatpush2.msra.mxu0 0.0
    %1179 = vmatprep.subr.mxu0 0.0
    %1180 = vmatpush2.msra.mxu0 0.0
    %1181 = vmatprep.subr.mxu0 0.0
    %1182 = vmatpush2.msra.mxu0 0.0
    %1183 = vmatprep.subr.mxu0 0.0
    %1184 = vmatpush2.msra.mxu0 0.0
    %1185 = vmatprep.mubr.f32.mxu0 0.0
    %1186 = vmatmul.mubr.f32.gmra.mxu0 %v1119
    %v1187 = vpop.f32.mrf.mxu0
    %v1188 = vadd.f32 0.0, %v1187
    %v1189 = vpop.f32.mrf.mxu0
    %1190 = vdwg.mxu0
    %vm1191 = vcmask 517120
    %1192 = vst.msk [vmem:[#allocation3] sm:$0x3] %vm1191, %v677
    %1193 = vst.msk [vmem:[#allocation3 + $0x2] sm:$0x3] %vm1191, %v750
    %1194 = vst.msk [vmem:[#allocation3 + $0x4] sm:$0x3] %vm1191, %v823
    %1195 = vst.msk [vmem:[#allocation3 + $0x6] sm:$0x3] %vm1191, %v896
    %1196 = vst.msk [vmem:[#allocation3 + $0x8] sm:$0x3] %vm1191, %v969
    %1197 = vst.msk [vmem:[#allocation3 + $0xa] sm:$0x3] %vm1191, %v1042
    %1198 = vst.msk [vmem:[#allocation3 + $0xc] sm:$0x3] %vm1191, %v1115
    %1199 = vst.msk [vmem:[#allocation3 + $0xe] sm:$0x3] %vm1191, %v1188
    %v1201 = vlaneseq
    %v1202 = vshrl.u32 %v1201, 7
    %v1203 = vsub.s32 0, %v1202
    %v1204 = vrot.slane %v296, %v1203
    %v1207 = vsel %vm383, %v206, 0
    %v1210 = vsel %vm383, %v211, 0
    %v1213 = vsel %vm383, %v216, 0
    %v1216 = vsel %vm383, %v221, 0
    %1218 = vmatprep.subr.mxu0 0.0
    %1219 = vmatpush1.msra.mxu0 0.0
    %1220 = vmatprep.subr.mxu0 0.0
    %1221 = vmatpush1.msra.mxu0 0.0
    %1222 = vmatprep.subr.mxu0 0.0
    %1223 = vmatpush1.msra.mxu0 0.0
    %1224 = vmatprep.subr.mxu0 0.0
    %1225 = vmatpush1.msra.mxu0 0.0
    %1226 = vmatprep.subr.mxu0 0.0
    %1227 = vmatpush1.msra.mxu0 0.0
    %1228 = vmatprep.subr.mxu0 0.0
    %1229 = vmatpush1.msra.mxu0 0.0
    %1230 = vmatprep.subr.mxu0 0.0
    %1231 = vmatpush1.msra.mxu0 0.0
    %1232 = vmatprep.subr.mxu0 0.0
    %1233 = vmatpush1.msra.mxu0 0.0
    %1234 = vmatprep.subr.mxu0 0.0
    %1235 = vmatpush1.msra.mxu0 0.0
    %1236 = vmatprep.subr.mxu0 0.0
    %1237 = vmatpush1.msra.mxu0 0.0
    %1238 = vmatprep.subr.mxu0 0.0
    %1239 = vmatpush1.msra.mxu0 0.0
    %1240 = vmatprep.subr.mxu0 0.0
    %1241 = vmatpush1.msra.mxu0 0.0
    %1242 = vmatprep.subr.mxu0 0.0
    %1243 = vmatpush1.msra.mxu0 %v295
    %1244 = vmatprep.subr.mxu0 0.0
    %1245 = vmatpush1.msra.mxu0 %v294
    %1246 = vmatprep.subr.mxu0 0.0
    %1247 = vmatpush1.msra.mxu0 %v293
    %1248 = vmatprep.subr.mxu0 0.0
    %1249 = vmatpush1.msra.mxu0 %v292
    %1250 = vmatprep.subr.mxu0 0.0
    %1251 = vmatpush2.msra.mxu0 0.0
    %1252 = vmatprep.subr.mxu0 0.0
    %1253 = vmatpush2.msra.mxu0 0.0
    %1254 = vmatprep.subr.mxu0 0.0
    %1255 = vmatpush2.msra.mxu0 0.0
    %1256 = vmatprep.subr.mxu0 0.0
    %1257 = vmatpush2.msra.mxu0 0.0
    %1258 = vmatprep.subr.mxu0 0.0
    %1259 = vmatpush2.msra.mxu0 0.0
    %1260 = vmatprep.subr.mxu0 0.0
    %1261 = vmatpush2.msra.mxu0 0.0
    %1262 = vmatprep.subr.mxu0 0.0
    %1263 = vmatpush2.msra.mxu0 0.0
    %1264 = vmatprep.subr.mxu0 0.0
    %1265 = vmatpush2.msra.mxu0 0.0
    %1266 = vmatprep.subr.mxu0 0.0
    %1267 = vmatpush2.msra.mxu0 0.0
    %1268 = vmatprep.subr.mxu0 0.0
    %1269 = vmatpush2.msra.mxu0 0.0
    %1270 = vmatprep.subr.mxu0 0.0
    %1271 = vmatpush2.msra.mxu0 0.0
    %1272 = vmatprep.subr.mxu0 0.0
    %1273 = vmatpush2.msra.mxu0 0.0
    %1274 = vmatprep.subr.mxu0 0.0
    %1275 = vmatpush2.msra.mxu0 0.0
    %1276 = vmatprep.subr.mxu0 0.0
    %1277 = vmatpush2.msra.mxu0 0.0
    %1278 = vmatprep.subr.mxu0 0.0
    %1279 = vmatpush2.msra.mxu0 0.0
    %1280 = vmatprep.subr.mxu0 0.0
    %1281 = vmatpush2.msra.mxu0 0.0
    %1282 = vmatprep.mubr.f32.mxu0 0.0
    %1283 = vmatmul.mubr.f32.gmra.mxu0 %v1207
    %v1284 = vpop.f32.mrf.mxu0
    %v1285 = vadd.f32 %v1204, %v1284
    %v1286 = vpop.f32.mrf.mxu0
    %1287 = vmatprep.mubr.f32.mxu0 0.0
    %1288 = vmatmul.mubr.f32.gmra.mxu0 %v1210
    %v1289 = vpop.f32.mrf.mxu0
    %v1290 = vadd.f32 %v1204, %v1289
    %v1291 = vpop.f32.mrf.mxu0
    %1292 = vmatprep.mubr.f32.mxu0 0.0
    %1293 = vmatmul.mubr.f32.gmra.mxu0 %v1213
    %v1294 = vpop.f32.mrf.mxu0
    %v1295 = vadd.f32 %v1204, %v1294
    %v1296 = vpop.f32.mrf.mxu0
    %1297 = vmatprep.mubr.f32.mxu0 0.0
    %1298 = vmatmul.mubr.f32.gmra.mxu0 %v1216
    %v1299 = vpop.f32.mrf.mxu0
    %v1300 = vadd.f32 %v1204, %v1299
    %v1301 = vpop.f32.mrf.mxu0
    %1302 = vdwg.mxu0
    %v1303 = vld [vmem:[#allocation3] sm:$0x1]
    %v1304 = vld [vmem:[#allocation3 + $0x2] sm:$0x1]
    %v1305 = vld [vmem:[#allocation3 + $0x4] sm:$0x1]
    %v1306 = vld [vmem:[#allocation3 + $0x6] sm:$0x1]
    %v1307 = vld [vmem:[#allocation3 + $0x8] sm:$0x1]
    %v1308 = vld [vmem:[#allocation3 + $0xa] sm:$0x1]
    %v1309 = vld [vmem:[#allocation3 + $0xc] sm:$0x1]
    %v1310 = vld [vmem:[#allocation3 + $0xe] sm:$0x1]
    %v1319 = vrot.slane %v1304, 7
    %vm1320 = vcmask 1041409
    %v1321 = vsel %vm1320, %v1319, %v1303
    %v1322 = vrot.slane %v1305, 6
    %vm1323 = vcmask 1042434
    %v1324 = vsel %vm1323, %v1322, %v1321
    %v1325 = vrot.slane %v1306, 5
    %vm1326 = vcmask 1043459
    %v1327 = vsel %vm1326, %v1325, %v1324
    %v1328 = vrot.slane %v1307, 4
    %vm1329 = vcmask 1044484
    %v1330 = vsel %vm1329, %v1328, %v1327
    %v1331 = vrot.slane %v1308, 3
    %vm1332 = vcmask 1045509
    %v1333 = vsel %vm1332, %v1331, %v1330
    %v1334 = vrot.slane %v1309, 2
    %vm1335 = vcmask 1046534
    %v1336 = vsel %vm1335, %v1334, %v1333
    %v1337 = vrot.slane %v1310, 1
    %vm1338 = vcmask 1047559
    %v1339 = vsel %vm1338, %v1337, %v1336
    %1341 = vrot.lane.b32.xlu0 %v1339, 96
    %v1342 = vpop.permute.xlu0 %1341
    %v1345 = vsel %vm297, %v226, 0
    %v1348 = vsel %vm297, %v227, 0
    %1350 = vmatprep.subr.mxu0 0.0
    %1351 = vmatpush1.msra.mxu0 0.0
    %1352 = vmatprep.subr.mxu0 0.0
    %1353 = vmatpush1.msra.mxu0 0.0
    %1354 = vmatprep.subr.mxu0 0.0
    %1355 = vmatpush1.msra.mxu0 0.0
    %1356 = vmatprep.subr.mxu0 0.0
    %1357 = vmatpush1.msra.mxu0 0.0
    %1358 = vmatprep.subr.mxu0 0.0
    %1359 = vmatpush1.msra.mxu0 0.0
    %1360 = vmatprep.subr.mxu0 0.0
    %1361 = vmatpush1.msra.mxu0 0.0
    %1362 = vmatprep.subr.mxu0 0.0
    %1363 = vmatpush1.msra.mxu0 0.0
    %1364 = vmatprep.subr.mxu0 0.0
    %1365 = vmatpush1.msra.mxu0 0.0
    %1366 = vmatprep.subr.mxu0 0.0
    %1367 = vmatpush1.msra.mxu0 0.0
    %1368 = vmatprep.subr.mxu0 0.0
    %1369 = vmatpush1.msra.mxu0 0.0
    %1370 = vmatprep.subr.mxu0 0.0
    %1371 = vmatpush1.msra.mxu0 0.0
    %1372 = vmatprep.subr.mxu0 0.0
    %1373 = vmatpush1.msra.mxu0 0.0
    %1374 = vmatprep.subr.mxu0 0.0
    %1375 = vmatpush1.msra.mxu0 0.0
    %1376 = vmatprep.subr.mxu0 0.0
    %1377 = vmatpush1.msra.mxu0 0.0
    %1378 = vmatprep.subr.mxu0 0.0
    %1379 = vmatpush1.msra.mxu0 %v1342
    %1380 = vmatprep.subr.mxu0 0.0
    %1381 = vmatpush1.msra.mxu0 %v1339
    %1382 = vmatprep.subr.mxu0 0.0
    %1383 = vmatpush2.msra.mxu0 0.0
    %1384 = vmatprep.subr.mxu0 0.0
    %1385 = vmatpush2.msra.mxu0 0.0
    %1386 = vmatprep.subr.mxu0 0.0
    %1387 = vmatpush2.msra.mxu0 0.0
    %1388 = vmatprep.subr.mxu0 0.0
    %1389 = vmatpush2.msra.mxu0 0.0
    %1390 = vmatprep.subr.mxu0 0.0
    %1391 = vmatpush2.msra.mxu0 0.0
    %1392 = vmatprep.subr.mxu0 0.0
    %1393 = vmatpush2.msra.mxu0 0.0
    %1394 = vmatprep.subr.mxu0 0.0
    %1395 = vmatpush2.msra.mxu0 0.0
    %1396 = vmatprep.subr.mxu0 0.0
    %1397 = vmatpush2.msra.mxu0 0.0
    %1398 = vmatprep.subr.mxu0 0.0
    %1399 = vmatpush2.msra.mxu0 0.0
    %1400 = vmatprep.subr.mxu0 0.0
    %1401 = vmatpush2.msra.mxu0 0.0
    %1402 = vmatprep.subr.mxu0 0.0
    %1403 = vmatpush2.msra.mxu0 0.0
    %1404 = vmatprep.subr.mxu0 0.0
    %1405 = vmatpush2.msra.mxu0 0.0
    %1406 = vmatprep.subr.mxu0 0.0
    %1407 = vmatpush2.msra.mxu0 0.0
    %1408 = vmatprep.subr.mxu0 0.0
    %1409 = vmatpush2.msra.mxu0 0.0
    %1410 = vmatprep.subr.mxu0 0.0
    %1411 = vmatpush2.msra.mxu0 0.0
    %1412 = vmatprep.subr.mxu0 0.0
    %1413 = vmatpush2.msra.mxu0 0.0
    %1414 = vmatprep.mubr.f32.mxu0 0.0
    %1415 = vmatmul.mubr.f32.gmra.mxu0 %v1345
    %v1416 = vpop.f32.mrf.mxu0
    %v1417 = vadd.f32 %v1285, %v1416
    %v1418 = vpop.f32.mrf.mxu0
    %1419 = vmatprep.mubr.f32.mxu0 0.0
    %1420 = vmatmul.mubr.f32.gmra.mxu0 %v1348
    %v1421 = vpop.f32.mrf.mxu0
    %v1422 = vadd.f32 %v1290, %v1421
    %v1423 = vpop.f32.mrf.mxu0
    %1424 = vdwg.mxu0
    %v1425 = vld [vmem:[#allocation3 + $0x1] sm:$0x1]
    %v1426 = vld [vmem:[#allocation3 + $0x3] sm:$0x1]
    %v1427 = vld [vmem:[#allocation3 + $0x5] sm:$0x1]
    %v1428 = vld [vmem:[#allocation3 + $0x7] sm:$0x1]
    %v1429 = vld [vmem:[#allocation3 + $0x9] sm:$0x1]
    %v1430 = vld [vmem:[#allocation3 + $0xb] sm:$0x1]
    %v1431 = vld [vmem:[#allocation3 + $0xd] sm:$0x1]
    %v1432 = vld [vmem:[#allocation3 + $0xf] sm:$0x1]
    %v1441 = vrot.slane %v1426, 7
    %v1442 = vsel %vm1320, %v1441, %v1425
    %v1443 = vrot.slane %v1427, 6
    %v1444 = vsel %vm1323, %v1443, %v1442
    %v1445 = vrot.slane %v1428, 5
    %v1446 = vsel %vm1326, %v1445, %v1444
    %v1447 = vrot.slane %v1429, 4
    %v1448 = vsel %vm1329, %v1447, %v1446
    %v1449 = vrot.slane %v1430, 3
    %v1450 = vsel %vm1332, %v1449, %v1448
    %v1451 = vrot.slane %v1431, 2
    %v1452 = vsel %vm1335, %v1451, %v1450
    %v1453 = vrot.slane %v1432, 1
    %v1454 = vsel %vm1338, %v1453, %v1452
    %1456 = vrot.lane.b32.xlu0 %v1454, 96
    %v1457 = vpop.permute.xlu0 %1456
    %1459 = vmatprep.subr.mxu0 0.0
    %1460 = vmatpush1.msra.mxu0 0.0
    %1461 = vmatprep.subr.mxu0 0.0
    %1462 = vmatpush1.msra.mxu0 0.0
    %1463 = vmatprep.subr.mxu0 0.0
    %1464 = vmatpush1.msra.mxu0 0.0
    %1465 = vmatprep.subr.mxu0 0.0
    %1466 = vmatpush1.msra.mxu0 0.0
    %1467 = vmatprep.subr.mxu0 0.0
    %1468 = vmatpush1.msra.mxu0 0.0
    %1469 = vmatprep.subr.mxu0 0.0
    %1470 = vmatpush1.msra.mxu0 0.0
    %1471 = vmatprep.subr.mxu0 0.0
    %1472 = vmatpush1.msra.mxu0 0.0
    %1473 = vmatprep.subr.mxu0 0.0
    %1474 = vmatpush1.msra.mxu0 0.0
    %1475 = vmatprep.subr.mxu0 0.0
    %1476 = vmatpush1.msra.mxu0 0.0
    %1477 = vmatprep.subr.mxu0 0.0
    %1478 = vmatpush1.msra.mxu0 0.0
    %1479 = vmatprep.subr.mxu0 0.0
    %1480 = vmatpush1.msra.mxu0 0.0
    %1481 = vmatprep.subr.mxu0 0.0
    %1482 = vmatpush1.msra.mxu0 0.0
    %1483 = vmatprep.subr.mxu0 0.0
    %1484 = vmatpush1.msra.mxu0 0.0
    %1485 = vmatprep.subr.mxu0 0.0
    %1486 = vmatpush1.msra.mxu0 0.0
    %1487 = vmatprep.subr.mxu0 0.0
    %1488 = vmatpush1.msra.mxu0 %v1457
    %1489 = vmatprep.subr.mxu0 0.0
    %1490 = vmatpush1.msra.mxu0 %v1454
    %1491 = vmatprep.subr.mxu0 0.0
    %1492 = vmatpush2.msra.mxu0 0.0
    %1493 = vmatprep.subr.mxu0 0.0
    %1494 = vmatpush2.msra.mxu0 0.0
    %1495 = vmatprep.subr.mxu0 0.0
    %1496 = vmatpush2.msra.mxu0 0.0
    %1497 = vmatprep.subr.mxu0 0.0
    %1498 = vmatpush2.msra.mxu0 0.0
    %1499 = vmatprep.subr.mxu0 0.0
    %1500 = vmatpush2.msra.mxu0 0.0
    %1501 = vmatprep.subr.mxu0 0.0
    %1502 = vmatpush2.msra.mxu0 0.0
    %1503 = vmatprep.subr.mxu0 0.0
    %1504 = vmatpush2.msra.mxu0 0.0
    %1505 = vmatprep.subr.mxu0 0.0
    %1506 = vmatpush2.msra.mxu0 0.0
    %1507 = vmatprep.subr.mxu0 0.0
    %1508 = vmatpush2.msra.mxu0 0.0
    %1509 = vmatprep.subr.mxu0 0.0
    %1510 = vmatpush2.msra.mxu0 0.0
    %1511 = vmatprep.subr.mxu0 0.0
    %1512 = vmatpush2.msra.mxu0 0.0
    %1513 = vmatprep.subr.mxu0 0.0
    %1514 = vmatpush2.msra.mxu0 0.0
    %1515 = vmatprep.subr.mxu0 0.0
    %1516 = vmatpush2.msra.mxu0 0.0
    %1517 = vmatprep.subr.mxu0 0.0
    %1518 = vmatpush2.msra.mxu0 0.0
    %1519 = vmatprep.subr.mxu0 0.0
    %1520 = vmatpush2.msra.mxu0 0.0
    %1521 = vmatprep.subr.mxu0 0.0
    %1522 = vmatpush2.msra.mxu0 0.0
    %1523 = vmatprep.mubr.f32.mxu0 0.0
    %1524 = vmatmul.mubr.f32.gmra.mxu0 %v1345
    %v1525 = vpop.f32.mrf.mxu0
    %v1526 = vadd.f32 %v1295, %v1525
    %v1527 = vpop.f32.mrf.mxu0
    %1528 = vmatprep.mubr.f32.mxu0 0.0
    %1529 = vmatmul.mubr.f32.gmra.mxu0 %v1348
    %v1530 = vpop.f32.mrf.mxu0
    %v1531 = vadd.f32 %v1300, %v1530
    %v1532 = vpop.f32.mrf.mxu0
    %1533 = vdwg.mxu0
    %v1534 = vmul.f32 %v1417, %v1417
    %v1535 = vmul.f32 %v1422, %v1422
    %v1536 = vmul.f32 %v1526, %v1526
    %v1537 = vmul.f32 %v1531, %v1531
    %v1538 = vmul.f32 %v1417, %v1534
    %v1539 = vmul.f32 %v1422, %v1535
    %v1540 = vmul.f32 %v1526, %v1536
    %v1541 = vmul.f32 %v1531, %v1537
    %v1542 = vmul.f32 %v1538, 0.044715
    %v1543 = vmul.f32 %v1539, 0.044715
    %v1544 = vmul.f32 %v1540, 0.044715
    %v1545 = vmul.f32 %v1541, 0.044715
    %v1546 = vadd.f32 %v1417, %v1542
    %v1547 = vadd.f32 %v1422, %v1543
    %v1548 = vadd.f32 %v1526, %v1544
    %v1549 = vadd.f32 %v1531, %v1545
    %v1550 = vmul.f32 %v1546, 0.7978846
    %v1551 = vmul.f32 %v1547, 0.7978846
    %v1552 = vmul.f32 %v1548, 0.7978846
    %v1553 = vmul.f32 %v1549, 0.7978846
    %v1554 = vtanh.pop %v1550
    %v1555 = vtanh.pop %v1551
    %v1556 = vtanh.pop %v1552
    %v1557 = vtanh.pop %v1553
    %v1558 = vadd.f32 %v1554, 1.0
    %v1559 = vadd.f32 %v1555, 1.0
    %v1560 = vadd.f32 %v1556, 1.0
    %v1561 = vadd.f32 %v1557, 1.0
    %v1562 = vmul.f32 %v1558, 0.5
    %v1563 = vmul.f32 %v1559, 0.5
    %v1564 = vmul.f32 %v1560, 0.5
    %v1565 = vmul.f32 %v1561, 0.5
    %v1566 = vmul.f32 %v1417, %v1562
    %v1567 = vmul.f32 %v1422, %v1563
    %v1568 = vmul.f32 %v1526, %v1564
    %v1569 = vmul.f32 %v1531, %v1565
    %s1570 = scalar_lea.vmem [#allocation10], 512
    %v1571 = vld [vmem:[%s1570] sm:$0xff]
    %v1572 = vld [vmem:[%s1570 + $0x8] sm:$0xff]
    %v1573 = vld [vmem:[%s1570 + $0x10] sm:$0xff]
    %v1574 = vld [vmem:[%s1570 + $0x18] sm:$0xff]
    %v1575 = vld [vmem:[%s1570 + $0x20] sm:$0xff]
    %v1576 = vld [vmem:[%s1570 + $0x28] sm:$0xff]
    %v1577 = vld [vmem:[%s1570 + $0x30] sm:$0xff]
    %v1578 = vld [vmem:[%s1570 + $0x38] sm:$0xff]
    %v1579 = vld [vmem:[%s1570 + $0x40] sm:$0xff]
    %v1580 = vld [vmem:[%s1570 + $0x48] sm:$0xff]
    %v1581 = vld [vmem:[%s1570 + $0x50] sm:$0xff]
    %v1582 = vld [vmem:[%s1570 + $0x58] sm:$0xff]
    %v1583 = vld [vmem:[%s1570 + $0x60] sm:$0xff]
    %v1584 = vld [vmem:[%s1570 + $0x68] sm:$0xff]
    %v1585 = vld [vmem:[%s1570 + $0x70] sm:$0xff]
    %v1586 = vld [vmem:[%s1570 + $0x78] sm:$0xff]
    %v1587 = vld [vmem:[%s1570 + $0x80] sm:$0xff]
    %v1588 = vld [vmem:[%s1570 + $0x88] sm:$0xff]
    %v1589 = vld [vmem:[%s1570 + $0x90] sm:$0xff]
    %v1590 = vld [vmem:[%s1570 + $0x98] sm:$0xff]
    %v1591 = vld [vmem:[%s1570 + $0xa0] sm:$0xff]
    %v1592 = vld [vmem:[%s1570 + $0xa8] sm:$0xff]
    %v1593 = vld [vmem:[%s1570 + $0xb0] sm:$0xff]
    %v1594 = vld [vmem:[%s1570 + $0xb8] sm:$0xff]
    %v1595 = vld [vmem:[%s1570 + $0xc0] sm:$0xff]
    %v1596 = vld [vmem:[%s1570 + $0xc8] sm:$0xff]
    %v1597 = vld [vmem:[%s1570 + $0xd0] sm:$0xff]
    %v1598 = vld [vmem:[%s1570 + $0xd8] sm:$0xff]
    %v1599 = vld [vmem:[%s1570 + $0xe0] sm:$0xff]
    %v1600 = vld [vmem:[%s1570 + $0xe8] sm:$0xff]
    %v1601 = vld [vmem:[%s1570 + $0xf0] sm:$0xff]
    %v1602 = vld [vmem:[%s1570 + $0xf8] sm:$0xff]
    %v1603 = vld [vmem:[%s1570 + $0x100] sm:$0xff]
    %v1604 = vld [vmem:[%s1570 + $0x108] sm:$0xff]
    %v1605 = vld [vmem:[%s1570 + $0x110] sm:$0xff]
    %v1606 = vld [vmem:[%s1570 + $0x118] sm:$0xff]
    %v1607 = vld [vmem:[%s1570 + $0x120] sm:$0xff]
    %v1608 = vld [vmem:[%s1570 + $0x128] sm:$0xff]
    %v1609 = vld [vmem:[%s1570 + $0x130] sm:$0xff]
    %v1610 = vld [vmem:[%s1570 + $0x138] sm:$0xff]
    %v1611 = vld [vmem:[%s1570 + $0x140] sm:$0xff]
    %v1612 = vld [vmem:[%s1570 + $0x148] sm:$0xff]
    %v1613 = vld [vmem:[%s1570 + $0x150] sm:$0xff]
    %v1614 = vld [vmem:[%s1570 + $0x158] sm:$0xff]
    %v1615 = vld [vmem:[%s1570 + $0x160] sm:$0xff]
    %v1616 = vld [vmem:[%s1570 + $0x168] sm:$0xff]
    %v1617 = vld [vmem:[%s1570 + $0x170] sm:$0xff]
    %v1618 = vld [vmem:[%s1570 + $0x178] sm:$0xff]
    %v1619 = vld [vmem:[%s1570 + $0x180] sm:$0xff]
    %v1620 = vld [vmem:[%s1570 + $0x188] sm:$0xff]
    %v1621 = vld [vmem:[%s1570 + $0x190] sm:$0xff]
    %v1622 = vld [vmem:[%s1570 + $0x198] sm:$0xff]
    %v1623 = vld [vmem:[%s1570 + $0x1a0] sm:$0xff]
    %v1624 = vld [vmem:[%s1570 + $0x1a8] sm:$0xff]
    %v1625 = vld [vmem:[%s1570 + $0x1b0] sm:$0xff]
    %v1626 = vld [vmem:[%s1570 + $0x1b8] sm:$0xff]
    %v1627 = vld [vmem:[%s1570 + $0x1c0] sm:$0xff]
    %v1628 = vld [vmem:[%s1570 + $0x1c8] sm:$0xff]
    %v1629 = vld [vmem:[%s1570 + $0x1d0] sm:$0xff]
    %v1630 = vld [vmem:[%s1570 + $0x1d8] sm:$0xff]
    %v1631 = vld [vmem:[%s1570 + $0x1e0] sm:$0xff]
    %v1632 = vld [vmem:[%s1570 + $0x1e8] sm:$0xff]
    %v1633 = vld [vmem:[%s1570 + $0x1f0] sm:$0xff]
    %v1634 = vld [vmem:[%s1570 + $0x1f8] sm:$0xff]
    %s1635 = scalar_lea.vmem [#allocation11], 32
    %v1636 = vld [vmem:[%s1635] sm:$0xff]
    %v1637 = vld [vmem:[%s1635 + $0x8] sm:$0xff]
    %v1638 = vld [vmem:[%s1635 + $0x10] sm:$0xff]
    %v1639 = vld [vmem:[%s1635 + $0x18] sm:$0xff]
    %s1640 = scalar_lea.vmem [#allocation13], 1
    %v1641 = vld [vmem:[%s1640] sm:$0x1]
    %1642 = vmatprep.subr.mxu0 0.0
    %1643 = vmatpush1.msra.mxu0 0.0
    %1644 = vmatprep.subr.mxu0 0.0
    %1645 = vmatpush1.msra.mxu0 0.0
    %1646 = vmatprep.subr.mxu0 0.0
    %1647 = vmatpush1.msra.mxu0 0.0
    %1648 = vmatprep.subr.mxu0 0.0
    %1649 = vmatpush1.msra.mxu0 0.0
    %1650 = vmatprep.subr.mxu0 0.0
    %1651 = vmatpush1.msra.mxu0 0.0
    %1652 = vmatprep.subr.mxu0 0.0
    %1653 = vmatpush1.msra.mxu0 0.0
    %1654 = vmatprep.subr.mxu0 0.0
    %1655 = vmatpush1.msra.mxu0 0.0
    %1656 = vmatprep.subr.mxu0 0.0
    %1657 = vmatpush1.msra.mxu0 0.0
    %1658 = vmatprep.subr.mxu0 0.0
    %1659 = vmatpush1.msra.mxu0 0.0
    %1660 = vmatprep.subr.mxu0 0.0
    %1661 = vmatpush1.msra.mxu0 0.0
    %1662 = vmatprep.subr.mxu0 0.0
    %1663 = vmatpush1.msra.mxu0 0.0
    %1664 = vmatprep.subr.mxu0 0.0
    %1665 = vmatpush1.msra.mxu0 0.0
    %1666 = vmatprep.subr.mxu0 0.0
    %1667 = vmatpush1.msra.mxu0 0.0
    %1668 = vmatprep.subr.mxu0 0.0
    %1669 = vmatpush1.msra.mxu0 0.0
    %1670 = vmatprep.subr.mxu0 0.0
    %1671 = vmatpush1.msra.mxu0 %v1567
    %1672 = vmatprep.subr.mxu0 0.0
    %1673 = vmatpush1.msra.mxu0 %v1566
    %1674 = vmatprep.subr.mxu0 0.0
    %1675 = vmatpush2.msra.mxu0 0.0
    %1676 = vmatprep.subr.mxu0 0.0
    %1677 = vmatpush2.msra.mxu0 0.0
    %1678 = vmatprep.subr.mxu0 0.0
    %1679 = vmatpush2.msra.mxu0 0.0
    %1680 = vmatprep.subr.mxu0 0.0
    %1681 = vmatpush2.msra.mxu0 0.0
    %1682 = vmatprep.subr.mxu0 0.0
    %1683 = vmatpush2.msra.mxu0 0.0
    %1684 = vmatprep.subr.mxu0 0.0
    %1685 = vmatpush2.msra.mxu0 0.0
    %1686 = vmatprep.subr.mxu0 0.0
    %1687 = vmatpush2.msra.mxu0 0.0
    %1688 = vmatprep.subr.mxu0 0.0
    %1689 = vmatpush2.msra.mxu0 0.0
    %1690 = vmatprep.subr.mxu0 0.0
    %1691 = vmatpush2.msra.mxu0 0.0
    %1692 = vmatprep.subr.mxu0 0.0
    %1693 = vmatpush2.msra.mxu0 0.0
    %1694 = vmatprep.subr.mxu0 0.0
    %1695 = vmatpush2.msra.mxu0 0.0
    %1696 = vmatprep.subr.mxu0 0.0
    %1697 = vmatpush2.msra.mxu0 0.0
    %1698 = vmatprep.subr.mxu0 0.0
    %1699 = vmatpush2.msra.mxu0 0.0
    %1700 = vmatprep.subr.mxu0 0.0
    %1701 = vmatpush2.msra.mxu0 0.0
    %1702 = vmatprep.subr.mxu0 0.0
    %1703 = vmatpush2.msra.mxu0 0.0
    %1704 = vmatprep.subr.mxu0 0.0
    %1705 = vmatpush2.msra.mxu0 0.0
    %1706 = vmatprep.mubr.f32.mxu0 0.0
    %1707 = vmatmul.mubr.f32.gmra.mxu0 %v299
    %v1708 = vpop.f32.mrf.mxu0
    %v1709 = vadd.f32 0.0, %v1708
    %v1710 = vpop.f32.mrf.mxu0
    %1711 = vmatprep.mubr.f32.mxu0 0.0
    %1712 = vmatmul.mubr.f32.gmra.mxu0 %v302
    %v1713 = vpop.f32.mrf.mxu0
    %v1714 = vadd.f32 0.0, %v1713
    %v1715 = vpop.f32.mrf.mxu0
    %1716 = vdwg.mxu0
    %1718 = vrot.lane.b32.xlu0 %v1714, 32
    %v1719 = vpop.permute.xlu0 %1718
    %v1721 = vsel %vm383, %v1709, %v1719
    %v1723 = vcombine.high %v1721, %v1721
    %v1725 = vunpack.c.l.s4 1966171168
    %v1726 = vunpack.c.0.s8 %v1725
    %v1727 = vlaneseq
    %v1728 = vshrl.u32 %v1727, 7
    %v1729 = vsub.s32 %v1726, %v1728
    %v1730 = vrot.slane %v1721, %v1729
    %v1732 = vunpack.c.l.s4 1966171168
    %v1733 = vunpack.c.0.s8 %v1732
    %v1734 = vlaneseq
    %v1735 = vshrl.u32 %v1734, 7
    %v1736 = vsub.s32 %v1733, %v1735
    %v1737 = vrot.slane %v1723, %v1736
    %v1738 = vcombine.high %v1730, %v1730
    %v1739 = vcombine.high %v1737, %v1737
    %v1741 = vunpack.c.l.s4 1966171168
    %v1742 = vunpack.c.0.s8 %v1741
    %v1743 = vlaneseq
    %v1744 = vshrl.u32 %v1743, 7
    %v1745 = vsub.s32 %v1742, %v1744
    %v1746 = vrot.slane %v1730, %v1745
    %v1748 = vunpack.c.l.s4 1966171168
    %v1749 = vunpack.c.0.s8 %v1748
    %v1750 = vlaneseq
    %v1751 = vshrl.u32 %v1750, 7
    %v1752 = vsub.s32 %v1749, %v1751
    %v1753 = vrot.slane %v1737, %v1752
    %v1755 = vunpack.c.l.s4 1966171168
    %v1756 = vunpack.c.0.s8 %v1755
    %v1757 = vlaneseq
    %v1758 = vshrl.u32 %v1757, 7
    %v1759 = vsub.s32 %v1756, %v1758
    %v1760 = vrot.slane %v1738, %v1759
    %v1762 = vunpack.c.l.s4 1966171168
    %v1763 = vunpack.c.0.s8 %v1762
    %v1764 = vlaneseq
    %v1765 = vshrl.u32 %v1764, 7
    %v1766 = vsub.s32 %v1763, %v1765
    %v1767 = vrot.slane %v1739, %v1766
    %v1768 = vcombine.high %v1746, %v1746
    %v1769 = vcombine.high %v1753, %v1753
    %v1770 = vcombine.high %v1760, %v1760
    %v1771 = vcombine.high %v1767, %v1767
    %1780 = vst.msk [vmem:[#allocation2] sm:$0x1] %vm443, %v1746
    %1781 = vst.msk [vmem:[#allocation2 + $0x2] sm:$0x1] %vm443, %v1760
    %1782 = vst.msk [vmem:[#allocation2 + $0x4] sm:$0x1] %vm443, %v1768
    %1783 = vst.msk [vmem:[#allocation2 + $0x6] sm:$0x1] %vm443, %v1770
    %1784 = vst.msk [vmem:[#allocation2 + $0x8] sm:$0x1] %vm443, %v1753
    %1785 = vst.msk [vmem:[#allocation2 + $0xa] sm:$0x1] %vm443, %v1767
    %1786 = vst.msk [vmem:[#allocation2 + $0xc] sm:$0x1] %vm443, %v1769
    %1787 = vst.msk [vmem:[#allocation2 + $0xe] sm:$0x1] %vm443, %v1771
    %1788 = vmatprep.subr.mxu0 0.0
    %1789 = vmatpush1.msra.mxu0 0.0
    %1790 = vmatprep.subr.mxu0 0.0
    %1791 = vmatpush1.msra.mxu0 0.0
    %1792 = vmatprep.subr.mxu0 0.0
    %1793 = vmatpush1.msra.mxu0 0.0
    %1794 = vmatprep.subr.mxu0 0.0
    %1795 = vmatpush1.msra.mxu0 0.0
    %1796 = vmatprep.subr.mxu0 0.0
    %1797 = vmatpush1.msra.mxu0 0.0
    %1798 = vmatprep.subr.mxu0 0.0
    %1799 = vmatpush1.msra.mxu0 0.0
    %1800 = vmatprep.subr.mxu0 0.0
    %1801 = vmatpush1.msra.mxu0 0.0
    %1802 = vmatprep.subr.mxu0 0.0
    %1803 = vmatpush1.msra.mxu0 0.0
    %1804 = vmatprep.subr.mxu0 0.0
    %1805 = vmatpush1.msra.mxu0 0.0
    %1806 = vmatprep.subr.mxu0 0.0
    %1807 = vmatpush1.msra.mxu0 0.0
    %1808 = vmatprep.subr.mxu0 0.0
    %1809 = vmatpush1.msra.mxu0 0.0
    %1810 = vmatprep.subr.mxu0 0.0
    %1811 = vmatpush1.msra.mxu0 0.0
    %1812 = vmatprep.subr.mxu0 0.0
    %1813 = vmatpush1.msra.mxu0 0.0
    %1814 = vmatprep.subr.mxu0 0.0
    %1815 = vmatpush1.msra.mxu0 0.0
    %1816 = vmatprep.subr.mxu0 0.0
    %1817 = vmatpush1.msra.mxu0 %v1569
    %1818 = vmatprep.subr.mxu0 0.0
    %1819 = vmatpush1.msra.mxu0 %v1568
    %1820 = vmatprep.subr.mxu0 0.0
    %1821 = vmatpush2.msra.mxu0 0.0
    %1822 = vmatprep.subr.mxu0 0.0
    %1823 = vmatpush2.msra.mxu0 0.0
    %1824 = vmatprep.subr.mxu0 0.0
    %1825 = vmatpush2.msra.mxu0 0.0
    %1826 = vmatprep.subr.mxu0 0.0
    %1827 = vmatpush2.msra.mxu0 0.0
    %1828 = vmatprep.subr.mxu0 0.0
    %1829 = vmatpush2.msra.mxu0 0.0
    %1830 = vmatprep.subr.mxu0 0.0
    %1831 = vmatpush2.msra.mxu0 0.0
    %1832 = vmatprep.subr.mxu0 0.0
    %1833 = vmatpush2.msra.mxu0 0.0
    %1834 = vmatprep.subr.mxu0 0.0
    %1835 = vmatpush2.msra.mxu0 0.0
    %1836 = vmatprep.subr.mxu0 0.0
    %1837 = vmatpush2.msra.mxu0 0.0
    %1838 = vmatprep.subr.mxu0 0.0
    %1839 = vmatpush2.msra.mxu0 0.0
    %1840 = vmatprep.subr.mxu0 0.0
    %1841 = vmatpush2.msra.mxu0 0.0
    %1842 = vmatprep.subr.mxu0 0.0
    %1843 = vmatpush2.msra.mxu0 0.0
    %1844 = vmatprep.subr.mxu0 0.0
    %1845 = vmatpush2.msra.mxu0 0.0
    %1846 = vmatprep.subr.mxu0 0.0
    %1847 = vmatpush2.msra.mxu0 0.0
    %1848 = vmatprep.subr.mxu0 0.0
    %1849 = vmatpush2.msra.mxu0 0.0
    %1850 = vmatprep.subr.mxu0 0.0
    %1851 = vmatpush2.msra.mxu0 0.0
    %1852 = vmatprep.mubr.f32.mxu0 0.0
    %1853 = vmatmul.mubr.f32.gmra.mxu0 %v299
    %v1854 = vpop.f32.mrf.mxu0
    %v1855 = vadd.f32 0.0, %v1854
    %v1856 = vpop.f32.mrf.mxu0
    %1857 = vmatprep.mubr.f32.mxu0 0.0
    %1858 = vmatmul.mubr.f32.gmra.mxu0 %v302
    %v1859 = vpop.f32.mrf.mxu0
    %v1860 = vadd.f32 0.0, %v1859
    %v1861 = vpop.f32.mrf.mxu0
    %1862 = vdwg.mxu0
    %1864 = vrot.lane.b32.xlu0 %v1860, 32
    %v1865 = vpop.permute.xlu0 %1864
    %v1867 = vsel %vm383, %v1855, %v1865
    %v1869 = vcombine.high %v1867, %v1867
    %v1871 = vunpack.c.l.s4 1966171168
    %v1872 = vunpack.c.0.s8 %v1871
    %v1873 = vlaneseq
    %v1874 = vshrl.u32 %v1873, 7
    %v1875 = vsub.s32 %v1872, %v1874
    %v1876 = vrot.slane %v1867, %v1875
    %v1878 = vunpack.c.l.s4 1966171168
    %v1879 = vunpack.c.0.s8 %v1878
    %v1880 = vlaneseq
    %v1881 = vshrl.u32 %v1880, 7
    %v1882 = vsub.s32 %v1879, %v1881
    %v1883 = vrot.slane %v1869, %v1882
    %v1884 = vcombine.high %v1876, %v1876
    %v1885 = vcombine.high %v1883, %v1883
    %v1887 = vunpack.c.l.s4 1966171168
    %v1888 = vunpack.c.0.s8 %v1887
    %v1889 = vlaneseq
    %v1890 = vshrl.u32 %v1889, 7
    %v1891 = vsub.s32 %v1888, %v1890
    %v1892 = vrot.slane %v1876, %v1891
    %v1894 = vunpack.c.l.s4 1966171168
    %v1895 = vunpack.c.0.s8 %v1894
    %v1896 = vlaneseq
    %v1897 = vshrl.u32 %v1896, 7
    %v1898 = vsub.s32 %v1895, %v1897
    %v1899 = vrot.slane %v1883, %v1898
    %v1901 = vunpack.c.l.s4 1966171168
    %v1902 = vunpack.c.0.s8 %v1901
    %v1903 = vlaneseq
    %v1904 = vshrl.u32 %v1903, 7
    %v1905 = vsub.s32 %v1902, %v1904
    %v1906 = vrot.slane %v1884, %v1905
    %v1908 = vunpack.c.l.s4 1966171168
    %v1909 = vunpack.c.0.s8 %v1908
    %v1910 = vlaneseq
    %v1911 = vshrl.u32 %v1910, 7
    %v1912 = vsub.s32 %v1909, %v1911
    %v1913 = vrot.slane %v1885, %v1912
    %v1914 = vcombine.high %v1892, %v1892
    %v1915 = vcombine.high %v1899, %v1899
    %v1916 = vcombine.high %v1906, %v1906
    %v1917 = vcombine.high %v1913, %v1913
    %1926 = vst.msk [vmem:[#allocation2 + $0x1] sm:$0x1] %vm443, %v1892
    %1927 = vst.msk [vmem:[#allocation2 + $0x3] sm:$0x1] %vm443, %v1906
    %1928 = vst.msk [vmem:[#allocation2 + $0x5] sm:$0x1] %vm443, %v1914
    %1929 = vst.msk [vmem:[#allocation2 + $0x7] sm:$0x1] %vm443, %v1916
    %1930 = vst.msk [vmem:[#allocation2 + $0x9] sm:$0x1] %vm443, %v1899
    %1931 = vst.msk [vmem:[#allocation2 + $0xb] sm:$0x1] %vm443, %v1913
    %1932 = vst.msk [vmem:[#allocation2 + $0xd] sm:$0x1] %vm443, %v1915
    %1933 = vst.msk [vmem:[#allocation2 + $0xf] sm:$0x1] %vm443, %v1917
    %v1934 = vld [vmem:[#allocation2] sm:$0x3]
    %v1935 = vld [vmem:[#allocation2 + $0x2] sm:$0x3]
    %v1936 = vld [vmem:[#allocation2 + $0x4] sm:$0x3]
    %v1937 = vld [vmem:[#allocation2 + $0x6] sm:$0x3]
    %v1938 = vld [vmem:[#allocation2 + $0x8] sm:$0x3]
    %v1939 = vld [vmem:[#allocation2 + $0xa] sm:$0x3]
    %v1940 = vld [vmem:[#allocation2 + $0xc] sm:$0x3]
    %v1941 = vld [vmem:[#allocation2 + $0xe] sm:$0x3]
    %v1943 = vsel %vm606, %v1934, 0
    %1945 = vmatprep.subr.mxu0 0.0
    %1946 = vmatpush1.msra.mxu0 0.0
    %1947 = vmatprep.subr.mxu0 0.0
    %1948 = vmatpush1.msra.mxu0 0.0
    %1949 = vmatprep.subr.mxu0 0.0
    %1950 = vmatpush1.msra.mxu0 0.0
    %1951 = vmatprep.subr.mxu0 0.0
    %1952 = vmatpush1.msra.mxu0 0.0
    %1953 = vmatprep.subr.mxu0 0.0
    %1954 = vmatpush1.msra.mxu0 0.0
    %1955 = vmatprep.subr.mxu0 0.0
    %1956 = vmatpush1.msra.mxu0 0.0
    %1957 = vmatprep.subr.mxu0 0.0
    %1958 = vmatpush1.msra.mxu0 0.0
    %1959 = vmatprep.subr.mxu0 0.0
    %1960 = vmatpush1.msra.mxu0 0.0
    %1961 = vmatprep.subr.mxu0 0.0
    %1962 = vmatpush1.msra.mxu0 %v1578
    %1963 = vmatprep.subr.mxu0 0.0
    %1964 = vmatpush1.msra.mxu0 %v1577
    %1965 = vmatprep.subr.mxu0 0.0
    %1966 = vmatpush1.msra.mxu0 %v1576
    %1967 = vmatprep.subr.mxu0 0.0
    %1968 = vmatpush1.msra.mxu0 %v1575
    %1969 = vmatprep.subr.mxu0 0.0
    %1970 = vmatpush1.msra.mxu0 %v1574
    %1971 = vmatprep.subr.mxu0 0.0
    %1972 = vmatpush1.msra.mxu0 %v1573
    %1973 = vmatprep.subr.mxu0 0.0
    %1974 = vmatpush1.msra.mxu0 %v1572
    %1975 = vmatprep.subr.mxu0 0.0
    %1976 = vmatpush1.msra.mxu0 %v1571
    %1977 = vmatprep.subr.mxu0 0.0
    %1978 = vmatpush2.msra.mxu0 0.0
    %1979 = vmatprep.subr.mxu0 0.0
    %1980 = vmatpush2.msra.mxu0 0.0
    %1981 = vmatprep.subr.mxu0 0.0
    %1982 = vmatpush2.msra.mxu0 0.0
    %1983 = vmatprep.subr.mxu0 0.0
    %1984 = vmatpush2.msra.mxu0 0.0
    %1985 = vmatprep.subr.mxu0 0.0
    %1986 = vmatpush2.msra.mxu0 0.0
    %1987 = vmatprep.subr.mxu0 0.0
    %1988 = vmatpush2.msra.mxu0 0.0
    %1989 = vmatprep.subr.mxu0 0.0
    %1990 = vmatpush2.msra.mxu0 0.0
    %1991 = vmatprep.subr.mxu0 0.0
    %1992 = vmatpush2.msra.mxu0 0.0
    %1993 = vmatprep.subr.mxu0 0.0
    %1994 = vmatpush2.msra.mxu0 0.0
    %1995 = vmatprep.subr.mxu0 0.0
    %1996 = vmatpush2.msra.mxu0 0.0
    %1997 = vmatprep.subr.mxu0 0.0
    %1998 = vmatpush2.msra.mxu0 0.0
    %1999 = vmatprep.subr.mxu0 0.0
    %2000 = vmatpush2.msra.mxu0 0.0
    %2001 = vmatprep.subr.mxu0 0.0
    %2002 = vmatpush2.msra.mxu0 0.0
    %2003 = vmatprep.subr.mxu0 0.0
    %2004 = vmatpush2.msra.mxu0 0.0
    %2005 = vmatprep.subr.mxu0 0.0
    %2006 = vmatpush2.msra.mxu0 0.0
    %2007 = vmatprep.subr.mxu0 0.0
    %2008 = vmatpush2.msra.mxu0 0.0
    %2009 = vmatprep.mubr.f32.mxu0 0.0
    %2010 = vmatmul.mubr.f32.gmra.mxu0 %v1943
    %v2011 = vpop.f32.mrf.mxu0
    %v2012 = vadd.f32 0.0, %v2011
    %v2013 = vpop.f32.mrf.mxu0
    %2014 = vdwg.mxu0
    %v2016 = vsel %vm606, %v1935, 0
    %2018 = vmatprep.subr.mxu0 0.0
    %2019 = vmatpush1.msra.mxu0 0.0
    %2020 = vmatprep.subr.mxu0 0.0
    %2021 = vmatpush1.msra.mxu0 0.0
    %2022 = vmatprep.subr.mxu0 0.0
    %2023 = vmatpush1.msra.mxu0 0.0
    %2024 = vmatprep.subr.mxu0 0.0
    %2025 = vmatpush1.msra.mxu0 0.0
    %2026 = vmatprep.subr.mxu0 0.0
    %2027 = vmatpush1.msra.mxu0 0.0
    %2028 = vmatprep.subr.mxu0 0.0
    %2029 = vmatpush1.msra.mxu0 0.0
    %2030 = vmatprep.subr.mxu0 0.0
    %2031 = vmatpush1.msra.mxu0 0.0
    %2032 = vmatprep.subr.mxu0 0.0
    %2033 = vmatpush1.msra.mxu0 0.0
    %2034 = vmatprep.subr.mxu0 0.0
    %2035 = vmatpush1.msra.mxu0 %v1586
    %2036 = vmatprep.subr.mxu0 0.0
    %2037 = vmatpush1.msra.mxu0 %v1585
    %2038 = vmatprep.subr.mxu0 0.0
    %2039 = vmatpush1.msra.mxu0 %v1584
    %2040 = vmatprep.subr.mxu0 0.0
    %2041 = vmatpush1.msra.mxu0 %v1583
    %2042 = vmatprep.subr.mxu0 0.0
    %2043 = vmatpush1.msra.mxu0 %v1582
    %2044 = vmatprep.subr.mxu0 0.0
    %2045 = vmatpush1.msra.mxu0 %v1581
    %2046 = vmatprep.subr.mxu0 0.0
    %2047 = vmatpush1.msra.mxu0 %v1580
    %2048 = vmatprep.subr.mxu0 0.0
    %2049 = vmatpush1.msra.mxu0 %v1579
    %2050 = vmatprep.subr.mxu0 0.0
    %2051 = vmatpush2.msra.mxu0 0.0
    %2052 = vmatprep.subr.mxu0 0.0
    %2053 = vmatpush2.msra.mxu0 0.0
    %2054 = vmatprep.subr.mxu0 0.0
    %2055 = vmatpush2.msra.mxu0 0.0
    %2056 = vmatprep.subr.mxu0 0.0
    %2057 = vmatpush2.msra.mxu0 0.0
    %2058 = vmatprep.subr.mxu0 0.0
    %2059 = vmatpush2.msra.mxu0 0.0
    %2060 = vmatprep.subr.mxu0 0.0
    %2061 = vmatpush2.msra.mxu0 0.0
    %2062 = vmatprep.subr.mxu0 0.0
    %2063 = vmatpush2.msra.mxu0 0.0
    %2064 = vmatprep.subr.mxu0 0.0
    %2065 = vmatpush2.msra.mxu0 0.0
    %2066 = vmatprep.subr.mxu0 0.0
    %2067 = vmatpush2.msra.mxu0 0.0
    %2068 = vmatprep.subr.mxu0 0.0
    %2069 = vmatpush2.msra.mxu0 0.0
    %2070 = vmatprep.subr.mxu0 0.0
    %2071 = vmatpush2.msra.mxu0 0.0
    %2072 = vmatprep.subr.mxu0 0.0
    %2073 = vmatpush2.msra.mxu0 0.0
    %2074 = vmatprep.subr.mxu0 0.0
    %2075 = vmatpush2.msra.mxu0 0.0
    %2076 = vmatprep.subr.mxu0 0.0
    %2077 = vmatpush2.msra.mxu0 0.0
    %2078 = vmatprep.subr.mxu0 0.0
    %2079 = vmatpush2.msra.mxu0 0.0
    %2080 = vmatprep.subr.mxu0 0.0
    %2081 = vmatpush2.msra.mxu0 0.0
    %2082 = vmatprep.mubr.f32.mxu0 0.0
    %2083 = vmatmul.mubr.f32.gmra.mxu0 %v2016
    %v2084 = vpop.f32.mrf.mxu0
    %v2085 = vadd.f32 0.0, %v2084
    %v2086 = vpop.f32.mrf.mxu0
    %2087 = vdwg.mxu0
    %v2089 = vsel %vm606, %v1936, 0
    %2091 = vmatprep.subr.mxu0 0.0
    %2092 = vmatpush1.msra.mxu0 0.0
    %2093 = vmatprep.subr.mxu0 0.0
    %2094 = vmatpush1.msra.mxu0 0.0
    %2095 = vmatprep.subr.mxu0 0.0
    %2096 = vmatpush1.msra.mxu0 0.0
    %2097 = vmatprep.subr.mxu0 0.0
    %2098 = vmatpush1.msra.mxu0 0.0
    %2099 = vmatprep.subr.mxu0 0.0
    %2100 = vmatpush1.msra.mxu0 0.0
    %2101 = vmatprep.subr.mxu0 0.0
    %2102 = vmatpush1.msra.mxu0 0.0
    %2103 = vmatprep.subr.mxu0 0.0
    %2104 = vmatpush1.msra.mxu0 0.0
    %2105 = vmatprep.subr.mxu0 0.0
    %2106 = vmatpush1.msra.mxu0 0.0
    %2107 = vmatprep.subr.mxu0 0.0
    %2108 = vmatpush1.msra.mxu0 %v1594
    %2109 = vmatprep.subr.mxu0 0.0
    %2110 = vmatpush1.msra.mxu0 %v1593
    %2111 = vmatprep.subr.mxu0 0.0
    %2112 = vmatpush1.msra.mxu0 %v1592
    %2113 = vmatprep.subr.mxu0 0.0
    %2114 = vmatpush1.msra.mxu0 %v1591
    %2115 = vmatprep.subr.mxu0 0.0
    %2116 = vmatpush1.msra.mxu0 %v1590
    %2117 = vmatprep.subr.mxu0 0.0
    %2118 = vmatpush1.msra.mxu0 %v1589
    %2119 = vmatprep.subr.mxu0 0.0
    %2120 = vmatpush1.msra.mxu0 %v1588
    %2121 = vmatprep.subr.mxu0 0.0
    %2122 = vmatpush1.msra.mxu0 %v1587
    %2123 = vmatprep.subr.mxu0 0.0
    %2124 = vmatpush2.msra.mxu0 0.0
    %2125 = vmatprep.subr.mxu0 0.0
    %2126 = vmatpush2.msra.mxu0 0.0
    %2127 = vmatprep.subr.mxu0 0.0
    %2128 = vmatpush2.msra.mxu0 0.0
    %2129 = vmatprep.subr.mxu0 0.0
    %2130 = vmatpush2.msra.mxu0 0.0
    %2131 = vmatprep.subr.mxu0 0.0
    %2132 = vmatpush2.msra.mxu0 0.0
    %2133 = vmatprep.subr.mxu0 0.0
    %2134 = vmatpush2.msra.mxu0 0.0
    %2135 = vmatprep.subr.mxu0 0.0
    %2136 = vmatpush2.msra.mxu0 0.0
    %2137 = vmatprep.subr.mxu0 0.0
    %2138 = vmatpush2.msra.mxu0 0.0
    %2139 = vmatprep.subr.mxu0 0.0
    %2140 = vmatpush2.msra.mxu0 0.0
    %2141 = vmatprep.subr.mxu0 0.0
    %2142 = vmatpush2.msra.mxu0 0.0
    %2143 = vmatprep.subr.mxu0 0.0
    %2144 = vmatpush2.msra.mxu0 0.0
    %2145 = vmatprep.subr.mxu0 0.0
    %2146 = vmatpush2.msra.mxu0 0.0
    %2147 = vmatprep.subr.mxu0 0.0
    %2148 = vmatpush2.msra.mxu0 0.0
    %2149 = vmatprep.subr.mxu0 0.0
    %2150 = vmatpush2.msra.mxu0 0.0
    %2151 = vmatprep.subr.mxu0 0.0
    %2152 = vmatpush2.msra.mxu0 0.0
    %2153 = vmatprep.subr.mxu0 0.0
    %2154 = vmatpush2.msra.mxu0 0.0
    %2155 = vmatprep.mubr.f32.mxu0 0.0
    %2156 = vmatmul.mubr.f32.gmra.mxu0 %v2089
    %v2157 = vpop.f32.mrf.mxu0
    %v2158 = vadd.f32 0.0, %v2157
    %v2159 = vpop.f32.mrf.mxu0
    %2160 = vdwg.mxu0
    %v2162 = vsel %vm606, %v1937, 0
    %2164 = vmatprep.subr.mxu0 0.0
    %2165 = vmatpush1.msra.mxu0 0.0
    %2166 = vmatprep.subr.mxu0 0.0
    %2167 = vmatpush1.msra.mxu0 0.0
    %2168 = vmatprep.subr.mxu0 0.0
    %2169 = vmatpush1.msra.mxu0 0.0
    %2170 = vmatprep.subr.mxu0 0.0
    %2171 = vmatpush1.msra.mxu0 0.0
    %2172 = vmatprep.subr.mxu0 0.0
    %2173 = vmatpush1.msra.mxu0 0.0
    %2174 = vmatprep.subr.mxu0 0.0
    %2175 = vmatpush1.msra.mxu0 0.0
    %2176 = vmatprep.subr.mxu0 0.0
    %2177 = vmatpush1.msra.mxu0 0.0
    %2178 = vmatprep.subr.mxu0 0.0
    %2179 = vmatpush1.msra.mxu0 0.0
    %2180 = vmatprep.subr.mxu0 0.0
    %2181 = vmatpush1.msra.mxu0 %v1602
    %2182 = vmatprep.subr.mxu0 0.0
    %2183 = vmatpush1.msra.mxu0 %v1601
    %2184 = vmatprep.subr.mxu0 0.0
    %2185 = vmatpush1.msra.mxu0 %v1600
    %2186 = vmatprep.subr.mxu0 0.0
    %2187 = vmatpush1.msra.mxu0 %v1599
    %2188 = vmatprep.subr.mxu0 0.0
    %2189 = vmatpush1.msra.mxu0 %v1598
    %2190 = vmatprep.subr.mxu0 0.0
    %2191 = vmatpush1.msra.mxu0 %v1597
    %2192 = vmatprep.subr.mxu0 0.0
    %2193 = vmatpush1.msra.mxu0 %v1596
    %2194 = vmatprep.subr.mxu0 0.0
    %2195 = vmatpush1.msra.mxu0 %v1595
    %2196 = vmatprep.subr.mxu0 0.0
    %2197 = vmatpush2.msra.mxu0 0.0
    %2198 = vmatprep.subr.mxu0 0.0
    %2199 = vmatpush2.msra.mxu0 0.0
    %2200 = vmatprep.subr.mxu0 0.0
    %2201 = vmatpush2.msra.mxu0 0.0
    %2202 = vmatprep.subr.mxu0 0.0
    %2203 = vmatpush2.msra.mxu0 0.0
    %2204 = vmatprep.subr.mxu0 0.0
    %2205 = vmatpush2.msra.mxu0 0.0
    %2206 = vmatprep.subr.mxu0 0.0
    %2207 = vmatpush2.msra.mxu0 0.0
    %2208 = vmatprep.subr.mxu0 0.0
    %2209 = vmatpush2.msra.mxu0 0.0
    %2210 = vmatprep.subr.mxu0 0.0
    %2211 = vmatpush2.msra.mxu0 0.0
    %2212 = vmatprep.subr.mxu0 0.0
    %2213 = vmatpush2.msra.mxu0 0.0
    %2214 = vmatprep.subr.mxu0 0.0
    %2215 = vmatpush2.msra.mxu0 0.0
    %2216 = vmatprep.subr.mxu0 0.0
    %2217 = vmatpush2.msra.mxu0 0.0
    %2218 = vmatprep.subr.mxu0 0.0
    %2219 = vmatpush2.msra.mxu0 0.0
    %2220 = vmatprep.subr.mxu0 0.0
    %2221 = vmatpush2.msra.mxu0 0.0
    %2222 = vmatprep.subr.mxu0 0.0
    %2223 = vmatpush2.msra.mxu0 0.0
    %2224 = vmatprep.subr.mxu0 0.0
    %2225 = vmatpush2.msra.mxu0 0.0
    %2226 = vmatprep.subr.mxu0 0.0
    %2227 = vmatpush2.msra.mxu0 0.0
    %2228 = vmatprep.mubr.f32.mxu0 0.0
    %2229 = vmatmul.mubr.f32.gmra.mxu0 %v2162
    %v2230 = vpop.f32.mrf.mxu0
    %v2231 = vadd.f32 0.0, %v2230
    %v2232 = vpop.f32.mrf.mxu0
    %2233 = vdwg.mxu0
    %v2235 = vsel %vm606, %v1938, 0
    %2237 = vmatprep.subr.mxu0 0.0
    %2238 = vmatpush1.msra.mxu0 0.0
    %2239 = vmatprep.subr.mxu0 0.0
    %2240 = vmatpush1.msra.mxu0 0.0
    %2241 = vmatprep.subr.mxu0 0.0
    %2242 = vmatpush1.msra.mxu0 0.0
    %2243 = vmatprep.subr.mxu0 0.0
    %2244 = vmatpush1.msra.mxu0 0.0
    %2245 = vmatprep.subr.mxu0 0.0
    %2246 = vmatpush1.msra.mxu0 0.0
    %2247 = vmatprep.subr.mxu0 0.0
    %2248 = vmatpush1.msra.mxu0 0.0
    %2249 = vmatprep.subr.mxu0 0.0
    %2250 = vmatpush1.msra.mxu0 0.0
    %2251 = vmatprep.subr.mxu0 0.0
    %2252 = vmatpush1.msra.mxu0 0.0
    %2253 = vmatprep.subr.mxu0 0.0
    %2254 = vmatpush1.msra.mxu0 %v1610
    %2255 = vmatprep.subr.mxu0 0.0
    %2256 = vmatpush1.msra.mxu0 %v1609
    %2257 = vmatprep.subr.mxu0 0.0
    %2258 = vmatpush1.msra.mxu0 %v1608
    %2259 = vmatprep.subr.mxu0 0.0
    %2260 = vmatpush1.msra.mxu0 %v1607
    %2261 = vmatprep.subr.mxu0 0.0
    %2262 = vmatpush1.msra.mxu0 %v1606
    %2263 = vmatprep.subr.mxu0 0.0
    %2264 = vmatpush1.msra.mxu0 %v1605
    %2265 = vmatprep.subr.mxu0 0.0
    %2266 = vmatpush1.msra.mxu0 %v1604
    %2267 = vmatprep.subr.mxu0 0.0
    %2268 = vmatpush1.msra.mxu0 %v1603
    %2269 = vmatprep.subr.mxu0 0.0
    %2270 = vmatpush2.msra.mxu0 0.0
    %2271 = vmatprep.subr.mxu0 0.0
    %2272 = vmatpush2.msra.mxu0 0.0
    %2273 = vmatprep.subr.mxu0 0.0
    %2274 = vmatpush2.msra.mxu0 0.0
    %2275 = vmatprep.subr.mxu0 0.0
    %2276 = vmatpush2.msra.mxu0 0.0
    %2277 = vmatprep.subr.mxu0 0.0
    %2278 = vmatpush2.msra.mxu0 0.0
    %2279 = vmatprep.subr.mxu0 0.0
    %2280 = vmatpush2.msra.mxu0 0.0
    %2281 = vmatprep.subr.mxu0 0.0
    %2282 = vmatpush2.msra.mxu0 0.0
    %2283 = vmatprep.subr.mxu0 0.0
    %2284 = vmatpush2.msra.mxu0 0.0
    %2285 = vmatprep.subr.mxu0 0.0
    %2286 = vmatpush2.msra.mxu0 0.0
    %2287 = vmatprep.subr.mxu0 0.0
    %2288 = vmatpush2.msra.mxu0 0.0
    %2289 = vmatprep.subr.mxu0 0.0
    %2290 = vmatpush2.msra.mxu0 0.0
    %2291 = vmatprep.subr.mxu0 0.0
    %2292 = vmatpush2.msra.mxu0 0.0
    %2293 = vmatprep.subr.mxu0 0.0
    %2294 = vmatpush2.msra.mxu0 0.0
    %2295 = vmatprep.subr.mxu0 0.0
    %2296 = vmatpush2.msra.mxu0 0.0
    %2297 = vmatprep.subr.mxu0 0.0
    %2298 = vmatpush2.msra.mxu0 0.0
    %2299 = vmatprep.subr.mxu0 0.0
    %2300 = vmatpush2.msra.mxu0 0.0
    %2301 = vmatprep.mubr.f32.mxu0 0.0
    %2302 = vmatmul.mubr.f32.gmra.mxu0 %v2235
    %v2303 = vpop.f32.mrf.mxu0
    %v2304 = vadd.f32 0.0, %v2303
    %v2305 = vpop.f32.mrf.mxu0
    %2306 = vdwg.mxu0
    %v2308 = vsel %vm606, %v1939, 0
    %2310 = vmatprep.subr.mxu0 0.0
    %2311 = vmatpush1.msra.mxu0 0.0
    %2312 = vmatprep.subr.mxu0 0.0
    %2313 = vmatpush1.msra.mxu0 0.0
    %2314 = vmatprep.subr.mxu0 0.0
    %2315 = vmatpush1.msra.mxu0 0.0
    %2316 = vmatprep.subr.mxu0 0.0
    %2317 = vmatpush1.msra.mxu0 0.0
    %2318 = vmatprep.subr.mxu0 0.0
    %2319 = vmatpush1.msra.mxu0 0.0
    %2320 = vmatprep.subr.mxu0 0.0
    %2321 = vmatpush1.msra.mxu0 0.0
    %2322 = vmatprep.subr.mxu0 0.0
    %2323 = vmatpush1.msra.mxu0 0.0
    %2324 = vmatprep.subr.mxu0 0.0
    %2325 = vmatpush1.msra.mxu0 0.0
    %2326 = vmatprep.subr.mxu0 0.0
    %2327 = vmatpush1.msra.mxu0 %v1618
    %2328 = vmatprep.subr.mxu0 0.0
    %2329 = vmatpush1.msra.mxu0 %v1617
    %2330 = vmatprep.subr.mxu0 0.0
    %2331 = vmatpush1.msra.mxu0 %v1616
    %2332 = vmatprep.subr.mxu0 0.0
    %2333 = vmatpush1.msra.mxu0 %v1615
    %2334 = vmatprep.subr.mxu0 0.0
    %2335 = vmatpush1.msra.mxu0 %v1614
    %2336 = vmatprep.subr.mxu0 0.0
    %2337 = vmatpush1.msra.mxu0 %v1613
    %2338 = vmatprep.subr.mxu0 0.0
    %2339 = vmatpush1.msra.mxu0 %v1612
    %2340 = vmatprep.subr.mxu0 0.0
    %2341 = vmatpush1.msra.mxu0 %v1611
    %2342 = vmatprep.subr.mxu0 0.0
    %2343 = vmatpush2.msra.mxu0 0.0
    %2344 = vmatprep.subr.mxu0 0.0
    %2345 = vmatpush2.msra.mxu0 0.0
    %2346 = vmatprep.subr.mxu0 0.0
    %2347 = vmatpush2.msra.mxu0 0.0
    %2348 = vmatprep.subr.mxu0 0.0
    %2349 = vmatpush2.msra.mxu0 0.0
    %2350 = vmatprep.subr.mxu0 0.0
    %2351 = vmatpush2.msra.mxu0 0.0
    %2352 = vmatprep.subr.mxu0 0.0
    %2353 = vmatpush2.msra.mxu0 0.0
    %2354 = vmatprep.subr.mxu0 0.0
    %2355 = vmatpush2.msra.mxu0 0.0
    %2356 = vmatprep.subr.mxu0 0.0
    %2357 = vmatpush2.msra.mxu0 0.0
    %2358 = vmatprep.subr.mxu0 0.0
    %2359 = vmatpush2.msra.mxu0 0.0
    %2360 = vmatprep.subr.mxu0 0.0
    %2361 = vmatpush2.msra.mxu0 0.0
    %2362 = vmatprep.subr.mxu0 0.0
    %2363 = vmatpush2.msra.mxu0 0.0
    %2364 = vmatprep.subr.mxu0 0.0
    %2365 = vmatpush2.msra.mxu0 0.0
    %2366 = vmatprep.subr.mxu0 0.0
    %2367 = vmatpush2.msra.mxu0 0.0
    %2368 = vmatprep.subr.mxu0 0.0
    %2369 = vmatpush2.msra.mxu0 0.0
    %2370 = vmatprep.subr.mxu0 0.0
    %2371 = vmatpush2.msra.mxu0 0.0
    %2372 = vmatprep.subr.mxu0 0.0
    %2373 = vmatpush2.msra.mxu0 0.0
    %2374 = vmatprep.mubr.f32.mxu0 0.0
    %2375 = vmatmul.mubr.f32.gmra.mxu0 %v2308
    %v2376 = vpop.f32.mrf.mxu0
    %v2377 = vadd.f32 0.0, %v2376
    %v2378 = vpop.f32.mrf.mxu0
    %2379 = vdwg.mxu0
    %v2381 = vsel %vm606, %v1940, 0
    %2383 = vmatprep.subr.mxu0 0.0
    %2384 = vmatpush1.msra.mxu0 0.0
    %2385 = vmatprep.subr.mxu0 0.0
    %2386 = vmatpush1.msra.mxu0 0.0
    %2387 = vmatprep.subr.mxu0 0.0
    %2388 = vmatpush1.msra.mxu0 0.0
    %2389 = vmatprep.subr.mxu0 0.0
    %2390 = vmatpush1.msra.mxu0 0.0
    %2391 = vmatprep.subr.mxu0 0.0
    %2392 = vmatpush1.msra.mxu0 0.0
    %2393 = vmatprep.subr.mxu0 0.0
    %2394 = vmatpush1.msra.mxu0 0.0
    %2395 = vmatprep.subr.mxu0 0.0
    %2396 = vmatpush1.msra.mxu0 0.0
    %2397 = vmatprep.subr.mxu0 0.0
    %2398 = vmatpush1.msra.mxu0 0.0
    %2399 = vmatprep.subr.mxu0 0.0
    %2400 = vmatpush1.msra.mxu0 %v1626
    %2401 = vmatprep.subr.mxu0 0.0
    %2402 = vmatpush1.msra.mxu0 %v1625
    %2403 = vmatprep.subr.mxu0 0.0
    %2404 = vmatpush1.msra.mxu0 %v1624
    %2405 = vmatprep.subr.mxu0 0.0
    %2406 = vmatpush1.msra.mxu0 %v1623
    %2407 = vmatprep.subr.mxu0 0.0
    %2408 = vmatpush1.msra.mxu0 %v1622
    %2409 = vmatprep.subr.mxu0 0.0
    %2410 = vmatpush1.msra.mxu0 %v1621
    %2411 = vmatprep.subr.mxu0 0.0
    %2412 = vmatpush1.msra.mxu0 %v1620
    %2413 = vmatprep.subr.mxu0 0.0
    %2414 = vmatpush1.msra.mxu0 %v1619
    %2415 = vmatprep.subr.mxu0 0.0
    %2416 = vmatpush2.msra.mxu0 0.0
    %2417 = vmatprep.subr.mxu0 0.0
    %2418 = vmatpush2.msra.mxu0 0.0
    %2419 = vmatprep.subr.mxu0 0.0
    %2420 = vmatpush2.msra.mxu0 0.0
    %2421 = vmatprep.subr.mxu0 0.0
    %2422 = vmatpush2.msra.mxu0 0.0
    %2423 = vmatprep.subr.mxu0 0.0
    %2424 = vmatpush2.msra.mxu0 0.0
    %2425 = vmatprep.subr.mxu0 0.0
    %2426 = vmatpush2.msra.mxu0 0.0
    %2427 = vmatprep.subr.mxu0 0.0
    %2428 = vmatpush2.msra.mxu0 0.0
    %2429 = vmatprep.subr.mxu0 0.0
    %2430 = vmatpush2.msra.mxu0 0.0
    %2431 = vmatprep.subr.mxu0 0.0
    %2432 = vmatpush2.msra.mxu0 0.0
    %2433 = vmatprep.subr.mxu0 0.0
    %2434 = vmatpush2.msra.mxu0 0.0
    %2435 = vmatprep.subr.mxu0 0.0
    %2436 = vmatpush2.msra.mxu0 0.0
    %2437 = vmatprep.subr.mxu0 0.0
    %2438 = vmatpush2.msra.mxu0 0.0
    %2439 = vmatprep.subr.mxu0 0.0
    %2440 = vmatpush2.msra.mxu0 0.0
    %2441 = vmatprep.subr.mxu0 0.0
    %2442 = vmatpush2.msra.mxu0 0.0
    %2443 = vmatprep.subr.mxu0 0.0
    %2444 = vmatpush2.msra.mxu0 0.0
    %2445 = vmatprep.subr.mxu0 0.0
    %2446 = vmatpush2.msra.mxu0 0.0
    %2447 = vmatprep.mubr.f32.mxu0 0.0
    %2448 = vmatmul.mubr.f32.gmra.mxu0 %v2381
    %v2449 = vpop.f32.mrf.mxu0
    %v2450 = vadd.f32 0.0, %v2449
    %v2451 = vpop.f32.mrf.mxu0
    %2452 = vdwg.mxu0
    %v2454 = vsel %vm606, %v1941, 0
    %2456 = vmatprep.subr.mxu0 0.0
    %2457 = vmatpush1.msra.mxu0 0.0
    %2458 = vmatprep.subr.mxu0 0.0
    %2459 = vmatpush1.msra.mxu0 0.0
    %2460 = vmatprep.subr.mxu0 0.0
    %2461 = vmatpush1.msra.mxu0 0.0
    %2462 = vmatprep.subr.mxu0 0.0
    %2463 = vmatpush1.msra.mxu0 0.0
    %2464 = vmatprep.subr.mxu0 0.0
    %2465 = vmatpush1.msra.mxu0 0.0
    %2466 = vmatprep.subr.mxu0 0.0
    %2467 = vmatpush1.msra.mxu0 0.0
    %2468 = vmatprep.subr.mxu0 0.0
    %2469 = vmatpush1.msra.mxu0 0.0
    %2470 = vmatprep.subr.mxu0 0.0
    %2471 = vmatpush1.msra.mxu0 0.0
    %2472 = vmatprep.subr.mxu0 0.0
    %2473 = vmatpush1.msra.mxu0 %v1634
    %2474 = vmatprep.subr.mxu0 0.0
    %2475 = vmatpush1.msra.mxu0 %v1633
    %2476 = vmatprep.subr.mxu0 0.0
    %2477 = vmatpush1.msra.mxu0 %v1632
    %2478 = vmatprep.subr.mxu0 0.0
    %2479 = vmatpush1.msra.mxu0 %v1631
    %2480 = vmatprep.subr.mxu0 0.0
    %2481 = vmatpush1.msra.mxu0 %v1630
    %2482 = vmatprep.subr.mxu0 0.0
    %2483 = vmatpush1.msra.mxu0 %v1629
    %2484 = vmatprep.subr.mxu0 0.0
    %2485 = vmatpush1.msra.mxu0 %v1628
    %2486 = vmatprep.subr.mxu0 0.0
    %2487 = vmatpush1.msra.mxu0 %v1627
    %2488 = vmatprep.subr.mxu0 0.0
    %2489 = vmatpush2.msra.mxu0 0.0
    %2490 = vmatprep.subr.mxu0 0.0
    %2491 = vmatpush2.msra.mxu0 0.0
    %2492 = vmatprep.subr.mxu0 0.0
    %2493 = vmatpush2.msra.mxu0 0.0
    %2494 = vmatprep.subr.mxu0 0.0
    %2495 = vmatpush2.msra.mxu0 0.0
    %2496 = vmatprep.subr.mxu0 0.0
    %2497 = vmatpush2.msra.mxu0 0.0
    %2498 = vmatprep.subr.mxu0 0.0
    %2499 = vmatpush2.msra.mxu0 0.0
    %2500 = vmatprep.subr.mxu0 0.0
    %2501 = vmatpush2.msra.mxu0 0.0
    %2502 = vmatprep.subr.mxu0 0.0
    %2503 = vmatpush2.msra.mxu0 0.0
    %2504 = vmatprep.subr.mxu0 0.0
    %2505 = vmatpush2.msra.mxu0 0.0
    %2506 = vmatprep.subr.mxu0 0.0
    %2507 = vmatpush2.msra.mxu0 0.0
    %2508 = vmatprep.subr.mxu0 0.0
    %2509 = vmatpush2.msra.mxu0 0.0
    %2510 = vmatprep.subr.mxu0 0.0
    %2511 = vmatpush2.msra.mxu0 0.0
    %2512 = vmatprep.subr.mxu0 0.0
    %2513 = vmatpush2.msra.mxu0 0.0
    %2514 = vmatprep.subr.mxu0 0.0
    %2515 = vmatpush2.msra.mxu0 0.0
    %2516 = vmatprep.subr.mxu0 0.0
    %2517 = vmatpush2.msra.mxu0 0.0
    %2518 = vmatprep.subr.mxu0 0.0
    %2519 = vmatpush2.msra.mxu0 0.0
    %2520 = vmatprep.mubr.f32.mxu0 0.0
    %2521 = vmatmul.mubr.f32.gmra.mxu0 %v2454
    %v2522 = vpop.f32.mrf.mxu0
    %v2523 = vadd.f32 0.0, %v2522
    %v2524 = vpop.f32.mrf.mxu0
    %2525 = vdwg.mxu0
    %2526 = vst.msk [vmem:[#allocation3] sm:$0x3] %vm1191, %v2012
    %2527 = vst.msk [vmem:[#allocation3 + $0x2] sm:$0x3] %vm1191, %v2085
    %2528 = vst.msk [vmem:[#allocation3 + $0x4] sm:$0x3] %vm1191, %v2158
    %2529 = vst.msk [vmem:[#allocation3 + $0x6] sm:$0x3] %vm1191, %v2231
    %2530 = vst.msk [vmem:[#allocation3 + $0x8] sm:$0x3] %vm1191, %v2304
    %2531 = vst.msk [vmem:[#allocation3 + $0xa] sm:$0x3] %vm1191, %v2377
    %2532 = vst.msk [vmem:[#allocation3 + $0xc] sm:$0x3] %vm1191, %v2450
    %2533 = vst.msk [vmem:[#allocation3 + $0xe] sm:$0x3] %vm1191, %v2523
    %v2535 = vlaneseq
    %v2536 = vshrl.u32 %v2535, 7
    %v2537 = vsub.s32 0, %v2536
    %v2538 = vrot.slane %v1641, %v2537
    %v2541 = vsel %vm383, %v1566, 0
    %v2544 = vsel %vm383, %v1567, 0
    %v2547 = vsel %vm383, %v1568, 0
    %v2550 = vsel %vm383, %v1569, 0
    %2552 = vmatprep.subr.mxu0 0.0
    %2553 = vmatpush1.msra.mxu0 0.0
    %2554 = vmatprep.subr.mxu0 0.0
    %2555 = vmatpush1.msra.mxu0 0.0
    %2556 = vmatprep.subr.mxu0 0.0
    %2557 = vmatpush1.msra.mxu0 0.0
    %2558 = vmatprep.subr.mxu0 0.0
    %2559 = vmatpush1.msra.mxu0 0.0
    %2560 = vmatprep.subr.mxu0 0.0
    %2561 = vmatpush1.msra.mxu0 0.0
    %2562 = vmatprep.subr.mxu0 0.0
    %2563 = vmatpush1.msra.mxu0 0.0
    %2564 = vmatprep.subr.mxu0 0.0
    %2565 = vmatpush1.msra.mxu0 0.0
    %2566 = vmatprep.subr.mxu0 0.0
    %2567 = vmatpush1.msra.mxu0 0.0
    %2568 = vmatprep.subr.mxu0 0.0
    %2569 = vmatpush1.msra.mxu0 0.0
    %2570 = vmatprep.subr.mxu0 0.0
    %2571 = vmatpush1.msra.mxu0 0.0
    %2572 = vmatprep.subr.mxu0 0.0
    %2573 = vmatpush1.msra.mxu0 0.0
    %2574 = vmatprep.subr.mxu0 0.0
    %2575 = vmatpush1.msra.mxu0 0.0
    %2576 = vmatprep.subr.mxu0 0.0
    %2577 = vmatpush1.msra.mxu0 %v1639
    %2578 = vmatprep.subr.mxu0 0.0
    %2579 = vmatpush1.msra.mxu0 %v1638
    %2580 = vmatprep.subr.mxu0 0.0
    %2581 = vmatpush1.msra.mxu0 %v1637
    %2582 = vmatprep.subr.mxu0 0.0
    %2583 = vmatpush1.msra.mxu0 %v1636
    %2584 = vmatprep.subr.mxu0 0.0
    %2585 = vmatpush2.msra.mxu0 0.0
    %2586 = vmatprep.subr.mxu0 0.0
    %2587 = vmatpush2.msra.mxu0 0.0
    %2588 = vmatprep.subr.mxu0 0.0
    %2589 = vmatpush2.msra.mxu0 0.0
    %2590 = vmatprep.subr.mxu0 0.0
    %2591 = vmatpush2.msra.mxu0 0.0
    %2592 = vmatprep.subr.mxu0 0.0
    %2593 = vmatpush2.msra.mxu0 0.0
    %2594 = vmatprep.subr.mxu0 0.0
    %2595 = vmatpush2.msra.mxu0 0.0
    %2596 = vmatprep.subr.mxu0 0.0
    %2597 = vmatpush2.msra.mxu0 0.0
    %2598 = vmatprep.subr.mxu0 0.0
    %2599 = vmatpush2.msra.mxu0 0.0
    %2600 = vmatprep.subr.mxu0 0.0
    %2601 = vmatpush2.msra.mxu0 0.0
    %2602 = vmatprep.subr.mxu0 0.0
    %2603 = vmatpush2.msra.mxu0 0.0
    %2604 = vmatprep.subr.mxu0 0.0
    %2605 = vmatpush2.msra.mxu0 0.0
    %2606 = vmatprep.subr.mxu0 0.0
    %2607 = vmatpush2.msra.mxu0 0.0
    %2608 = vmatprep.subr.mxu0 0.0
    %2609 = vmatpush2.msra.mxu0 0.0
    %2610 = vmatprep.subr.mxu0 0.0
    %2611 = vmatpush2.msra.mxu0 0.0
    %2612 = vmatprep.subr.mxu0 0.0
    %2613 = vmatpush2.msra.mxu0 0.0
    %2614 = vmatprep.subr.mxu0 0.0
    %2615 = vmatpush2.msra.mxu0 0.0
    %2616 = vmatprep.mubr.f32.mxu0 0.0
    %2617 = vmatmul.mubr.f32.gmra.mxu0 %v2541
    %v2618 = vpop.f32.mrf.mxu0
    %v2619 = vadd.f32 %v2538, %v2618
    %v2620 = vpop.f32.mrf.mxu0
    %2621 = vmatprep.mubr.f32.mxu0 0.0
    %2622 = vmatmul.mubr.f32.gmra.mxu0 %v2544
    %v2623 = vpop.f32.mrf.mxu0
    %v2624 = vadd.f32 %v2538, %v2623
    %v2625 = vpop.f32.mrf.mxu0
    %2626 = vmatprep.mubr.f32.mxu0 0.0
    %2627 = vmatmul.mubr.f32.gmra.mxu0 %v2547
    %v2628 = vpop.f32.mrf.mxu0
    %v2629 = vadd.f32 %v2538, %v2628
    %v2630 = vpop.f32.mrf.mxu0
    %2631 = vmatprep.mubr.f32.mxu0 0.0
    %2632 = vmatmul.mubr.f32.gmra.mxu0 %v2550
    %v2633 = vpop.f32.mrf.mxu0
    %v2634 = vadd.f32 %v2538, %v2633
    %v2635 = vpop.f32.mrf.mxu0
    %2636 = vdwg.mxu0
    %v2637 = vld [vmem:[#allocation3] sm:$0x1]
    %v2638 = vld [vmem:[#allocation3 + $0x2] sm:$0x1]
    %v2639 = vld [vmem:[#allocation3 + $0x4] sm:$0x1]
    %v2640 = vld [vmem:[#allocation3 + $0x6] sm:$0x1]
    %v2641 = vld [vmem:[#allocation3 + $0x8] sm:$0x1]
    %v2642 = vld [vmem:[#allocation3 + $0xa] sm:$0x1]
    %v2643 = vld [vmem:[#allocation3 + $0xc] sm:$0x1]
    %v2644 = vld [vmem:[#allocation3 + $0xe] sm:$0x1]
    %v2653 = vrot.slane %v2638, 7
    %v2654 = vsel %vm1320, %v2653, %v2637
    %v2655 = vrot.slane %v2639, 6
    %v2656 = vsel %vm1323, %v2655, %v2654
    %v2657 = vrot.slane %v2640, 5
    %v2658 = vsel %vm1326, %v2657, %v2656
    %v2659 = vrot.slane %v2641, 4
    %v2660 = vsel %vm1329, %v2659, %v2658
    %v2661 = vrot.slane %v2642, 3
    %v2662 = vsel %vm1332, %v2661, %v2660
    %v2663 = vrot.slane %v2643, 2
    %v2664 = vsel %vm1335, %v2663, %v2662
    %v2665 = vrot.slane %v2644, 1
    %v2666 = vsel %vm1338, %v2665, %v2664
    %2668 = vrot.lane.b32.xlu0 %v2666, 96
    %v2669 = vpop.permute.xlu0 %2668
    %2671 = vmatprep.subr.mxu0 0.0
    %2672 = vmatpush1.msra.mxu0 0.0
    %2673 = vmatprep.subr.mxu0 0.0
    %2674 = vmatpush1.msra.mxu0 0.0
    %2675 = vmatprep.subr.mxu0 0.0
    %2676 = vmatpush1.msra.mxu0 0.0
    %2677 = vmatprep.subr.mxu0 0.0
    %2678 = vmatpush1.msra.mxu0 0.0
    %2679 = vmatprep.subr.mxu0 0.0
    %2680 = vmatpush1.msra.mxu0 0.0
    %2681 = vmatprep.subr.mxu0 0.0
    %2682 = vmatpush1.msra.mxu0 0.0
    %2683 = vmatprep.subr.mxu0 0.0
    %2684 = vmatpush1.msra.mxu0 0.0
    %2685 = vmatprep.subr.mxu0 0.0
    %2686 = vmatpush1.msra.mxu0 0.0
    %2687 = vmatprep.subr.mxu0 0.0
    %2688 = vmatpush1.msra.mxu0 0.0
    %2689 = vmatprep.subr.mxu0 0.0
    %2690 = vmatpush1.msra.mxu0 0.0
    %2691 = vmatprep.subr.mxu0 0.0
    %2692 = vmatpush1.msra.mxu0 0.0
    %2693 = vmatprep.subr.mxu0 0.0
    %2694 = vmatpush1.msra.mxu0 0.0
    %2695 = vmatprep.subr.mxu0 0.0
    %2696 = vmatpush1.msra.mxu0 0.0
    %2697 = vmatprep.subr.mxu0 0.0
    %2698 = vmatpush1.msra.mxu0 0.0
    %2699 = vmatprep.subr.mxu0 0.0
    %2700 = vmatpush1.msra.mxu0 %v2669
    %2701 = vmatprep.subr.mxu0 0.0
    %2702 = vmatpush1.msra.mxu0 %v2666
    %2703 = vmatprep.subr.mxu0 0.0
    %2704 = vmatpush2.msra.mxu0 0.0
    %2705 = vmatprep.subr.mxu0 0.0
    %2706 = vmatpush2.msra.mxu0 0.0
    %2707 = vmatprep.subr.mxu0 0.0
    %2708 = vmatpush2.msra.mxu0 0.0
    %2709 = vmatprep.subr.mxu0 0.0
    %2710 = vmatpush2.msra.mxu0 0.0
    %2711 = vmatprep.subr.mxu0 0.0
    %2712 = vmatpush2.msra.mxu0 0.0
    %2713 = vmatprep.subr.mxu0 0.0
    %2714 = vmatpush2.msra.mxu0 0.0
    %2715 = vmatprep.subr.mxu0 0.0
    %2716 = vmatpush2.msra.mxu0 0.0
    %2717 = vmatprep.subr.mxu0 0.0
    %2718 = vmatpush2.msra.mxu0 0.0
    %2719 = vmatprep.subr.mxu0 0.0
    %2720 = vmatpush2.msra.mxu0 0.0
    %2721 = vmatprep.subr.mxu0 0.0
    %2722 = vmatpush2.msra.mxu0 0.0
    %2723 = vmatprep.subr.mxu0 0.0
    %2724 = vmatpush2.msra.mxu0 0.0
    %2725 = vmatprep.subr.mxu0 0.0
    %2726 = vmatpush2.msra.mxu0 0.0
    %2727 = vmatprep.subr.mxu0 0.0
    %2728 = vmatpush2.msra.mxu0 0.0
    %2729 = vmatprep.subr.mxu0 0.0
    %2730 = vmatpush2.msra.mxu0 0.0
    %2731 = vmatprep.subr.mxu0 0.0
    %2732 = vmatpush2.msra.mxu0 0.0
    %2733 = vmatprep.subr.mxu0 0.0
    %2734 = vmatpush2.msra.mxu0 0.0
    %2735 = vmatprep.mubr.f32.mxu0 0.0
    %2736 = vmatmul.mubr.f32.gmra.mxu0 %v1345
    %v2737 = vpop.f32.mrf.mxu0
    %v2738 = vadd.f32 %v2619, %v2737
    %v2739 = vpop.f32.mrf.mxu0
    %2740 = vmatprep.mubr.f32.mxu0 0.0
    %2741 = vmatmul.mubr.f32.gmra.mxu0 %v1348
    %v2742 = vpop.f32.mrf.mxu0
    %v2743 = vadd.f32 %v2624, %v2742
    %v2744 = vpop.f32.mrf.mxu0
    %2745 = vdwg.mxu0
    %v2746 = vld [vmem:[#allocation3 + $0x1] sm:$0x1]
    %v2747 = vld [vmem:[#allocation3 + $0x3] sm:$0x1]
    %v2748 = vld [vmem:[#allocation3 + $0x5] sm:$0x1]
    %v2749 = vld [vmem:[#allocation3 + $0x7] sm:$0x1]
    %v2750 = vld [vmem:[#allocation3 + $0x9] sm:$0x1]
    %v2751 = vld [vmem:[#allocation3 + $0xb] sm:$0x1]
    %v2752 = vld [vmem:[#allocation3 + $0xd] sm:$0x1]
    %v2753 = vld [vmem:[#allocation3 + $0xf] sm:$0x1]
    %v2762 = vrot.slane %v2747, 7
    %v2763 = vsel %vm1320, %v2762, %v2746
    %v2764 = vrot.slane %v2748, 6
    %v2765 = vsel %vm1323, %v2764, %v2763
    %v2766 = vrot.slane %v2749, 5
    %v2767 = vsel %vm1326, %v2766, %v2765
    %v2768 = vrot.slane %v2750, 4
    %v2769 = vsel %vm1329, %v2768, %v2767
    %v2770 = vrot.slane %v2751, 3
    %v2771 = vsel %vm1332, %v2770, %v2769
    %v2772 = vrot.slane %v2752, 2
    %v2773 = vsel %vm1335, %v2772, %v2771
    %v2774 = vrot.slane %v2753, 1
    %v2775 = vsel %vm1338, %v2774, %v2773
    %2777 = vrot.lane.b32.xlu0 %v2775, 96
    %v2778 = vpop.permute.xlu0 %2777
    %2780 = vmatprep.subr.mxu0 0.0
    %2781 = vmatpush1.msra.mxu0 0.0
    %2782 = vmatprep.subr.mxu0 0.0
    %2783 = vmatpush1.msra.mxu0 0.0
    %2784 = vmatprep.subr.mxu0 0.0
    %2785 = vmatpush1.msra.mxu0 0.0
    %2786 = vmatprep.subr.mxu0 0.0
    %2787 = vmatpush1.msra.mxu0 0.0
    %2788 = vmatprep.subr.mxu0 0.0
    %2789 = vmatpush1.msra.mxu0 0.0
    %2790 = vmatprep.subr.mxu0 0.0
    %2791 = vmatpush1.msra.mxu0 0.0
    %2792 = vmatprep.subr.mxu0 0.0
    %2793 = vmatpush1.msra.mxu0 0.0
    %2794 = vmatprep.subr.mxu0 0.0
    %2795 = vmatpush1.msra.mxu0 0.0
    %2796 = vmatprep.subr.mxu0 0.0
    %2797 = vmatpush1.msra.mxu0 0.0
    %2798 = vmatprep.subr.mxu0 0.0
    %2799 = vmatpush1.msra.mxu0 0.0
    %2800 = vmatprep.subr.mxu0 0.0
    %2801 = vmatpush1.msra.mxu0 0.0
    %2802 = vmatprep.subr.mxu0 0.0
    %2803 = vmatpush1.msra.mxu0 0.0
    %2804 = vmatprep.subr.mxu0 0.0
    %2805 = vmatpush1.msra.mxu0 0.0
    %2806 = vmatprep.subr.mxu0 0.0
    %2807 = vmatpush1.msra.mxu0 0.0
    %2808 = vmatprep.subr.mxu0 0.0
    %2809 = vmatpush1.msra.mxu0 %v2778
    %2810 = vmatprep.subr.mxu0 0.0
    %2811 = vmatpush1.msra.mxu0 %v2775
    %2812 = vmatprep.subr.mxu0 0.0
    %2813 = vmatpush2.msra.mxu0 0.0
    %2814 = vmatprep.subr.mxu0 0.0
    %2815 = vmatpush2.msra.mxu0 0.0
    %2816 = vmatprep.subr.mxu0 0.0
    %2817 = vmatpush2.msra.mxu0 0.0
    %2818 = vmatprep.subr.mxu0 0.0
    %2819 = vmatpush2.msra.mxu0 0.0
    %2820 = vmatprep.subr.mxu0 0.0
    %2821 = vmatpush2.msra.mxu0 0.0
    %2822 = vmatprep.subr.mxu0 0.0
    %2823 = vmatpush2.msra.mxu0 0.0
    %2824 = vmatprep.subr.mxu0 0.0
    %2825 = vmatpush2.msra.mxu0 0.0
    %2826 = vmatprep.subr.mxu0 0.0
    %2827 = vmatpush2.msra.mxu0 0.0
    %2828 = vmatprep.subr.mxu0 0.0
    %2829 = vmatpush2.msra.mxu0 0.0
    %2830 = vmatprep.subr.mxu0 0.0
    %2831 = vmatpush2.msra.mxu0 0.0
    %2832 = vmatprep.subr.mxu0 0.0
    %2833 = vmatpush2.msra.mxu0 0.0
    %2834 = vmatprep.subr.mxu0 0.0
    %2835 = vmatpush2.msra.mxu0 0.0
    %2836 = vmatprep.subr.mxu0 0.0
    %2837 = vmatpush2.msra.mxu0 0.0
    %2838 = vmatprep.subr.mxu0 0.0
    %2839 = vmatpush2.msra.mxu0 0.0
    %2840 = vmatprep.subr.mxu0 0.0
    %2841 = vmatpush2.msra.mxu0 0.0
    %2842 = vmatprep.subr.mxu0 0.0
    %2843 = vmatpush2.msra.mxu0 0.0
    %2844 = vmatprep.mubr.f32.mxu0 0.0
    %2845 = vmatmul.mubr.f32.gmra.mxu0 %v1345
    %v2846 = vpop.f32.mrf.mxu0
    %v2847 = vadd.f32 %v2629, %v2846
    %v2848 = vpop.f32.mrf.mxu0
    %2849 = vmatprep.mubr.f32.mxu0 0.0
    %2850 = vmatmul.mubr.f32.gmra.mxu0 %v1348
    %v2851 = vpop.f32.mrf.mxu0
    %v2852 = vadd.f32 %v2634, %v2851
    %v2853 = vpop.f32.mrf.mxu0
    %2854 = vdwg.mxu0
    %v2855 = vmul.f32 %v2738, %v2738
    %v2856 = vmul.f32 %v2743, %v2743
    %v2857 = vmul.f32 %v2847, %v2847
    %v2858 = vmul.f32 %v2852, %v2852
    %v2859 = vmul.f32 %v2738, %v2855
    %v2860 = vmul.f32 %v2743, %v2856
    %v2861 = vmul.f32 %v2847, %v2857
    %v2862 = vmul.f32 %v2852, %v2858
    %v2863 = vmul.f32 %v2859, 0.044715
    %v2864 = vmul.f32 %v2860, 0.044715
    %v2865 = vmul.f32 %v2861, 0.044715
    %v2866 = vmul.f32 %v2862, 0.044715
    %v2867 = vadd.f32 %v2738, %v2863
    %v2868 = vadd.f32 %v2743, %v2864
    %v2869 = vadd.f32 %v2847, %v2865
    %v2870 = vadd.f32 %v2852, %v2866
    %v2871 = vmul.f32 %v2867, 0.7978846
    %v2872 = vmul.f32 %v2868, 0.7978846
    %v2873 = vmul.f32 %v2869, 0.7978846
    %v2874 = vmul.f32 %v2870, 0.7978846
    %v2875 = vtanh.pop %v2871
    %v2876 = vtanh.pop %v2872
    %v2877 = vtanh.pop %v2873
    %v2878 = vtanh.pop %v2874
    %v2879 = vadd.f32 %v2875, 1.0
    %v2880 = vadd.f32 %v2876, 1.0
    %v2881 = vadd.f32 %v2877, 1.0
    %v2882 = vadd.f32 %v2878, 1.0
    %v2883 = vmul.f32 %v2879, 0.5
    %v2884 = vmul.f32 %v2880, 0.5
    %v2885 = vmul.f32 %v2881, 0.5
    %v2886 = vmul.f32 %v2882, 0.5
    %v2887 = vmul.f32 %v2738, %v2883
    %v2888 = vmul.f32 %v2743, %v2884
    %v2889 = vmul.f32 %v2847, %v2885
    %v2890 = vmul.f32 %v2852, %v2886
    %s2891 = scalar_lea.vmem [#allocation10], 1024
    %v2892 = vld [vmem:[%s2891] sm:$0xff]
    %v2893 = vld [vmem:[%s2891 + $0x8] sm:$0xff]
    %v2894 = vld [vmem:[%s2891 + $0x10] sm:$0xff]
    %v2895 = vld [vmem:[%s2891 + $0x18] sm:$0xff]
    %v2896 = vld [vmem:[%s2891 + $0x20] sm:$0xff]
    %v2897 = vld [vmem:[%s2891 + $0x28] sm:$0xff]
    %v2898 = vld [vmem:[%s2891 + $0x30] sm:$0xff]
    %v2899 = vld [vmem:[%s2891 + $0x38] sm:$0xff]
    %v2900 = vld [vmem:[%s2891 + $0x40] sm:$0xff]
    %v2901 = vld [vmem:[%s2891 + $0x48] sm:$0xff]
    %v2902 = vld [vmem:[%s2891 + $0x50] sm:$0xff]
    %v2903 = vld [vmem:[%s2891 + $0x58] sm:$0xff]
    %v2904 = vld [vmem:[%s2891 + $0x60] sm:$0xff]
    %v2905 = vld [vmem:[%s2891 + $0x68] sm:$0xff]
    %v2906 = vld [vmem:[%s2891 + $0x70] sm:$0xff]
    %v2907 = vld [vmem:[%s2891 + $0x78] sm:$0xff]
    %v2908 = vld [vmem:[%s2891 + $0x80] sm:$0xff]
    %v2909 = vld [vmem:[%s2891 + $0x88] sm:$0xff]
    %v2910 = vld [vmem:[%s2891 + $0x90] sm:$0xff]
    %v2911 = vld [vmem:[%s2891 + $0x98] sm:$0xff]
    %v2912 = vld [vmem:[%s2891 + $0xa0] sm:$0xff]
    %v2913 = vld [vmem:[%s2891 + $0xa8] sm:$0xff]
    %v2914 = vld [vmem:[%s2891 + $0xb0] sm:$0xff]
    %v2915 = vld [vmem:[%s2891 + $0xb8] sm:$0xff]
    %v2916 = vld [vmem:[%s2891 + $0xc0] sm:$0xff]
    %v2917 = vld [vmem:[%s2891 + $0xc8] sm:$0xff]
    %v2918 = vld [vmem:[%s2891 + $0xd0] sm:$0xff]
    %v2919 = vld [vmem:[%s2891 + $0xd8] sm:$0xff]
    %v2920 = vld [vmem:[%s2891 + $0xe0] sm:$0xff]
    %v2921 = vld [vmem:[%s2891 + $0xe8] sm:$0xff]
    %v2922 = vld [vmem:[%s2891 + $0xf0] sm:$0xff]
    %v2923 = vld [vmem:[%s2891 + $0xf8] sm:$0xff]
    %v2924 = vld [vmem:[%s2891 + $0x100] sm:$0xff]
    %v2925 = vld [vmem:[%s2891 + $0x108] sm:$0xff]
    %v2926 = vld [vmem:[%s2891 + $0x110] sm:$0xff]
    %v2927 = vld [vmem:[%s2891 + $0x118] sm:$0xff]
    %v2928 = vld [vmem:[%s2891 + $0x120] sm:$0xff]
    %v2929 = vld [vmem:[%s2891 + $0x128] sm:$0xff]
    %v2930 = vld [vmem:[%s2891 + $0x130] sm:$0xff]
    %v2931 = vld [vmem:[%s2891 + $0x138] sm:$0xff]
    %v2932 = vld [vmem:[%s2891 + $0x140] sm:$0xff]
    %v2933 = vld [vmem:[%s2891 + $0x148] sm:$0xff]
    %v2934 = vld [vmem:[%s2891 + $0x150] sm:$0xff]
    %v2935 = vld [vmem:[%s2891 + $0x158] sm:$0xff]
    %v2936 = vld [vmem:[%s2891 + $0x160] sm:$0xff]
    %v2937 = vld [vmem:[%s2891 + $0x168] sm:$0xff]
    %v2938 = vld [vmem:[%s2891 + $0x170] sm:$0xff]
    %v2939 = vld [vmem:[%s2891 + $0x178] sm:$0xff]
    %v2940 = vld [vmem:[%s2891 + $0x180] sm:$0xff]
    %v2941 = vld [vmem:[%s2891 + $0x188] sm:$0xff]
    %v2942 = vld [vmem:[%s2891 + $0x190] sm:$0xff]
    %v2943 = vld [vmem:[%s2891 + $0x198] sm:$0xff]
    %v2944 = vld [vmem:[%s2891 + $0x1a0] sm:$0xff]
    %v2945 = vld [vmem:[%s2891 + $0x1a8] sm:$0xff]
    %v2946 = vld [vmem:[%s2891 + $0x1b0] sm:$0xff]
    %v2947 = vld [vmem:[%s2891 + $0x1b8] sm:$0xff]
    %v2948 = vld [vmem:[%s2891 + $0x1c0] sm:$0xff]
    %v2949 = vld [vmem:[%s2891 + $0x1c8] sm:$0xff]
    %v2950 = vld [vmem:[%s2891 + $0x1d0] sm:$0xff]
    %v2951 = vld [vmem:[%s2891 + $0x1d8] sm:$0xff]
    %v2952 = vld [vmem:[%s2891 + $0x1e0] sm:$0xff]
    %v2953 = vld [vmem:[%s2891 + $0x1e8] sm:$0xff]
    %v2954 = vld [vmem:[%s2891 + $0x1f0] sm:$0xff]
    %v2955 = vld [vmem:[%s2891 + $0x1f8] sm:$0xff]
    %s2956 = scalar_lea.vmem [#allocation11], 64
    %v2957 = vld [vmem:[%s2956] sm:$0xff]
    %v2958 = vld [vmem:[%s2956 + $0x8] sm:$0xff]
    %v2959 = vld [vmem:[%s2956 + $0x10] sm:$0xff]
    %v2960 = vld [vmem:[%s2956 + $0x18] sm:$0xff]
    %s2961 = scalar_lea.vmem [#allocation13], 2
    %v2962 = vld [vmem:[%s2961] sm:$0x1]
    %2963 = vmatprep.subr.mxu0 0.0
    %2964 = vmatpush1.msra.mxu0 0.0
    %2965 = vmatprep.subr.mxu0 0.0
    %2966 = vmatpush1.msra.mxu0 0.0
    %2967 = vmatprep.subr.mxu0 0.0
    %2968 = vmatpush1.msra.mxu0 0.0
    %2969 = vmatprep.subr.mxu0 0.0
    %2970 = vmatpush1.msra.mxu0 0.0
    %2971 = vmatprep.subr.mxu0 0.0
    %2972 = vmatpush1.msra.mxu0 0.0
    %2973 = vmatprep.subr.mxu0 0.0
    %2974 = vmatpush1.msra.mxu0 0.0
    %2975 = vmatprep.subr.mxu0 0.0
    %2976 = vmatpush1.msra.mxu0 0.0
    %2977 = vmatprep.subr.mxu0 0.0
    %2978 = vmatpush1.msra.mxu0 0.0
    %2979 = vmatprep.subr.mxu0 0.0
    %2980 = vmatpush1.msra.mxu0 0.0
    %2981 = vmatprep.subr.mxu0 0.0
    %2982 = vmatpush1.msra.mxu0 0.0
    %2983 = vmatprep.subr.mxu0 0.0
    %2984 = vmatpush1.msra.mxu0 0.0
    %2985 = vmatprep.subr.mxu0 0.0
    %2986 = vmatpush1.msra.mxu0 0.0
    %2987 = vmatprep.subr.mxu0 0.0
    %2988 = vmatpush1.msra.mxu0 0.0
    %2989 = vmatprep.subr.mxu0 0.0
    %2990 = vmatpush1.msra.mxu0 0.0
    %2991 = vmatprep.subr.mxu0 0.0
    %2992 = vmatpush1.msra.mxu0 %v2888
    %2993 = vmatprep.subr.mxu0 0.0
    %2994 = vmatpush1.msra.mxu0 %v2887
    %2995 = vmatprep.subr.mxu0 0.0
    %2996 = vmatpush2.msra.mxu0 0.0
    %2997 = vmatprep.subr.mxu0 0.0
    %2998 = vmatpush2.msra.mxu0 0.0
    %2999 = vmatprep.subr.mxu0 0.0
    %3000 = vmatpush2.msra.mxu0 0.0
    %3001 = vmatprep.subr.mxu0 0.0
    %3002 = vmatpush2.msra.mxu0 0.0
    %3003 = vmatprep.subr.mxu0 0.0
    %3004 = vmatpush2.msra.mxu0 0.0
    %3005 = vmatprep.subr.mxu0 0.0
    %3006 = vmatpush2.msra.mxu0 0.0
    %3007 = vmatprep.subr.mxu0 0.0
    %3008 = vmatpush2.msra.mxu0 0.0
    %3009 = vmatprep.subr.mxu0 0.0
    %3010 = vmatpush2.msra.mxu0 0.0
    %3011 = vmatprep.subr.mxu0 0.0
    %3012 = vmatpush2.msra.mxu0 0.0
    %3013 = vmatprep.subr.mxu0 0.0
    %3014 = vmatpush2.msra.mxu0 0.0
    %3015 = vmatprep.subr.mxu0 0.0
    %3016 = vmatpush2.msra.mxu0 0.0
    %3017 = vmatprep.subr.mxu0 0.0
    %3018 = vmatpush2.msra.mxu0 0.0
    %3019 = vmatprep.subr.mxu0 0.0
    %3020 = vmatpush2.msra.mxu0 0.0
    %3021 = vmatprep.subr.mxu0 0.0
    %3022 = vmatpush2.msra.mxu0 0.0
    %3023 = vmatprep.subr.mxu0 0.0
    %3024 = vmatpush2.msra.mxu0 0.0
    %3025 = vmatprep.subr.mxu0 0.0
    %3026 = vmatpush2.msra.mxu0 0.0
    %3027 = vmatprep.mubr.f32.mxu0 0.0
    %3028 = vmatmul.mubr.f32.gmra.mxu0 %v299
    %v3029 = vpop.f32.mrf.mxu0
    %v3030 = vadd.f32 0.0, %v3029
    %v3031 = vpop.f32.mrf.mxu0
    %3032 = vmatprep.mubr.f32.mxu0 0.0
    %3033 = vmatmul.mubr.f32.gmra.mxu0 %v302
    %v3034 = vpop.f32.mrf.mxu0
    %v3035 = vadd.f32 0.0, %v3034
    %v3036 = vpop.f32.mrf.mxu0
    %3037 = vdwg.mxu0
    %3039 = vrot.lane.b32.xlu0 %v3035, 32
    %v3040 = vpop.permute.xlu0 %3039
    %v3042 = vsel %vm383, %v3030, %v3040
    %v3044 = vcombine.high %v3042, %v3042
    %v3046 = vunpack.c.l.s4 1966171168
    %v3047 = vunpack.c.0.s8 %v3046
    %v3048 = vlaneseq
    %v3049 = vshrl.u32 %v3048, 7
    %v3050 = vsub.s32 %v3047, %v3049
    %v3051 = vrot.slane %v3042, %v3050
    %v3053 = vunpack.c.l.s4 1966171168
    %v3054 = vunpack.c.0.s8 %v3053
    %v3055 = vlaneseq
    %v3056 = vshrl.u32 %v3055, 7
    %v3057 = vsub.s32 %v3054, %v3056
    %v3058 = vrot.slane %v3044, %v3057
    %v3059 = vcombine.high %v3051, %v3051
    %v3060 = vcombine.high %v3058, %v3058
    %v3062 = vunpack.c.l.s4 1966171168
    %v3063 = vunpack.c.0.s8 %v3062
    %v3064 = vlaneseq
    %v3065 = vshrl.u32 %v3064, 7
    %v3066 = vsub.s32 %v3063, %v3065
    %v3067 = vrot.slane %v3051, %v3066
    %v3069 = vunpack.c.l.s4 1966171168
    %v3070 = vunpack.c.0.s8 %v3069
    %v3071 = vlaneseq
    %v3072 = vshrl.u32 %v3071, 7
    %v3073 = vsub.s32 %v3070, %v3072
    %v3074 = vrot.slane %v3058, %v3073
    %v3076 = vunpack.c.l.s4 1966171168
    %v3077 = vunpack.c.0.s8 %v3076
    %v3078 = vlaneseq
    %v3079 = vshrl.u32 %v3078, 7
    %v3080 = vsub.s32 %v3077, %v3079
    %v3081 = vrot.slane %v3059, %v3080
    %v3083 = vunpack.c.l.s4 1966171168
    %v3084 = vunpack.c.0.s8 %v3083
    %v3085 = vlaneseq
    %v3086 = vshrl.u32 %v3085, 7
    %v3087 = vsub.s32 %v3084, %v3086
    %v3088 = vrot.slane %v3060, %v3087
    %v3089 = vcombine.high %v3067, %v3067
    %v3090 = vcombine.high %v3074, %v3074
    %v3091 = vcombine.high %v3081, %v3081
    %v3092 = vcombine.high %v3088, %v3088
    %3101 = vst.msk [vmem:[#allocation2] sm:$0x1] %vm443, %v3067
    %3102 = vst.msk [vmem:[#allocation2 + $0x2] sm:$0x1] %vm443, %v3081
    %3103 = vst.msk [vmem:[#allocation2 + $0x4] sm:$0x1] %vm443, %v3089
    %3104 = vst.msk [vmem:[#allocation2 + $0x6] sm:$0x1] %vm443, %v3091
    %3105 = vst.msk [vmem:[#allocation2 + $0x8] sm:$0x1] %vm443, %v3074
    %3106 = vst.msk [vmem:[#allocation2 + $0xa] sm:$0x1] %vm443, %v3088
    %3107 = vst.msk [vmem:[#allocation2 + $0xc] sm:$0x1] %vm443, %v3090
    %3108 = vst.msk [vmem:[#allocation2 + $0xe] sm:$0x1] %vm443, %v3092
    %3109 = vmatprep.subr.mxu0 0.0
    %3110 = vmatpush1.msra.mxu0 0.0
    %3111 = vmatprep.subr.mxu0 0.0
    %3112 = vmatpush1.msra.mxu0 0.0
    %3113 = vmatprep.subr.mxu0 0.0
    %3114 = vmatpush1.msra.mxu0 0.0
    %3115 = vmatprep.subr.mxu0 0.0
    %3116 = vmatpush1.msra.mxu0 0.0
    %3117 = vmatprep.subr.mxu0 0.0
    %3118 = vmatpush1.msra.mxu0 0.0
    %3119 = vmatprep.subr.mxu0 0.0
    %3120 = vmatpush1.msra.mxu0 0.0
    %3121 = vmatprep.subr.mxu0 0.0
    %3122 = vmatpush1.msra.mxu0 0.0
    %3123 = vmatprep.subr.mxu0 0.0
    %3124 = vmatpush1.msra.mxu0 0.0
    %3125 = vmatprep.subr.mxu0 0.0
    %3126 = vmatpush1.msra.mxu0 0.0
    %3127 = vmatprep.subr.mxu0 0.0
    %3128 = vmatpush1.msra.mxu0 0.0
    %3129 = vmatprep.subr.mxu0 0.0
    %3130 = vmatpush1.msra.mxu0 0.0
    %3131 = vmatprep.subr.mxu0 0.0
    %3132 = vmatpush1.msra.mxu0 0.0
    %3133 = vmatprep.subr.mxu0 0.0
    %3134 = vmatpush1.msra.mxu0 0.0
    %3135 = vmatprep.subr.mxu0 0.0
    %3136 = vmatpush1.msra.mxu0 0.0
    %3137 = vmatprep.subr.mxu0 0.0
    %3138 = vmatpush1.msra.mxu0 %v2890
    %3139 = vmatprep.subr.mxu0 0.0
    %3140 = vmatpush1.msra.mxu0 %v2889
    %3141 = vmatprep.subr.mxu0 0.0
    %3142 = vmatpush2.msra.mxu0 0.0
    %3143 = vmatprep.subr.mxu0 0.0
    %3144 = vmatpush2.msra.mxu0 0.0
    %3145 = vmatprep.subr.mxu0 0.0
    %3146 = vmatpush2.msra.mxu0 0.0
    %3147 = vmatprep.subr.mxu0 0.0
    %3148 = vmatpush2.msra.mxu0 0.0
    %3149 = vmatprep.subr.mxu0 0.0
    %3150 = vmatpush2.msra.mxu0 0.0
    %3151 = vmatprep.subr.mxu0 0.0
    %3152 = vmatpush2.msra.mxu0 0.0
    %3153 = vmatprep.subr.mxu0 0.0
    %3154 = vmatpush2.msra.mxu0 0.0
    %3155 = vmatprep.subr.mxu0 0.0
    %3156 = vmatpush2.msra.mxu0 0.0
    %3157 = vmatprep.subr.mxu0 0.0
    %3158 = vmatpush2.msra.mxu0 0.0
    %3159 = vmatprep.subr.mxu0 0.0
    %3160 = vmatpush2.msra.mxu0 0.0
    %3161 = vmatprep.subr.mxu0 0.0
    %3162 = vmatpush2.msra.mxu0 0.0
    %3163 = vmatprep.subr.mxu0 0.0
    %3164 = vmatpush2.msra.mxu0 0.0
    %3165 = vmatprep.subr.mxu0 0.0
    %3166 = vmatpush2.msra.mxu0 0.0
    %3167 = vmatprep.subr.mxu0 0.0
    %3168 = vmatpush2.msra.mxu0 0.0
    %3169 = vmatprep.subr.mxu0 0.0
    %3170 = vmatpush2.msra.mxu0 0.0
    %3171 = vmatprep.subr.mxu0 0.0
    %3172 = vmatpush2.msra.mxu0 0.0
    %3173 = vmatprep.mubr.f32.mxu0 0.0
    %3174 = vmatmul.mubr.f32.gmra.mxu0 %v299
    %v3175 = vpop.f32.mrf.mxu0
    %v3176 = vadd.f32 0.0, %v3175
    %v3177 = vpop.f32.mrf.mxu0
    %3178 = vmatprep.mubr.f32.mxu0 0.0
    %3179 = vmatmul.mubr.f32.gmra.mxu0 %v302
    %v3180 = vpop.f32.mrf.mxu0
    %v3181 = vadd.f32 0.0, %v3180
    %v3182 = vpop.f32.mrf.mxu0
    %3183 = vdwg.mxu0
    %3185 = vrot.lane.b32.xlu0 %v3181, 32
    %v3186 = vpop.permute.xlu0 %3185
    %v3188 = vsel %vm383, %v3176, %v3186
    %v3190 = vcombine.high %v3188, %v3188
    %v3192 = vunpack.c.l.s4 1966171168
    %v3193 = vunpack.c.0.s8 %v3192
    %v3194 = vlaneseq
    %v3195 = vshrl.u32 %v3194, 7
    %v3196 = vsub.s32 %v3193, %v3195
    %v3197 = vrot.slane %v3188, %v3196
    %v3199 = vunpack.c.l.s4 1966171168
    %v3200 = vunpack.c.0.s8 %v3199
    %v3201 = vlaneseq
    %v3202 = vshrl.u32 %v3201, 7
    %v3203 = vsub.s32 %v3200, %v3202
    %v3204 = vrot.slane %v3190, %v3203
    %v3205 = vcombine.high %v3197, %v3197
    %v3206 = vcombine.high %v3204, %v3204
    %v3208 = vunpack.c.l.s4 1966171168
    %v3209 = vunpack.c.0.s8 %v3208
    %v3210 = vlaneseq
    %v3211 = vshrl.u32 %v3210, 7
    %v3212 = vsub.s32 %v3209, %v3211
    %v3213 = vrot.slane %v3197, %v3212
    %v3215 = vunpack.c.l.s4 1966171168
    %v3216 = vunpack.c.0.s8 %v3215
    %v3217 = vlaneseq
    %v3218 = vshrl.u32 %v3217, 7
    %v3219 = vsub.s32 %v3216, %v3218
    %v3220 = vrot.slane %v3204, %v3219
    %v3222 = vunpack.c.l.s4 1966171168
    %v3223 = vunpack.c.0.s8 %v3222
    %v3224 = vlaneseq
    %v3225 = vshrl.u32 %v3224, 7
    %v3226 = vsub.s32 %v3223, %v3225
    %v3227 = vrot.slane %v3205, %v3226
    %v3229 = vunpack.c.l.s4 1966171168
    %v3230 = vunpack.c.0.s8 %v3229
    %v3231 = vlaneseq
    %v3232 = vshrl.u32 %v3231, 7
    %v3233 = vsub.s32 %v3230, %v3232
    %v3234 = vrot.slane %v3206, %v3233
    %v3235 = vcombine.high %v3213, %v3213
    %v3236 = vcombine.high %v3220, %v3220
    %v3237 = vcombine.high %v3227, %v3227
    %v3238 = vcombine.high %v3234, %v3234
    %3247 = vst.msk [vmem:[#allocation2 + $0x1] sm:$0x1] %vm443, %v3213
    %3248 = vst.msk [vmem:[#allocation2 + $0x3] sm:$0x1] %vm443, %v3227
    %3249 = vst.msk [vmem:[#allocation2 + $0x5] sm:$0x1] %vm443, %v3235
    %3250 = vst.msk [vmem:[#allocation2 + $0x7] sm:$0x1] %vm443, %v3237
    %3251 = vst.msk [vmem:[#allocation2 + $0x9] sm:$0x1] %vm443, %v3220
    %3252 = vst.msk [vmem:[#allocation2 + $0xb] sm:$0x1] %vm443, %v3234
    %3253 = vst.msk [vmem:[#allocation2 + $0xd] sm:$0x1] %vm443, %v3236
    %3254 = vst.msk [vmem:[#allocation2 + $0xf] sm:$0x1] %vm443, %v3238
    %v3255 = vld [vmem:[#allocation2] sm:$0x3]
    %v3256 = vld [vmem:[#allocation2 + $0x2] sm:$0x3]
    %v3257 = vld [vmem:[#allocation2 + $0x4] sm:$0x3]
    %v3258 = vld [vmem:[#allocation2 + $0x6] sm:$0x3]
    %v3259 = vld [vmem:[#allocation2 + $0x8] sm:$0x3]
    %v3260 = vld [vmem:[#allocation2 + $0xa] sm:$0x3]
    %v3261 = vld [vmem:[#allocation2 + $0xc] sm:$0x3]
    %v3262 = vld [vmem:[#allocation2 + $0xe] sm:$0x3]
    %v3264 = vsel %vm606, %v3255, 0
    %3266 = vmatprep.subr.mxu0 0.0
    %3267 = vmatpush1.msra.mxu0 0.0
    %3268 = vmatprep.subr.mxu0 0.0
    %3269 = vmatpush1.msra.mxu0 0.0
    %3270 = vmatprep.subr.mxu0 0.0
    %3271 = vmatpush1.msra.mxu0 0.0
    %3272 = vmatprep.subr.mxu0 0.0
    %3273 = vmatpush1.msra.mxu0 0.0
    %3274 = vmatprep.subr.mxu0 0.0
    %3275 = vmatpush1.msra.mxu0 0.0
    %3276 = vmatprep.subr.mxu0 0.0
    %3277 = vmatpush1.msra.mxu0 0.0
    %3278 = vmatprep.subr.mxu0 0.0
    %3279 = vmatpush1.msra.mxu0 0.0
    %3280 = vmatprep.subr.mxu0 0.0
    %3281 = vmatpush1.msra.mxu0 0.0
    %3282 = vmatprep.subr.mxu0 0.0
    %3283 = vmatpush1.msra.mxu0 %v2899
    %3284 = vmatprep.subr.mxu0 0.0
    %3285 = vmatpush1.msra.mxu0 %v2898
    %3286 = vmatprep.subr.mxu0 0.0
    %3287 = vmatpush1.msra.mxu0 %v2897
    %3288 = vmatprep.subr.mxu0 0.0
    %3289 = vmatpush1.msra.mxu0 %v2896
    %3290 = vmatprep.subr.mxu0 0.0
    %3291 = vmatpush1.msra.mxu0 %v2895
    %3292 = vmatprep.subr.mxu0 0.0
    %3293 = vmatpush1.msra.mxu0 %v2894
    %3294 = vmatprep.subr.mxu0 0.0
    %3295 = vmatpush1.msra.mxu0 %v2893
    %3296 = vmatprep.subr.mxu0 0.0
    %3297 = vmatpush1.msra.mxu0 %v2892
    %3298 = vmatprep.subr.mxu0 0.0
    %3299 = vmatpush2.msra.mxu0 0.0
    %3300 = vmatprep.subr.mxu0 0.0
    %3301 = vmatpush2.msra.mxu0 0.0
    %3302 = vmatprep.subr.mxu0 0.0
    %3303 = vmatpush2.msra.mxu0 0.0
    %3304 = vmatprep.subr.mxu0 0.0
    %3305 = vmatpush2.msra.mxu0 0.0
    %3306 = vmatprep.subr.mxu0 0.0
    %3307 = vmatpush2.msra.mxu0 0.0
    %3308 = vmatprep.subr.mxu0 0.0
    %3309 = vmatpush2.msra.mxu0 0.0
    %3310 = vmatprep.subr.mxu0 0.0
    %3311 = vmatpush2.msra.mxu0 0.0
    %3312 = vmatprep.subr.mxu0 0.0
    %3313 = vmatpush2.msra.mxu0 0.0
    %3314 = vmatprep.subr.mxu0 0.0
    %3315 = vmatpush2.msra.mxu0 0.0
    %3316 = vmatprep.subr.mxu0 0.0
    %3317 = vmatpush2.msra.mxu0 0.0
    %3318 = vmatprep.subr.mxu0 0.0
    %3319 = vmatpush2.msra.mxu0 0.0
    %3320 = vmatprep.subr.mxu0 0.0
    %3321 = vmatpush2.msra.mxu0 0.0
    %3322 = vmatprep.subr.mxu0 0.0
    %3323 = vmatpush2.msra.mxu0 0.0
    %3324 = vmatprep.subr.mxu0 0.0
    %3325 = vmatpush2.msra.mxu0 0.0
    %3326 = vmatprep.subr.mxu0 0.0
    %3327 = vmatpush2.msra.mxu0 0.0
    %3328 = vmatprep.subr.mxu0 0.0
    %3329 = vmatpush2.msra.mxu0 0.0
    %3330 = vmatprep.mubr.f32.mxu0 0.0
    %3331 = vmatmul.mubr.f32.gmra.mxu0 %v3264
    %v3332 = vpop.f32.mrf.mxu0
    %v3333 = vadd.f32 0.0, %v3332
    %v3334 = vpop.f32.mrf.mxu0
    %3335 = vdwg.mxu0
    %v3337 = vsel %vm606, %v3256, 0
    %3339 = vmatprep.subr.mxu0 0.0
    %3340 = vmatpush1.msra.mxu0 0.0
    %3341 = vmatprep.subr.mxu0 0.0
    %3342 = vmatpush1.msra.mxu0 0.0
    %3343 = vmatprep.subr.mxu0 0.0
    %3344 = vmatpush1.msra.mxu0 0.0
    %3345 = vmatprep.subr.mxu0 0.0
    %3346 = vmatpush1.msra.mxu0 0.0
    %3347 = vmatprep.subr.mxu0 0.0
    %3348 = vmatpush1.msra.mxu0 0.0
    %3349 = vmatprep.subr.mxu0 0.0
    %3350 = vmatpush1.msra.mxu0 0.0
    %3351 = vmatprep.subr.mxu0 0.0
    %3352 = vmatpush1.msra.mxu0 0.0
    %3353 = vmatprep.subr.mxu0 0.0
    %3354 = vmatpush1.msra.mxu0 0.0
    %3355 = vmatprep.subr.mxu0 0.0
    %3356 = vmatpush1.msra.mxu0 %v2907
    %3357 = vmatprep.subr.mxu0 0.0
    %3358 = vmatpush1.msra.mxu0 %v2906
    %3359 = vmatprep.subr.mxu0 0.0
    %3360 = vmatpush1.msra.mxu0 %v2905
    %3361 = vmatprep.subr.mxu0 0.0
    %3362 = vmatpush1.msra.mxu0 %v2904
    %3363 = vmatprep.subr.mxu0 0.0
    %3364 = vmatpush1.msra.mxu0 %v2903
    %3365 = vmatprep.subr.mxu0 0.0
    %3366 = vmatpush1.msra.mxu0 %v2902
    %3367 = vmatprep.subr.mxu0 0.0
    %3368 = vmatpush1.msra.mxu0 %v2901
    %3369 = vmatprep.subr.mxu0 0.0
    %3370 = vmatpush1.msra.mxu0 %v2900
    %3371 = vmatprep.subr.mxu0 0.0
    %3372 = vmatpush2.msra.mxu0 0.0
    %3373 = vmatprep.subr.mxu0 0.0
    %3374 = vmatpush2.msra.mxu0 0.0
    %3375 = vmatprep.subr.mxu0 0.0
    %3376 = vmatpush2.msra.mxu0 0.0
    %3377 = vmatprep.subr.mxu0 0.0
    %3378 = vmatpush2.msra.mxu0 0.0
    %3379 = vmatprep.subr.mxu0 0.0
    %3380 = vmatpush2.msra.mxu0 0.0
    %3381 = vmatprep.subr.mxu0 0.0
    %3382 = vmatpush2.msra.mxu0 0.0
    %3383 = vmatprep.subr.mxu0 0.0
    %3384 = vmatpush2.msra.mxu0 0.0
    %3385 = vmatprep.subr.mxu0 0.0
    %3386 = vmatpush2.msra.mxu0 0.0
    %3387 = vmatprep.subr.mxu0 0.0
    %3388 = vmatpush2.msra.mxu0 0.0
    %3389 = vmatprep.subr.mxu0 0.0
    %3390 = vmatpush2.msra.mxu0 0.0
    %3391 = vmatprep.subr.mxu0 0.0
    %3392 = vmatpush2.msra.mxu0 0.0
    %3393 = vmatprep.subr.mxu0 0.0
    %3394 = vmatpush2.msra.mxu0 0.0
    %3395 = vmatprep.subr.mxu0 0.0
    %3396 = vmatpush2.msra.mxu0 0.0
    %3397 = vmatprep.subr.mxu0 0.0
    %3398 = vmatpush2.msra.mxu0 0.0
    %3399 = vmatprep.subr.mxu0 0.0
    %3400 = vmatpush2.msra.mxu0 0.0
    %3401 = vmatprep.subr.mxu0 0.0
    %3402 = vmatpush2.msra.mxu0 0.0
    %3403 = vmatprep.mubr.f32.mxu0 0.0
    %3404 = vmatmul.mubr.f32.gmra.mxu0 %v3337
    %v3405 = vpop.f32.mrf.mxu0
    %v3406 = vadd.f32 0.0, %v3405
    %v3407 = vpop.f32.mrf.mxu0
    %3408 = vdwg.mxu0
    %v3410 = vsel %vm606, %v3257, 0
    %3412 = vmatprep.subr.mxu0 0.0
    %3413 = vmatpush1.msra.mxu0 0.0
    %3414 = vmatprep.subr.mxu0 0.0
    %3415 = vmatpush1.msra.mxu0 0.0
    %3416 = vmatprep.subr.mxu0 0.0
    %3417 = vmatpush1.msra.mxu0 0.0
    %3418 = vmatprep.subr.mxu0 0.0
    %3419 = vmatpush1.msra.mxu0 0.0
    %3420 = vmatprep.subr.mxu0 0.0
    %3421 = vmatpush1.msra.mxu0 0.0
    %3422 = vmatprep.subr.mxu0 0.0
    %3423 = vmatpush1.msra.mxu0 0.0
    %3424 = vmatprep.subr.mxu0 0.0
    %3425 = vmatpush1.msra.mxu0 0.0
    %3426 = vmatprep.subr.mxu0 0.0
    %3427 = vmatpush1.msra.mxu0 0.0
    %3428 = vmatprep.subr.mxu0 0.0
    %3429 = vmatpush1.msra.mxu0 %v2915
    %3430 = vmatprep.subr.mxu0 0.0
    %3431 = vmatpush1.msra.mxu0 %v2914
    %3432 = vmatprep.subr.mxu0 0.0
    %3433 = vmatpush1.msra.mxu0 %v2913
    %3434 = vmatprep.subr.mxu0 0.0
    %3435 = vmatpush1.msra.mxu0 %v2912
    %3436 = vmatprep.subr.mxu0 0.0
    %3437 = vmatpush1.msra.mxu0 %v2911
    %3438 = vmatprep.subr.mxu0 0.0
    %3439 = vmatpush1.msra.mxu0 %v2910
    %3440 = vmatprep.subr.mxu0 0.0
    %3441 = vmatpush1.msra.mxu0 %v2909
    %3442 = vmatprep.subr.mxu0 0.0
    %3443 = vmatpush1.msra.mxu0 %v2908
    %3444 = vmatprep.subr.mxu0 0.0
    %3445 = vmatpush2.msra.mxu0 0.0
    %3446 = vmatprep.subr.mxu0 0.0
    %3447 = vmatpush2.msra.mxu0 0.0
    %3448 = vmatprep.subr.mxu0 0.0
    %3449 = vmatpush2.msra.mxu0 0.0
    %3450 = vmatprep.subr.mxu0 0.0
    %3451 = vmatpush2.msra.mxu0 0.0
    %3452 = vmatprep.subr.mxu0 0.0
    %3453 = vmatpush2.msra.mxu0 0.0
    %3454 = vmatprep.subr.mxu0 0.0
    %3455 = vmatpush2.msra.mxu0 0.0
    %3456 = vmatprep.subr.mxu0 0.0
    %3457 = vmatpush2.msra.mxu0 0.0
    %3458 = vmatprep.subr.mxu0 0.0
    %3459 = vmatpush2.msra.mxu0 0.0
    %3460 = vmatprep.subr.mxu0 0.0
    %3461 = vmatpush2.msra.mxu0 0.0
    %3462 = vmatprep.subr.mxu0 0.0
    %3463 = vmatpush2.msra.mxu0 0.0
    %3464 = vmatprep.subr.mxu0 0.0
    %3465 = vmatpush2.msra.mxu0 0.0
    %3466 = vmatprep.subr.mxu0 0.0
    %3467 = vmatpush2.msra.mxu0 0.0
    %3468 = vmatprep.subr.mxu0 0.0
    %3469 = vmatpush2.msra.mxu0 0.0
    %3470 = vmatprep.subr.mxu0 0.0
    %3471 = vmatpush2.msra.mxu0 0.0
    %3472 = vmatprep.subr.mxu0 0.0
    %3473 = vmatpush2.msra.mxu0 0.0
    %3474 = vmatprep.subr.mxu0 0.0
    %3475 = vmatpush2.msra.mxu0 0.0
    %3476 = vmatprep.mubr.f32.mxu0 0.0
    %3477 = vmatmul.mubr.f32.gmra.mxu0 %v3410
    %v3478 = vpop.f32.mrf.mxu0
    %v3479 = vadd.f32 0.0, %v3478
    %v3480 = vpop.f32.mrf.mxu0
    %3481 = vdwg.mxu0
    %v3483 = vsel %vm606, %v3258, 0
    %3485 = vmatprep.subr.mxu0 0.0
    %3486 = vmatpush1.msra.mxu0 0.0
    %3487 = vmatprep.subr.mxu0 0.0
    %3488 = vmatpush1.msra.mxu0 0.0
    %3489 = vmatprep.subr.mxu0 0.0
    %3490 = vmatpush1.msra.mxu0 0.0
    %3491 = vmatprep.subr.mxu0 0.0
    %3492 = vmatpush1.msra.mxu0 0.0
    %3493 = vmatprep.subr.mxu0 0.0
    %3494 = vmatpush1.msra.mxu0 0.0
    %3495 = vmatprep.subr.mxu0 0.0
    %3496 = vmatpush1.msra.mxu0 0.0
    %3497 = vmatprep.subr.mxu0 0.0
    %3498 = vmatpush1.msra.mxu0 0.0
    %3499 = vmatprep.subr.mxu0 0.0
    %3500 = vmatpush1.msra.mxu0 0.0
    %3501 = vmatprep.subr.mxu0 0.0
    %3502 = vmatpush1.msra.mxu0 %v2923
    %3503 = vmatprep.subr.mxu0 0.0
    %3504 = vmatpush1.msra.mxu0 %v2922
    %3505 = vmatprep.subr.mxu0 0.0
    %3506 = vmatpush1.msra.mxu0 %v2921
    %3507 = vmatprep.subr.mxu0 0.0
    %3508 = vmatpush1.msra.mxu0 %v2920
    %3509 = vmatprep.subr.mxu0 0.0
    %3510 = vmatpush1.msra.mxu0 %v2919
    %3511 = vmatprep.subr.mxu0 0.0
    %3512 = vmatpush1.msra.mxu0 %v2918
    %3513 = vmatprep.subr.mxu0 0.0
    %3514 = vmatpush1.msra.mxu0 %v2917
    %3515 = vmatprep.subr.mxu0 0.0
    %3516 = vmatpush1.msra.mxu0 %v2916
    %3517 = vmatprep.subr.mxu0 0.0
    %3518 = vmatpush2.msra.mxu0 0.0
    %3519 = vmatprep.subr.mxu0 0.0
    %3520 = vmatpush2.msra.mxu0 0.0
    %3521 = vmatprep.subr.mxu0 0.0
    %3522 = vmatpush2.msra.mxu0 0.0
    %3523 = vmatprep.subr.mxu0 0.0
    %3524 = vmatpush2.msra.mxu0 0.0
    %3525 = vmatprep.subr.mxu0 0.0
    %3526 = vmatpush2.msra.mxu0 0.0
    %3527 = vmatprep.subr.mxu0 0.0
    %3528 = vmatpush2.msra.mxu0 0.0
    %3529 = vmatprep.subr.mxu0 0.0
    %3530 = vmatpush2.msra.mxu0 0.0
    %3531 = vmatprep.subr.mxu0 0.0
    %3532 = vmatpush2.msra.mxu0 0.0
    %3533 = vmatprep.subr.mxu0 0.0
    %3534 = vmatpush2.msra.mxu0 0.0
    %3535 = vmatprep.subr.mxu0 0.0
    %3536 = vmatpush2.msra.mxu0 0.0
    %3537 = vmatprep.subr.mxu0 0.0
    %3538 = vmatpush2.msra.mxu0 0.0
    %3539 = vmatprep.subr.mxu0 0.0
    %3540 = vmatpush2.msra.mxu0 0.0
    %3541 = vmatprep.subr.mxu0 0.0
    %3542 = vmatpush2.msra.mxu0 0.0
    %3543 = vmatprep.subr.mxu0 0.0
    %3544 = vmatpush2.msra.mxu0 0.0
    %3545 = vmatprep.subr.mxu0 0.0
    %3546 = vmatpush2.msra.mxu0 0.0
    %3547 = vmatprep.subr.mxu0 0.0
    %3548 = vmatpush2.msra.mxu0 0.0
    %3549 = vmatprep.mubr.f32.mxu0 0.0
    %3550 = vmatmul.mubr.f32.gmra.mxu0 %v3483
    %v3551 = vpop.f32.mrf.mxu0
    %v3552 = vadd.f32 0.0, %v3551
    %v3553 = vpop.f32.mrf.mxu0
    %3554 = vdwg.mxu0
    %v3556 = vsel %vm606, %v3259, 0
    %3558 = vmatprep.subr.mxu0 0.0
    %3559 = vmatpush1.msra.mxu0 0.0
    %3560 = vmatprep.subr.mxu0 0.0
    %3561 = vmatpush1.msra.mxu0 0.0
    %3562 = vmatprep.subr.mxu0 0.0
    %3563 = vmatpush1.msra.mxu0 0.0
    %3564 = vmatprep.subr.mxu0 0.0
    %3565 = vmatpush1.msra.mxu0 0.0
    %3566 = vmatprep.subr.mxu0 0.0
    %3567 = vmatpush1.msra.mxu0 0.0
    %3568 = vmatprep.subr.mxu0 0.0
    %3569 = vmatpush1.msra.mxu0 0.0
    %3570 = vmatprep.subr.mxu0 0.0
    %3571 = vmatpush1.msra.mxu0 0.0
    %3572 = vmatprep.subr.mxu0 0.0
    %3573 = vmatpush1.msra.mxu0 0.0
    %3574 = vmatprep.subr.mxu0 0.0
    %3575 = vmatpush1.msra.mxu0 %v2931
    %3576 = vmatprep.subr.mxu0 0.0
    %3577 = vmatpush1.msra.mxu0 %v2930
    %3578 = vmatprep.subr.mxu0 0.0
    %3579 = vmatpush1.msra.mxu0 %v2929
    %3580 = vmatprep.subr.mxu0 0.0
    %3581 = vmatpush1.msra.mxu0 %v2928
    %3582 = vmatprep.subr.mxu0 0.0
    %3583 = vmatpush1.msra.mxu0 %v2927
    %3584 = vmatprep.subr.mxu0 0.0
    %3585 = vmatpush1.msra.mxu0 %v2926
    %3586 = vmatprep.subr.mxu0 0.0
    %3587 = vmatpush1.msra.mxu0 %v2925
    %3588 = vmatprep.subr.mxu0 0.0
    %3589 = vmatpush1.msra.mxu0 %v2924
    %3590 = vmatprep.subr.mxu0 0.0
    %3591 = vmatpush2.msra.mxu0 0.0
    %3592 = vmatprep.subr.mxu0 0.0
    %3593 = vmatpush2.msra.mxu0 0.0
    %3594 = vmatprep.subr.mxu0 0.0
    %3595 = vmatpush2.msra.mxu0 0.0
    %3596 = vmatprep.subr.mxu0 0.0
    %3597 = vmatpush2.msra.mxu0 0.0
    %3598 = vmatprep.subr.mxu0 0.0
    %3599 = vmatpush2.msra.mxu0 0.0
    %3600 = vmatprep.subr.mxu0 0.0
    %3601 = vmatpush2.msra.mxu0 0.0
    %3602 = vmatprep.subr.mxu0 0.0
    %3603 = vmatpush2.msra.mxu0 0.0
    %3604 = vmatprep.subr.mxu0 0.0
    %3605 = vmatpush2.msra.mxu0 0.0
    %3606 = vmatprep.subr.mxu0 0.0
    %3607 = vmatpush2.msra.mxu0 0.0
    %3608 = vmatprep.subr.mxu0 0.0
    %3609 = vmatpush2.msra.mxu0 0.0
    %3610 = vmatprep.subr.mxu0 0.0
    %3611 = vmatpush2.msra.mxu0 0.0
    %3612 = vmatprep.subr.mxu0 0.0
    %3613 = vmatpush2.msra.mxu0 0.0
    %3614 = vmatprep.subr.mxu0 0.0
    %3615 = vmatpush2.msra.mxu0 0.0
    %3616 = vmatprep.subr.mxu0 0.0
    %3617 = vmatpush2.msra.mxu0 0.0
    %3618 = vmatprep.subr.mxu0 0.0
    %3619 = vmatpush2.msra.mxu0 0.0
    %3620 = vmatprep.subr.mxu0 0.0
    %3621 = vmatpush2.msra.mxu0 0.0
    %3622 = vmatprep.mubr.f32.mxu0 0.0
    %3623 = vmatmul.mubr.f32.gmra.mxu0 %v3556
    %v3624 = vpop.f32.mrf.mxu0
    %v3625 = vadd.f32 0.0, %v3624
    %v3626 = vpop.f32.mrf.mxu0
    %3627 = vdwg.mxu0
    %v3629 = vsel %vm606, %v3260, 0
    %3631 = vmatprep.subr.mxu0 0.0
    %3632 = vmatpush1.msra.mxu0 0.0
    %3633 = vmatprep.subr.mxu0 0.0
    %3634 = vmatpush1.msra.mxu0 0.0
    %3635 = vmatprep.subr.mxu0 0.0
    %3636 = vmatpush1.msra.mxu0 0.0
    %3637 = vmatprep.subr.mxu0 0.0
    %3638 = vmatpush1.msra.mxu0 0.0
    %3639 = vmatprep.subr.mxu0 0.0
    %3640 = vmatpush1.msra.mxu0 0.0
    %3641 = vmatprep.subr.mxu0 0.0
    %3642 = vmatpush1.msra.mxu0 0.0
    %3643 = vmatprep.subr.mxu0 0.0
    %3644 = vmatpush1.msra.mxu0 0.0
    %3645 = vmatprep.subr.mxu0 0.0
    %3646 = vmatpush1.msra.mxu0 0.0
    %3647 = vmatprep.subr.mxu0 0.0
    %3648 = vmatpush1.msra.mxu0 %v2939
    %3649 = vmatprep.subr.mxu0 0.0
    %3650 = vmatpush1.msra.mxu0 %v2938
    %3651 = vmatprep.subr.mxu0 0.0
    %3652 = vmatpush1.msra.mxu0 %v2937
    %3653 = vmatprep.subr.mxu0 0.0
    %3654 = vmatpush1.msra.mxu0 %v2936
    %3655 = vmatprep.subr.mxu0 0.0
    %3656 = vmatpush1.msra.mxu0 %v2935
    %3657 = vmatprep.subr.mxu0 0.0
    %3658 = vmatpush1.msra.mxu0 %v2934
    %3659 = vmatprep.subr.mxu0 0.0
    %3660 = vmatpush1.msra.mxu0 %v2933
    %3661 = vmatprep.subr.mxu0 0.0
    %3662 = vmatpush1.msra.mxu0 %v2932
    %3663 = vmatprep.subr.mxu0 0.0
    %3664 = vmatpush2.msra.mxu0 0.0
    %3665 = vmatprep.subr.mxu0 0.0
    %3666 = vmatpush2.msra.mxu0 0.0
    %3667 = vmatprep.subr.mxu0 0.0
    %3668 = vmatpush2.msra.mxu0 0.0
    %3669 = vmatprep.subr.mxu0 0.0
    %3670 = vmatpush2.msra.mxu0 0.0
    %3671 = vmatprep.subr.mxu0 0.0
    %3672 = vmatpush2.msra.mxu0 0.0
    %3673 = vmatprep.subr.mxu0 0.0
    %3674 = vmatpush2.msra.mxu0 0.0
    %3675 = vmatprep.subr.mxu0 0.0
    %3676 = vmatpush2.msra.mxu0 0.0
    %3677 = vmatprep.subr.mxu0 0.0
    %3678 = vmatpush2.msra.mxu0 0.0
    %3679 = vmatprep.subr.mxu0 0.0
    %3680 = vmatpush2.msra.mxu0 0.0
    %3681 = vmatprep.subr.mxu0 0.0
    %3682 = vmatpush2.msra.mxu0 0.0
    %3683 = vmatprep.subr.mxu0 0.0
    %3684 = vmatpush2.msra.mxu0 0.0
    %3685 = vmatprep.subr.mxu0 0.0
    %3686 = vmatpush2.msra.mxu0 0.0
    %3687 = vmatprep.subr.mxu0 0.0
    %3688 = vmatpush2.msra.mxu0 0.0
    %3689 = vmatprep.subr.mxu0 0.0
    %3690 = vmatpush2.msra.mxu0 0.0
    %3691 = vmatprep.subr.mxu0 0.0
    %3692 = vmatpush2.msra.mxu0 0.0
    %3693 = vmatprep.subr.mxu0 0.0
    %3694 = vmatpush2.msra.mxu0 0.0
    %3695 = vmatprep.mubr.f32.mxu0 0.0
    %3696 = vmatmul.mubr.f32.gmra.mxu0 %v3629
    %v3697 = vpop.f32.mrf.mxu0
    %v3698 = vadd.f32 0.0, %v3697
    %v3699 = vpop.f32.mrf.mxu0
    %3700 = vdwg.mxu0
    %v3702 = vsel %vm606, %v3261, 0
    %3704 = vmatprep.subr.mxu0 0.0
    %3705 = vmatpush1.msra.mxu0 0.0
    %3706 = vmatprep.subr.mxu0 0.0
    %3707 = vmatpush1.msra.mxu0 0.0
    %3708 = vmatprep.subr.mxu0 0.0
    %3709 = vmatpush1.msra.mxu0 0.0
    %3710 = vmatprep.subr.mxu0 0.0
    %3711 = vmatpush1.msra.mxu0 0.0
    %3712 = vmatprep.subr.mxu0 0.0
    %3713 = vmatpush1.msra.mxu0 0.0
    %3714 = vmatprep.subr.mxu0 0.0
    %3715 = vmatpush1.msra.mxu0 0.0
    %3716 = vmatprep.subr.mxu0 0.0
    %3717 = vmatpush1.msra.mxu0 0.0
    %3718 = vmatprep.subr.mxu0 0.0
    %3719 = vmatpush1.msra.mxu0 0.0
    %3720 = vmatprep.subr.mxu0 0.0
    %3721 = vmatpush1.msra.mxu0 %v2947
    %3722 = vmatprep.subr.mxu0 0.0
    %3723 = vmatpush1.msra.mxu0 %v2946
    %3724 = vmatprep.subr.mxu0 0.0
    %3725 = vmatpush1.msra.mxu0 %v2945
    %3726 = vmatprep.subr.mxu0 0.0
    %3727 = vmatpush1.msra.mxu0 %v2944
    %3728 = vmatprep.subr.mxu0 0.0
    %3729 = vmatpush1.msra.mxu0 %v2943
    %3730 = vmatprep.subr.mxu0 0.0
    %3731 = vmatpush1.msra.mxu0 %v2942
    %3732 = vmatprep.subr.mxu0 0.0
    %3733 = vmatpush1.msra.mxu0 %v2941
    %3734 = vmatprep.subr.mxu0 0.0
    %3735 = vmatpush1.msra.mxu0 %v2940
    %3736 = vmatprep.subr.mxu0 0.0
    %3737 = vmatpush2.msra.mxu0 0.0
    %3738 = vmatprep.subr.mxu0 0.0
    %3739 = vmatpush2.msra.mxu0 0.0
    %3740 = vmatprep.subr.mxu0 0.0
    %3741 = vmatpush2.msra.mxu0 0.0
    %3742 = vmatprep.subr.mxu0 0.0
    %3743 = vmatpush2.msra.mxu0 0.0
    %3744 = vmatprep.subr.mxu0 0.0
    %3745 = vmatpush2.msra.mxu0 0.0
    %3746 = vmatprep.subr.mxu0 0.0
    %3747 = vmatpush2.msra.mxu0 0.0
    %3748 = vmatprep.subr.mxu0 0.0
    %3749 = vmatpush2.msra.mxu0 0.0
    %3750 = vmatprep.subr.mxu0 0.0
    %3751 = vmatpush2.msra.mxu0 0.0
    %3752 = vmatprep.subr.mxu0 0.0
    %3753 = vmatpush2.msra.mxu0 0.0
    %3754 = vmatprep.subr.mxu0 0.0
    %3755 = vmatpush2.msra.mxu0 0.0
    %3756 = vmatprep.subr.mxu0 0.0
    %3757 = vmatpush2.msra.mxu0 0.0
    %3758 = vmatprep.subr.mxu0 0.0
    %3759 = vmatpush2.msra.mxu0 0.0
    %3760 = vmatprep.subr.mxu0 0.0
    %3761 = vmatpush2.msra.mxu0 0.0
    %3762 = vmatprep.subr.mxu0 0.0
    %3763 = vmatpush2.msra.mxu0 0.0
    %3764 = vmatprep.subr.mxu0 0.0
    %3765 = vmatpush2.msra.mxu0 0.0
    %3766 = vmatprep.subr.mxu0 0.0
    %3767 = vmatpush2.msra.mxu0 0.0
    %3768 = vmatprep.mubr.f32.mxu0 0.0
    %3769 = vmatmul.mubr.f32.gmra.mxu0 %v3702
    %v3770 = vpop.f32.mrf.mxu0
    %v3771 = vadd.f32 0.0, %v3770
    %v3772 = vpop.f32.mrf.mxu0
    %3773 = vdwg.mxu0
    %v3775 = vsel %vm606, %v3262, 0
    %3777 = vmatprep.subr.mxu0 0.0
    %3778 = vmatpush1.msra.mxu0 0.0
    %3779 = vmatprep.subr.mxu0 0.0
    %3780 = vmatpush1.msra.mxu0 0.0
    %3781 = vmatprep.subr.mxu0 0.0
    %3782 = vmatpush1.msra.mxu0 0.0
    %3783 = vmatprep.subr.mxu0 0.0
    %3784 = vmatpush1.msra.mxu0 0.0
    %3785 = vmatprep.subr.mxu0 0.0
    %3786 = vmatpush1.msra.mxu0 0.0
    %3787 = vmatprep.subr.mxu0 0.0
    %3788 = vmatpush1.msra.mxu0 0.0
    %3789 = vmatprep.subr.mxu0 0.0
    %3790 = vmatpush1.msra.mxu0 0.0
    %3791 = vmatprep.subr.mxu0 0.0
    %3792 = vmatpush1.msra.mxu0 0.0
    %3793 = vmatprep.subr.mxu0 0.0
    %3794 = vmatpush1.msra.mxu0 %v2955
    %3795 = vmatprep.subr.mxu0 0.0
    %3796 = vmatpush1.msra.mxu0 %v2954
    %3797 = vmatprep.subr.mxu0 0.0
    %3798 = vmatpush1.msra.mxu0 %v2953
    %3799 = vmatprep.subr.mxu0 0.0
    %3800 = vmatpush1.msra.mxu0 %v2952
    %3801 = vmatprep.subr.mxu0 0.0
    %3802 = vmatpush1.msra.mxu0 %v2951
    %3803 = vmatprep.subr.mxu0 0.0
    %3804 = vmatpush1.msra.mxu0 %v2950
    %3805 = vmatprep.subr.mxu0 0.0
    %3806 = vmatpush1.msra.mxu0 %v2949
    %3807 = vmatprep.subr.mxu0 0.0
    %3808 = vmatpush1.msra.mxu0 %v2948
    %3809 = vmatprep.subr.mxu0 0.0
    %3810 = vmatpush2.msra.mxu0 0.0
    %3811 = vmatprep.subr.mxu0 0.0
    %3812 = vmatpush2.msra.mxu0 0.0
    %3813 = vmatprep.subr.mxu0 0.0
    %3814 = vmatpush2.msra.mxu0 0.0
    %3815 = vmatprep.subr.mxu0 0.0
    %3816 = vmatpush2.msra.mxu0 0.0
    %3817 = vmatprep.subr.mxu0 0.0
    %3818 = vmatpush2.msra.mxu0 0.0
    %3819 = vmatprep.subr.mxu0 0.0
    %3820 = vmatpush2.msra.mxu0 0.0
    %3821 = vmatprep.subr.mxu0 0.0
    %3822 = vmatpush2.msra.mxu0 0.0
    %3823 = vmatprep.subr.mxu0 0.0
    %3824 = vmatpush2.msra.mxu0 0.0
    %3825 = vmatprep.subr.mxu0 0.0
    %3826 = vmatpush2.msra.mxu0 0.0
    %3827 = vmatprep.subr.mxu0 0.0
    %3828 = vmatpush2.msra.mxu0 0.0
    %3829 = vmatprep.subr.mxu0 0.0
    %3830 = vmatpush2.msra.mxu0 0.0
    %3831 = vmatprep.subr.mxu0 0.0
    %3832 = vmatpush2.msra.mxu0 0.0
    %3833 = vmatprep.subr.mxu0 0.0
    %3834 = vmatpush2.msra.mxu0 0.0
    %3835 = vmatprep.subr.mxu0 0.0
    %3836 = vmatpush2.msra.mxu0 0.0
    %3837 = vmatprep.subr.mxu0 0.0
    %3838 = vmatpush2.msra.mxu0 0.0
    %3839 = vmatprep.subr.mxu0 0.0
    %3840 = vmatpush2.msra.mxu0 0.0
    %3841 = vmatprep.mubr.f32.mxu0 0.0
    %3842 = vmatmul.mubr.f32.gmra.mxu0 %v3775
    %v3843 = vpop.f32.mrf.mxu0
    %v3844 = vadd.f32 0.0, %v3843
    %v3845 = vpop.f32.mrf.mxu0
    %3846 = vdwg.mxu0
    %3847 = vst.msk [vmem:[#allocation3] sm:$0x3] %vm1191, %v3333
    %3848 = vst.msk [vmem:[#allocation3 + $0x2] sm:$0x3] %vm1191, %v3406
    %3849 = vst.msk [vmem:[#allocation3 + $0x4] sm:$0x3] %vm1191, %v3479
    %3850 = vst.msk [vmem:[#allocation3 + $0x6] sm:$0x3] %vm1191, %v3552
    %3851 = vst.msk [vmem:[#allocation3 + $0x8] sm:$0x3] %vm1191, %v3625
    %3852 = vst.msk [vmem:[#allocation3 + $0xa] sm:$0x3] %vm1191, %v3698
    %3853 = vst.msk [vmem:[#allocation3 + $0xc] sm:$0x3] %vm1191, %v3771
    %3854 = vst.msk [vmem:[#allocation3 + $0xe] sm:$0x3] %vm1191, %v3844
    %v3856 = vlaneseq
    %v3857 = vshrl.u32 %v3856, 7
    %v3858 = vsub.s32 0, %v3857
    %v3859 = vrot.slane %v2962, %v3858
    %v3862 = vsel %vm383, %v2887, 0
    %v3865 = vsel %vm383, %v2888, 0
    %v3868 = vsel %vm383, %v2889, 0
    %v3871 = vsel %vm383, %v2890, 0
    %3873 = vmatprep.subr.mxu0 0.0
    %3874 = vmatpush1.msra.mxu0 0.0
    %3875 = vmatprep.subr.mxu0 0.0
    %3876 = vmatpush1.msra.mxu0 0.0
    %3877 = vmatprep.subr.mxu0 0.0
    %3878 = vmatpush1.msra.mxu0 0.0
    %3879 = vmatprep.subr.mxu0 0.0
    %3880 = vmatpush1.msra.mxu0 0.0
    %3881 = vmatprep.subr.mxu0 0.0
    %3882 = vmatpush1.msra.mxu0 0.0
    %3883 = vmatprep.subr.mxu0 0.0
    %3884 = vmatpush1.msra.mxu0 0.0
    %3885 = vmatprep.subr.mxu0 0.0
    %3886 = vmatpush1.msra.mxu0 0.0
    %3887 = vmatprep.subr.mxu0 0.0
    %3888 = vmatpush1.msra.mxu0 0.0
    %3889 = vmatprep.subr.mxu0 0.0
    %3890 = vmatpush1.msra.mxu0 0.0
    %3891 = vmatprep.subr.mxu0 0.0
    %3892 = vmatpush1.msra.mxu0 0.0
    %3893 = vmatprep.subr.mxu0 0.0
    %3894 = vmatpush1.msra.mxu0 0.0
    %3895 = vmatprep.subr.mxu0 0.0
    %3896 = vmatpush1.msra.mxu0 0.0
    %3897 = vmatprep.subr.mxu0 0.0
    %3898 = vmatpush1.msra.mxu0 %v2960
    %3899 = vmatprep.subr.mxu0 0.0
    %3900 = vmatpush1.msra.mxu0 %v2959
    %3901 = vmatprep.subr.mxu0 0.0
    %3902 = vmatpush1.msra.mxu0 %v2958
    %3903 = vmatprep.subr.mxu0 0.0
    %3904 = vmatpush1.msra.mxu0 %v2957
    %3905 = vmatprep.subr.mxu0 0.0
    %3906 = vmatpush2.msra.mxu0 0.0
    %3907 = vmatprep.subr.mxu0 0.0
    %3908 = vmatpush2.msra.mxu0 0.0
    %3909 = vmatprep.subr.mxu0 0.0
    %3910 = vmatpush2.msra.mxu0 0.0
    %3911 = vmatprep.subr.mxu0 0.0
    %3912 = vmatpush2.msra.mxu0 0.0
    %3913 = vmatprep.subr.mxu0 0.0
    %3914 = vmatpush2.msra.mxu0 0.0
    %3915 = vmatprep.subr.mxu0 0.0
    %3916 = vmatpush2.msra.mxu0 0.0
    %3917 = vmatprep.subr.mxu0 0.0
    %3918 = vmatpush2.msra.mxu0 0.0
    %3919 = vmatprep.subr.mxu0 0.0
    %3920 = vmatpush2.msra.mxu0 0.0
    %3921 = vmatprep.subr.mxu0 0.0
    %3922 = vmatpush2.msra.mxu0 0.0
    %3923 = vmatprep.subr.mxu0 0.0
    %3924 = vmatpush2.msra.mxu0 0.0
    %3925 = vmatprep.subr.mxu0 0.0
    %3926 = vmatpush2.msra.mxu0 0.0
    %3927 = vmatprep.subr.mxu0 0.0
    %3928 = vmatpush2.msra.mxu0 0.0
    %3929 = vmatprep.subr.mxu0 0.0
    %3930 = vmatpush2.msra.mxu0 0.0
    %3931 = vmatprep.subr.mxu0 0.0
    %3932 = vmatpush2.msra.mxu0 0.0
    %3933 = vmatprep.subr.mxu0 0.0
    %3934 = vmatpush2.msra.mxu0 0.0
    %3935 = vmatprep.subr.mxu0 0.0
    %3936 = vmatpush2.msra.mxu0 0.0
    %3937 = vmatprep.mubr.f32.mxu0 0.0
    %3938 = vmatmul.mubr.f32.gmra.mxu0 %v3862
    %v3939 = vpop.f32.mrf.mxu0
    %v3940 = vadd.f32 %v3859, %v3939
    %v3941 = vpop.f32.mrf.mxu0
    %3942 = vmatprep.mubr.f32.mxu0 0.0
    %3943 = vmatmul.mubr.f32.gmra.mxu0 %v3865
    %v3944 = vpop.f32.mrf.mxu0
    %v3945 = vadd.f32 %v3859, %v3944
    %v3946 = vpop.f32.mrf.mxu0
    %3947 = vmatprep.mubr.f32.mxu0 0.0
    %3948 = vmatmul.mubr.f32.gmra.mxu0 %v3868
    %v3949 = vpop.f32.mrf.mxu0
    %v3950 = vadd.f32 %v3859, %v3949
    %v3951 = vpop.f32.mrf.mxu0
    %3952 = vmatprep.mubr.f32.mxu0 0.0
    %3953 = vmatmul.mubr.f32.gmra.mxu0 %v3871
    %v3954 = vpop.f32.mrf.mxu0
    %v3955 = vadd.f32 %v3859, %v3954
    %v3956 = vpop.f32.mrf.mxu0
    %3957 = vdwg.mxu0
    %v3958 = vld [vmem:[#allocation3] sm:$0x1]
    %v3959 = vld [vmem:[#allocation3 + $0x2] sm:$0x1]
    %v3960 = vld [vmem:[#allocation3 + $0x4] sm:$0x1]
    %v3961 = vld [vmem:[#allocation3 + $0x6] sm:$0x1]
    %v3962 = vld [vmem:[#allocation3 + $0x8] sm:$0x1]
    %v3963 = vld [vmem:[#allocation3 + $0xa] sm:$0x1]
    %v3964 = vld [vmem:[#allocation3 + $0xc] sm:$0x1]
    %v3965 = vld [vmem:[#allocation3 + $0xe] sm:$0x1]
    %v3974 = vrot.slane %v3959, 7
    %v3975 = vsel %vm1320, %v3974, %v3958
    %v3976 = vrot.slane %v3960, 6
    %v3977 = vsel %vm1323, %v3976, %v3975
    %v3978 = vrot.slane %v3961, 5
    %v3979 = vsel %vm1326, %v3978, %v3977
    %v3980 = vrot.slane %v3962, 4
    %v3981 = vsel %vm1329, %v3980, %v3979
    %v3982 = vrot.slane %v3963, 3
    %v3983 = vsel %vm1332, %v3982, %v3981
    %v3984 = vrot.slane %v3964, 2
    %v3985 = vsel %vm1335, %v3984, %v3983
    %v3986 = vrot.slane %v3965, 1
    %v3987 = vsel %vm1338, %v3986, %v3985
    %3989 = vrot.lane.b32.xlu0 %v3987, 96
    %v3990 = vpop.permute.xlu0 %3989
    %3992 = vmatprep.subr.mxu0 0.0
    %3993 = vmatpush1.msra.mxu0 0.0
    %3994 = vmatprep.subr.mxu0 0.0
    %3995 = vmatpush1.msra.mxu0 0.0
    %3996 = vmatprep.subr.mxu0 0.0
    %3997 = vmatpush1.msra.mxu0 0.0
    %3998 = vmatprep.subr.mxu0 0.0
    %3999 = vmatpush1.msra.mxu0 0.0
    %4000 = vmatprep.subr.mxu0 0.0
    %4001 = vmatpush1.msra.mxu0 0.0
    %4002 = vmatprep.subr.mxu0 0.0
    %4003 = vmatpush1.msra.mxu0 0.0
    %4004 = vmatprep.subr.mxu0 0.0
    %4005 = vmatpush1.msra.mxu0 0.0
    %4006 = vmatprep.subr.mxu0 0.0
    %4007 = vmatpush1.msra.mxu0 0.0
    %4008 = vmatprep.subr.mxu0 0.0
    %4009 = vmatpush1.msra.mxu0 0.0
    %4010 = vmatprep.subr.mxu0 0.0
    %4011 = vmatpush1.msra.mxu0 0.0
    %4012 = vmatprep.subr.mxu0 0.0
    %4013 = vmatpush1.msra.mxu0 0.0
    %4014 = vmatprep.subr.mxu0 0.0
    %4015 = vmatpush1.msra.mxu0 0.0
    %4016 = vmatprep.subr.mxu0 0.0
    %4017 = vmatpush1.msra.mxu0 0.0
    %4018 = vmatprep.subr.mxu0 0.0
    %4019 = vmatpush1.msra.mxu0 0.0
    %4020 = vmatprep.subr.mxu0 0.0
    %4021 = vmatpush1.msra.mxu0 %v3990
    %4022 = vmatprep.subr.mxu0 0.0
    %4023 = vmatpush1.msra.mxu0 %v3987
    %4024 = vmatprep.subr.mxu0 0.0
    %4025 = vmatpush2.msra.mxu0 0.0
    %4026 = vmatprep.subr.mxu0 0.0
    %4027 = vmatpush2.msra.mxu0 0.0
    %4028 = vmatprep.subr.mxu0 0.0
    %4029 = vmatpush2.msra.mxu0 0.0
    %4030 = vmatprep.subr.mxu0 0.0
    %4031 = vmatpush2.msra.mxu0 0.0
    %4032 = vmatprep.subr.mxu0 0.0
    %4033 = vmatpush2.msra.mxu0 0.0
    %4034 = vmatprep.subr.mxu0 0.0
    %4035 = vmatpush2.msra.mxu0 0.0
    %4036 = vmatprep.subr.mxu0 0.0
    %4037 = vmatpush2.msra.mxu0 0.0
    %4038 = vmatprep.subr.mxu0 0.0
    %4039 = vmatpush2.msra.mxu0 0.0
    %4040 = vmatprep.subr.mxu0 0.0
    %4041 = vmatpush2.msra.mxu0 0.0
    %4042 = vmatprep.subr.mxu0 0.0
    %4043 = vmatpush2.msra.mxu0 0.0
    %4044 = vmatprep.subr.mxu0 0.0
    %4045 = vmatpush2.msra.mxu0 0.0
    %4046 = vmatprep.subr.mxu0 0.0
    %4047 = vmatpush2.msra.mxu0 0.0
    %4048 = vmatprep.subr.mxu0 0.0
    %4049 = vmatpush2.msra.mxu0 0.0
    %4050 = vmatprep.subr.mxu0 0.0
    %4051 = vmatpush2.msra.mxu0 0.0
    %4052 = vmatprep.subr.mxu0 0.0
    %4053 = vmatpush2.msra.mxu0 0.0
    %4054 = vmatprep.subr.mxu0 0.0
    %4055 = vmatpush2.msra.mxu0 0.0
    %4056 = vmatprep.mubr.f32.mxu0 0.0
    %4057 = vmatmul.mubr.f32.gmra.mxu0 %v1345
    %v4058 = vpop.f32.mrf.mxu0
    %v4059 = vadd.f32 %v3940, %v4058
    %v4060 = vpop.f32.mrf.mxu0
    %4061 = vmatprep.mubr.f32.mxu0 0.0
    %4062 = vmatmul.mubr.f32.gmra.mxu0 %v1348
    %v4063 = vpop.f32.mrf.mxu0
    %v4064 = vadd.f32 %v3945, %v4063
    %v4065 = vpop.f32.mrf.mxu0
    %4066 = vdwg.mxu0
    %v4067 = vld [vmem:[#allocation3 + $0x1] sm:$0x1]
    %v4068 = vld [vmem:[#allocation3 + $0x3] sm:$0x1]
    %v4069 = vld [vmem:[#allocation3 + $0x5] sm:$0x1]
    %v4070 = vld [vmem:[#allocation3 + $0x7] sm:$0x1]
    %v4071 = vld [vmem:[#allocation3 + $0x9] sm:$0x1]
    %v4072 = vld [vmem:[#allocation3 + $0xb] sm:$0x1]
    %v4073 = vld [vmem:[#allocation3 + $0xd] sm:$0x1]
    %v4074 = vld [vmem:[#allocation3 + $0xf] sm:$0x1]
    %v4083 = vrot.slane %v4068, 7
    %v4084 = vsel %vm1320, %v4083, %v4067
    %v4085 = vrot.slane %v4069, 6
    %v4086 = vsel %vm1323, %v4085, %v4084
    %v4087 = vrot.slane %v4070, 5
    %v4088 = vsel %vm1326, %v4087, %v4086
    %v4089 = vrot.slane %v4071, 4
    %v4090 = vsel %vm1329, %v4089, %v4088
    %v4091 = vrot.slane %v4072, 3
    %v4092 = vsel %vm1332, %v4091, %v4090
    %v4093 = vrot.slane %v4073, 2
    %v4094 = vsel %vm1335, %v4093, %v4092
    %v4095 = vrot.slane %v4074, 1
    %v4096 = vsel %vm1338, %v4095, %v4094
    %4098 = vrot.lane.b32.xlu0 %v4096, 96
    %v4099 = vpop.permute.xlu0 %4098
    %4101 = vmatprep.subr.mxu0 0.0
    %4102 = vmatpush1.msra.mxu0 0.0
    %4103 = vmatprep.subr.mxu0 0.0
    %4104 = vmatpush1.msra.mxu0 0.0
    %4105 = vmatprep.subr.mxu0 0.0
    %4106 = vmatpush1.msra.mxu0 0.0
    %4107 = vmatprep.subr.mxu0 0.0
    %4108 = vmatpush1.msra.mxu0 0.0
    %4109 = vmatprep.subr.mxu0 0.0
    %4110 = vmatpush1.msra.mxu0 0.0
    %4111 = vmatprep.subr.mxu0 0.0
    %4112 = vmatpush1.msra.mxu0 0.0
    %4113 = vmatprep.subr.mxu0 0.0
    %4114 = vmatpush1.msra.mxu0 0.0
    %4115 = vmatprep.subr.mxu0 0.0
    %4116 = vmatpush1.msra.mxu0 0.0
    %4117 = vmatprep.subr.mxu0 0.0
    %4118 = vmatpush1.msra.mxu0 0.0
    %4119 = vmatprep.subr.mxu0 0.0
    %4120 = vmatpush1.msra.mxu0 0.0
    %4121 = vmatprep.subr.mxu0 0.0
    %4122 = vmatpush1.msra.mxu0 0.0
    %4123 = vmatprep.subr.mxu0 0.0
    %4124 = vmatpush1.msra.mxu0 0.0
    %4125 = vmatprep.subr.mxu0 0.0
    %4126 = vmatpush1.msra.mxu0 0.0
    %4127 = vmatprep.subr.mxu0 0.0
    %4128 = vmatpush1.msra.mxu0 0.0
    %4129 = vmatprep.subr.mxu0 0.0
    %4130 = vmatpush1.msra.mxu0 %v4099
    %4131 = vmatprep.subr.mxu0 0.0
    %4132 = vmatpush1.msra.mxu0 %v4096
    %4133 = vmatprep.subr.mxu0 0.0
    %4134 = vmatpush2.msra.mxu0 0.0
    %4135 = vmatprep.subr.mxu0 0.0
    %4136 = vmatpush2.msra.mxu0 0.0
    %4137 = vmatprep.subr.mxu0 0.0
    %4138 = vmatpush2.msra.mxu0 0.0
    %4139 = vmatprep.subr.mxu0 0.0
    %4140 = vmatpush2.msra.mxu0 0.0
    %4141 = vmatprep.subr.mxu0 0.0
    %4142 = vmatpush2.msra.mxu0 0.0
    %4143 = vmatprep.subr.mxu0 0.0
    %4144 = vmatpush2.msra.mxu0 0.0
    %4145 = vmatprep.subr.mxu0 0.0
    %4146 = vmatpush2.msra.mxu0 0.0
    %4147 = vmatprep.subr.mxu0 0.0
    %4148 = vmatpush2.msra.mxu0 0.0
    %4149 = vmatprep.subr.mxu0 0.0
    %4150 = vmatpush2.msra.mxu0 0.0
    %4151 = vmatprep.subr.mxu0 0.0
    %4152 = vmatpush2.msra.mxu0 0.0
    %4153 = vmatprep.subr.mxu0 0.0
    %4154 = vmatpush2.msra.mxu0 0.0
    %4155 = vmatprep.subr.mxu0 0.0
    %4156 = vmatpush2.msra.mxu0 0.0
    %4157 = vmatprep.subr.mxu0 0.0
    %4158 = vmatpush2.msra.mxu0 0.0
    %4159 = vmatprep.subr.mxu0 0.0
    %4160 = vmatpush2.msra.mxu0 0.0
    %4161 = vmatprep.subr.mxu0 0.0
    %4162 = vmatpush2.msra.mxu0 0.0
    %4163 = vmatprep.subr.mxu0 0.0
    %4164 = vmatpush2.msra.mxu0 0.0
    %4165 = vmatprep.mubr.f32.mxu0 0.0
    %4166 = vmatmul.mubr.f32.gmra.mxu0 %v1345
    %v4167 = vpop.f32.mrf.mxu0
    %v4168 = vadd.f32 %v3950, %v4167
    %v4169 = vpop.f32.mrf.mxu0
    %4170 = vmatprep.mubr.f32.mxu0 0.0
    %4171 = vmatmul.mubr.f32.gmra.mxu0 %v1348
    %v4172 = vpop.f32.mrf.mxu0
    %v4173 = vadd.f32 %v3955, %v4172
    %v4174 = vpop.f32.mrf.mxu0
    %4175 = vdwg.mxu0
    %v4176 = vmul.f32 %v4059, %v4059
    %v4177 = vmul.f32 %v4064, %v4064
    %v4178 = vmul.f32 %v4168, %v4168
    %v4179 = vmul.f32 %v4173, %v4173
    %v4180 = vmul.f32 %v4059, %v4176
    %v4181 = vmul.f32 %v4064, %v4177
    %v4182 = vmul.f32 %v4168, %v4178
    %v4183 = vmul.f32 %v4173, %v4179
    %v4184 = vmul.f32 %v4180, 0.044715
    %v4185 = vmul.f32 %v4181, 0.044715
    %v4186 = vmul.f32 %v4182, 0.044715
    %v4187 = vmul.f32 %v4183, 0.044715
    %v4188 = vadd.f32 %v4059, %v4184
    %v4189 = vadd.f32 %v4064, %v4185
    %v4190 = vadd.f32 %v4168, %v4186
    %v4191 = vadd.f32 %v4173, %v4187
    %v4192 = vmul.f32 %v4188, 0.7978846
    %v4193 = vmul.f32 %v4189, 0.7978846
    %v4194 = vmul.f32 %v4190, 0.7978846
    %v4195 = vmul.f32 %v4191, 0.7978846
    %v4196 = vtanh.pop %v4192
    %v4197 = vtanh.pop %v4193
    %v4198 = vtanh.pop %v4194
    %v4199 = vtanh.pop %v4195
    %v4200 = vadd.f32 %v4196, 1.0
    %v4201 = vadd.f32 %v4197, 1.0
    %v4202 = vadd.f32 %v4198, 1.0
    %v4203 = vadd.f32 %v4199, 1.0
    %v4204 = vmul.f32 %v4200, 0.5
    %v4205 = vmul.f32 %v4201, 0.5
    %v4206 = vmul.f32 %v4202, 0.5
    %v4207 = vmul.f32 %v4203, 0.5
    %v4208 = vmul.f32 %v4059, %v4204
    %v4209 = vmul.f32 %v4064, %v4205
    %v4210 = vmul.f32 %v4168, %v4206
    %v4211 = vmul.f32 %v4173, %v4207
    %s4212 = scalar_lea.vmem [#allocation10], 1536
    %v4213 = vld [vmem:[%s4212] sm:$0xff]
    %v4214 = vld [vmem:[%s4212 + $0x8] sm:$0xff]
    %v4215 = vld [vmem:[%s4212 + $0x10] sm:$0xff]
    %v4216 = vld [vmem:[%s4212 + $0x18] sm:$0xff]
    %v4217 = vld [vmem:[%s4212 + $0x20] sm:$0xff]
    %v4218 = vld [vmem:[%s4212 + $0x28] sm:$0xff]
    %v4219 = vld [vmem:[%s4212 + $0x30] sm:$0xff]
    %v4220 = vld [vmem:[%s4212 + $0x38] sm:$0xff]
    %v4221 = vld [vmem:[%s4212 + $0x40] sm:$0xff]
    %v4222 = vld [vmem:[%s4212 + $0x48] sm:$0xff]
    %v4223 = vld [vmem:[%s4212 + $0x50] sm:$0xff]
    %v4224 = vld [vmem:[%s4212 + $0x58] sm:$0xff]
    %v4225 = vld [vmem:[%s4212 + $0x60] sm:$0xff]
    %v4226 = vld [vmem:[%s4212 + $0x68] sm:$0xff]
    %v4227 = vld [vmem:[%s4212 + $0x70] sm:$0xff]
    %v4228 = vld [vmem:[%s4212 + $0x78] sm:$0xff]
    %v4229 = vld [vmem:[%s4212 + $0x80] sm:$0xff]
    %v4230 = vld [vmem:[%s4212 + $0x88] sm:$0xff]
    %v4231 = vld [vmem:[%s4212 + $0x90] sm:$0xff]
    %v4232 = vld [vmem:[%s4212 + $0x98] sm:$0xff]
    %v4233 = vld [vmem:[%s4212 + $0xa0] sm:$0xff]
    %v4234 = vld [vmem:[%s4212 + $0xa8] sm:$0xff]
    %v4235 = vld [vmem:[%s4212 + $0xb0] sm:$0xff]
    %v4236 = vld [vmem:[%s4212 + $0xb8] sm:$0xff]
    %v4237 = vld [vmem:[%s4212 + $0xc0] sm:$0xff]
    %v4238 = vld [vmem:[%s4212 + $0xc8] sm:$0xff]
    %v4239 = vld [vmem:[%s4212 + $0xd0] sm:$0xff]
    %v4240 = vld [vmem:[%s4212 + $0xd8] sm:$0xff]
    %v4241 = vld [vmem:[%s4212 + $0xe0] sm:$0xff]
    %v4242 = vld [vmem:[%s4212 + $0xe8] sm:$0xff]
    %v4243 = vld [vmem:[%s4212 + $0xf0] sm:$0xff]
    %v4244 = vld [vmem:[%s4212 + $0xf8] sm:$0xff]
    %v4245 = vld [vmem:[%s4212 + $0x100] sm:$0xff]
    %v4246 = vld [vmem:[%s4212 + $0x108] sm:$0xff]
    %v4247 = vld [vmem:[%s4212 + $0x110] sm:$0xff]
    %v4248 = vld [vmem:[%s4212 + $0x118] sm:$0xff]
    %v4249 = vld [vmem:[%s4212 + $0x120] sm:$0xff]
    %v4250 = vld [vmem:[%s4212 + $0x128] sm:$0xff]
    %v4251 = vld [vmem:[%s4212 + $0x130] sm:$0xff]
    %v4252 = vld [vmem:[%s4212 + $0x138] sm:$0xff]
    %v4253 = vld [vmem:[%s4212 + $0x140] sm:$0xff]
    %v4254 = vld [vmem:[%s4212 + $0x148] sm:$0xff]
    %v4255 = vld [vmem:[%s4212 + $0x150] sm:$0xff]
    %v4256 = vld [vmem:[%s4212 + $0x158] sm:$0xff]
    %v4257 = vld [vmem:[%s4212 + $0x160] sm:$0xff]
    %v4258 = vld [vmem:[%s4212 + $0x168] sm:$0xff]
    %v4259 = vld [vmem:[%s4212 + $0x170] sm:$0xff]
    %v4260 = vld [vmem:[%s4212 + $0x178] sm:$0xff]
    %v4261 = vld [vmem:[%s4212 + $0x180] sm:$0xff]
    %v4262 = vld [vmem:[%s4212 + $0x188] sm:$0xff]
    %v4263 = vld [vmem:[%s4212 + $0x190] sm:$0xff]
    %v4264 = vld [vmem:[%s4212 + $0x198] sm:$0xff]
    %v4265 = vld [vmem:[%s4212 + $0x1a0] sm:$0xff]
    %v4266 = vld [vmem:[%s4212 + $0x1a8] sm:$0xff]
    %v4267 = vld [vmem:[%s4212 + $0x1b0] sm:$0xff]
    %v4268 = vld [vmem:[%s4212 + $0x1b8] sm:$0xff]
    %v4269 = vld [vmem:[%s4212 + $0x1c0] sm:$0xff]
    %v4270 = vld [vmem:[%s4212 + $0x1c8] sm:$0xff]
    %v4271 = vld [vmem:[%s4212 + $0x1d0] sm:$0xff]
    %v4272 = vld [vmem:[%s4212 + $0x1d8] sm:$0xff]
    %v4273 = vld [vmem:[%s4212 + $0x1e0] sm:$0xff]
    %v4274 = vld [vmem:[%s4212 + $0x1e8] sm:$0xff]
    %v4275 = vld [vmem:[%s4212 + $0x1f0] sm:$0xff]
    %v4276 = vld [vmem:[%s4212 + $0x1f8] sm:$0xff]
    %s4277 = scalar_lea.vmem [#allocation11], 96
    %v4278 = vld [vmem:[%s4277] sm:$0xff]
    %v4279 = vld [vmem:[%s4277 + $0x8] sm:$0xff]
    %v4280 = vld [vmem:[%s4277 + $0x10] sm:$0xff]
    %v4281 = vld [vmem:[%s4277 + $0x18] sm:$0xff]
    %s4282 = scalar_lea.vmem [#allocation13], 3
    %v4283 = vld [vmem:[%s4282] sm:$0x1]
    %4284 = vmatprep.subr.mxu0 0.0
    %4285 = vmatpush1.msra.mxu0 0.0
    %4286 = vmatprep.subr.mxu0 0.0
    %4287 = vmatpush1.msra.mxu0 0.0
    %4288 = vmatprep.subr.mxu0 0.0
    %4289 = vmatpush1.msra.mxu0 0.0
    %4290 = vmatprep.subr.mxu0 0.0
    %4291 = vmatpush1.msra.mxu0 0.0
    %4292 = vmatprep.subr.mxu0 0.0
    %4293 = vmatpush1.msra.mxu0 0.0
    %4294 = vmatprep.subr.mxu0 0.0
    %4295 = vmatpush1.msra.mxu0 0.0
    %4296 = vmatprep.subr.mxu0 0.0
    %4297 = vmatpush1.msra.mxu0 0.0
    %4298 = vmatprep.subr.mxu0 0.0
    %4299 = vmatpush1.msra.mxu0 0.0
    %4300 = vmatprep.subr.mxu0 0.0
    %4301 = vmatpush1.msra.mxu0 0.0
    %4302 = vmatprep.subr.mxu0 0.0
    %4303 = vmatpush1.msra.mxu0 0.0
    %4304 = vmatprep.subr.mxu0 0.0
    %4305 = vmatpush1.msra.mxu0 0.0
    %4306 = vmatprep.subr.mxu0 0.0
    %4307 = vmatpush1.msra.mxu0 0.0
    %4308 = vmatprep.subr.mxu0 0.0
    %4309 = vmatpush1.msra.mxu0 0.0
    %4310 = vmatprep.subr.mxu0 0.0
    %4311 = vmatpush1.msra.mxu0 0.0
    %4312 = vmatprep.subr.mxu0 0.0
    %4313 = vmatpush1.msra.mxu0 %v4209
    %4314 = vmatprep.subr.mxu0 0.0
    %4315 = vmatpush1.msra.mxu0 %v4208
    %4316 = vmatprep.subr.mxu0 0.0
    %4317 = vmatpush2.msra.mxu0 0.0
    %4318 = vmatprep.subr.mxu0 0.0
    %4319 = vmatpush2.msra.mxu0 0.0
    %4320 = vmatprep.subr.mxu0 0.0
    %4321 = vmatpush2.msra.mxu0 0.0
    %4322 = vmatprep.subr.mxu0 0.0
    %4323 = vmatpush2.msra.mxu0 0.0
    %4324 = vmatprep.subr.mxu0 0.0
    %4325 = vmatpush2.msra.mxu0 0.0
    %4326 = vmatprep.subr.mxu0 0.0
    %4327 = vmatpush2.msra.mxu0 0.0
    %4328 = vmatprep.subr.mxu0 0.0
    %4329 = vmatpush2.msra.mxu0 0.0
    %4330 = vmatprep.subr.mxu0 0.0
    %4331 = vmatpush2.msra.mxu0 0.0
    %4332 = vmatprep.subr.mxu0 0.0
    %4333 = vmatpush2.msra.mxu0 0.0
    %4334 = vmatprep.subr.mxu0 0.0
    %4335 = vmatpush2.msra.mxu0 0.0
    %4336 = vmatprep.subr.mxu0 0.0
    %4337 = vmatpush2.msra.mxu0 0.0
    %4338 = vmatprep.subr.mxu0 0.0
    %4339 = vmatpush2.msra.mxu0 0.0
    %4340 = vmatprep.subr.mxu0 0.0
    %4341 = vmatpush2.msra.mxu0 0.0
    %4342 = vmatprep.subr.mxu0 0.0
    %4343 = vmatpush2.msra.mxu0 0.0
    %4344 = vmatprep.subr.mxu0 0.0
    %4345 = vmatpush2.msra.mxu0 0.0
    %4346 = vmatprep.subr.mxu0 0.0
    %4347 = vmatpush2.msra.mxu0 0.0
    %4348 = vmatprep.mubr.f32.mxu0 0.0
    %4349 = vmatmul.mubr.f32.gmra.mxu0 %v299
    %v4350 = vpop.f32.mrf.mxu0
    %v4351 = vadd.f32 0.0, %v4350
    %v4352 = vpop.f32.mrf.mxu0
    %4353 = vmatprep.mubr.f32.mxu0 0.0
    %4354 = vmatmul.mubr.f32.gmra.mxu0 %v302
    %v4355 = vpop.f32.mrf.mxu0
    %v4356 = vadd.f32 0.0, %v4355
    %v4357 = vpop.f32.mrf.mxu0
    %4358 = vdwg.mxu0
    %4360 = vrot.lane.b32.xlu0 %v4356, 32
    %v4361 = vpop.permute.xlu0 %4360
    %v4363 = vsel %vm383, %v4351, %v4361
    %v4365 = vcombine.high %v4363, %v4363
    %v4367 = vunpack.c.l.s4 1966171168
    %v4368 = vunpack.c.0.s8 %v4367
    %v4369 = vlaneseq
    %v4370 = vshrl.u32 %v4369, 7
    %v4371 = vsub.s32 %v4368, %v4370
    %v4372 = vrot.slane %v4363, %v4371
    %v4374 = vunpack.c.l.s4 1966171168
    %v4375 = vunpack.c.0.s8 %v4374
    %v4376 = vlaneseq
    %v4377 = vshrl.u32 %v4376, 7
    %v4378 = vsub.s32 %v4375, %v4377
    %v4379 = vrot.slane %v4365, %v4378
    %v4380 = vcombine.high %v4372, %v4372
    %v4381 = vcombine.high %v4379, %v4379
    %v4383 = vunpack.c.l.s4 1966171168
    %v4384 = vunpack.c.0.s8 %v4383
    %v4385 = vlaneseq
    %v4386 = vshrl.u32 %v4385, 7
    %v4387 = vsub.s32 %v4384, %v4386
    %v4388 = vrot.slane %v4372, %v4387
    %v4390 = vunpack.c.l.s4 1966171168
    %v4391 = vunpack.c.0.s8 %v4390
    %v4392 = vlaneseq
    %v4393 = vshrl.u32 %v4392, 7
    %v4394 = vsub.s32 %v4391, %v4393
    %v4395 = vrot.slane %v4379, %v4394
    %v4397 = vunpack.c.l.s4 1966171168
    %v4398 = vunpack.c.0.s8 %v4397
    %v4399 = vlaneseq
    %v4400 = vshrl.u32 %v4399, 7
    %v4401 = vsub.s32 %v4398, %v4400
    %v4402 = vrot.slane %v4380, %v4401
    %v4404 = vunpack.c.l.s4 1966171168
    %v4405 = vunpack.c.0.s8 %v4404
    %v4406 = vlaneseq
    %v4407 = vshrl.u32 %v4406, 7
    %v4408 = vsub.s32 %v4405, %v4407
    %v4409 = vrot.slane %v4381, %v4408
    %v4410 = vcombine.high %v4388, %v4388
    %v4411 = vcombine.high %v4395, %v4395
    %v4412 = vcombine.high %v4402, %v4402
    %v4413 = vcombine.high %v4409, %v4409
    %4422 = vst.msk [vmem:[#allocation2] sm:$0x1] %vm443, %v4388
    %4423 = vst.msk [vmem:[#allocation2 + $0x2] sm:$0x1] %vm443, %v4402
    %4424 = vst.msk [vmem:[#allocation2 + $0x4] sm:$0x1] %vm443, %v4410
    %4425 = vst.msk [vmem:[#allocation2 + $0x6] sm:$0x1] %vm443, %v4412
    %4426 = vst.msk [vmem:[#allocation2 + $0x8] sm:$0x1] %vm443, %v4395
    %4427 = vst.msk [vmem:[#allocation2 + $0xa] sm:$0x1] %vm443, %v4409
    %4428 = vst.msk [vmem:[#allocation2 + $0xc] sm:$0x1] %vm443, %v4411
    %4429 = vst.msk [vmem:[#allocation2 + $0xe] sm:$0x1] %vm443, %v4413
    %4430 = vmatprep.subr.mxu0 0.0
    %4431 = vmatpush1.msra.mxu0 0.0
    %4432 = vmatprep.subr.mxu0 0.0
    %4433 = vmatpush1.msra.mxu0 0.0
    %4434 = vmatprep.subr.mxu0 0.0
    %4435 = vmatpush1.msra.mxu0 0.0
    %4436 = vmatprep.subr.mxu0 0.0
    %4437 = vmatpush1.msra.mxu0 0.0
    %4438 = vmatprep.subr.mxu0 0.0
    %4439 = vmatpush1.msra.mxu0 0.0
    %4440 = vmatprep.subr.mxu0 0.0
    %4441 = vmatpush1.msra.mxu0 0.0
    %4442 = vmatprep.subr.mxu0 0.0
    %4443 = vmatpush1.msra.mxu0 0.0
    %4444 = vmatprep.subr.mxu0 0.0
    %4445 = vmatpush1.msra.mxu0 0.0
    %4446 = vmatprep.subr.mxu0 0.0
    %4447 = vmatpush1.msra.mxu0 0.0
    %4448 = vmatprep.subr.mxu0 0.0
    %4449 = vmatpush1.msra.mxu0 0.0
    %4450 = vmatprep.subr.mxu0 0.0
    %4451 = vmatpush1.msra.mxu0 0.0
    %4452 = vmatprep.subr.mxu0 0.0
    %4453 = vmatpush1.msra.mxu0 0.0
    %4454 = vmatprep.subr.mxu0 0.0
    %4455 = vmatpush1.msra.mxu0 0.0
    %4456 = vmatprep.subr.mxu0 0.0
    %4457 = vmatpush1.msra.mxu0 0.0
    %4458 = vmatprep.subr.mxu0 0.0
    %4459 = vmatpush1.msra.mxu0 %v4211
    %4460 = vmatprep.subr.mxu0 0.0
    %4461 = vmatpush1.msra.mxu0 %v4210
    %4462 = vmatprep.subr.mxu0 0.0
    %4463 = vmatpush2.msra.mxu0 0.0
    %4464 = vmatprep.subr.mxu0 0.0
    %4465 = vmatpush2.msra.mxu0 0.0
    %4466 = vmatprep.subr.mxu0 0.0
    %4467 = vmatpush2.msra.mxu0 0.0
    %4468 = vmatprep.subr.mxu0 0.0
    %4469 = vmatpush2.msra.mxu0 0.0
    %4470 = vmatprep.subr.mxu0 0.0
    %4471 = vmatpush2.msra.mxu0 0.0
    %4472 = vmatprep.subr.mxu0 0.0
    %4473 = vmatpush2.msra.mxu0 0.0
    %4474 = vmatprep.subr.mxu0 0.0
    %4475 = vmatpush2.msra.mxu0 0.0
    %4476 = vmatprep.subr.mxu0 0.0
    %4477 = vmatpush2.msra.mxu0 0.0
    %4478 = vmatprep.subr.mxu0 0.0
    %4479 = vmatpush2.msra.mxu0 0.0
    %4480 = vmatprep.subr.mxu0 0.0
    %4481 = vmatpush2.msra.mxu0 0.0
    %4482 = vmatprep.subr.mxu0 0.0
    %4483 = vmatpush2.msra.mxu0 0.0
    %4484 = vmatprep.subr.mxu0 0.0
    %4485 = vmatpush2.msra.mxu0 0.0
    %4486 = vmatprep.subr.mxu0 0.0
    %4487 = vmatpush2.msra.mxu0 0.0
    %4488 = vmatprep.subr.mxu0 0.0
    %4489 = vmatpush2.msra.mxu0 0.0
    %4490 = vmatprep.subr.mxu0 0.0
    %4491 = vmatpush2.msra.mxu0 0.0
    %4492 = vmatprep.subr.mxu0 0.0
    %4493 = vmatpush2.msra.mxu0 0.0
    %4494 = vmatprep.mubr.f32.mxu0 0.0
    %4495 = vmatmul.mubr.f32.gmra.mxu0 %v299
    %v4496 = vpop.f32.mrf.mxu0
    %v4497 = vadd.f32 0.0, %v4496
    %v4498 = vpop.f32.mrf.mxu0
    %4499 = vmatprep.mubr.f32.mxu0 0.0
    %4500 = vmatmul.mubr.f32.gmra.mxu0 %v302
    %v4501 = vpop.f32.mrf.mxu0
    %v4502 = vadd.f32 0.0, %v4501
    %v4503 = vpop.f32.mrf.mxu0
    %4504 = vdwg.mxu0
    %4506 = vrot.lane.b32.xlu0 %v4502, 32
    %v4507 = vpop.permute.xlu0 %4506
    %v4509 = vsel %vm383, %v4497, %v4507
    %v4511 = vcombine.high %v4509, %v4509
    %v4513 = vunpack.c.l.s4 1966171168
    %v4514 = vunpack.c.0.s8 %v4513
    %v4515 = vlaneseq
    %v4516 = vshrl.u32 %v4515, 7
    %v4517 = vsub.s32 %v4514, %v4516
    %v4518 = vrot.slane %v4509, %v4517
    %v4520 = vunpack.c.l.s4 1966171168
    %v4521 = vunpack.c.0.s8 %v4520
    %v4522 = vlaneseq
    %v4523 = vshrl.u32 %v4522, 7
    %v4524 = vsub.s32 %v4521, %v4523
    %v4525 = vrot.slane %v4511, %v4524
    %v4526 = vcombine.high %v4518, %v4518
    %v4527 = vcombine.high %v4525, %v4525
    %v4529 = vunpack.c.l.s4 1966171168
    %v4530 = vunpack.c.0.s8 %v4529
    %v4531 = vlaneseq
    %v4532 = vshrl.u32 %v4531, 7
    %v4533 = vsub.s32 %v4530, %v4532
    %v4534 = vrot.slane %v4518, %v4533
    %v4536 = vunpack.c.l.s4 1966171168
    %v4537 = vunpack.c.0.s8 %v4536
    %v4538 = vlaneseq
    %v4539 = vshrl.u32 %v4538, 7
    %v4540 = vsub.s32 %v4537, %v4539
    %v4541 = vrot.slane %v4525, %v4540
    %v4543 = vunpack.c.l.s4 1966171168
    %v4544 = vunpack.c.0.s8 %v4543
    %v4545 = vlaneseq
    %v4546 = vshrl.u32 %v4545, 7
    %v4547 = vsub.s32 %v4544, %v4546
    %v4548 = vrot.slane %v4526, %v4547
    %v4550 = vunpack.c.l.s4 1966171168
    %v4551 = vunpack.c.0.s8 %v4550
    %v4552 = vlaneseq
    %v4553 = vshrl.u32 %v4552, 7
    %v4554 = vsub.s32 %v4551, %v4553
    %v4555 = vrot.slane %v4527, %v4554
    %v4556 = vcombine.high %v4534, %v4534
    %v4557 = vcombine.high %v4541, %v4541
    %v4558 = vcombine.high %v4548, %v4548
    %v4559 = vcombine.high %v4555, %v4555
    %4568 = vst.msk [vmem:[#allocation2 + $0x1] sm:$0x1] %vm443, %v4534
    %4569 = vst.msk [vmem:[#allocation2 + $0x3] sm:$0x1] %vm443, %v4548
    %4570 = vst.msk [vmem:[#allocation2 + $0x5] sm:$0x1] %vm443, %v4556
    %4571 = vst.msk [vmem:[#allocation2 + $0x7] sm:$0x1] %vm443, %v4558
    %4572 = vst.msk [vmem:[#allocation2 + $0x9] sm:$0x1] %vm443, %v4541
    %4573 = vst.msk [vmem:[#allocation2 + $0xb] sm:$0x1] %vm443, %v4555
    %4574 = vst.msk [vmem:[#allocation2 + $0xd] sm:$0x1] %vm443, %v4557
    %4575 = vst.msk [vmem:[#allocation2 + $0xf] sm:$0x1] %vm443, %v4559
    %v4576 = vld [vmem:[#allocation2] sm:$0x3]
    %v4577 = vld [vmem:[#allocation2 + $0x2] sm:$0x3]
    %v4578 = vld [vmem:[#allocation2 + $0x4] sm:$0x3]
    %v4579 = vld [vmem:[#allocation2 + $0x6] sm:$0x3]
    %v4580 = vld [vmem:[#allocation2 + $0x8] sm:$0x3]
    %v4581 = vld [vmem:[#allocation2 + $0xa] sm:$0x3]
    %v4582 = vld [vmem:[#allocation2 + $0xc] sm:$0x3]
    %v4583 = vld [vmem:[#allocation2 + $0xe] sm:$0x3]
    %v4585 = vsel %vm606, %v4576, 0
    %4587 = vmatprep.subr.mxu0 0.0
    %4588 = vmatpush1.msra.mxu0 0.0
    %4589 = vmatprep.subr.mxu0 0.0
    %4590 = vmatpush1.msra.mxu0 0.0
    %4591 = vmatprep.subr.mxu0 0.0
    %4592 = vmatpush1.msra.mxu0 0.0
    %4593 = vmatprep.subr.mxu0 0.0
    %4594 = vmatpush1.msra.mxu0 0.0
    %4595 = vmatprep.subr.mxu0 0.0
    %4596 = vmatpush1.msra.mxu0 0.0
    %4597 = vmatprep.subr.mxu0 0.0
    %4598 = vmatpush1.msra.mxu0 0.0
    %4599 = vmatprep.subr.mxu0 0.0
    %4600 = vmatpush1.msra.mxu0 0.0
    %4601 = vmatprep.subr.mxu0 0.0
    %4602 = vmatpush1.msra.mxu0 0.0
    %4603 = vmatprep.subr.mxu0 0.0
    %4604 = vmatpush1.msra.mxu0 %v4220
    %4605 = vmatprep.subr.mxu0 0.0
    %4606 = vmatpush1.msra.mxu0 %v4219
    %4607 = vmatprep.subr.mxu0 0.0
    %4608 = vmatpush1.msra.mxu0 %v4218
    %4609 = vmatprep.subr.mxu0 0.0
    %4610 = vmatpush1.msra.mxu0 %v4217
    %4611 = vmatprep.subr.mxu0 0.0
    %4612 = vmatpush1.msra.mxu0 %v4216
    %4613 = vmatprep.subr.mxu0 0.0
    %4614 = vmatpush1.msra.mxu0 %v4215
    %4615 = vmatprep.subr.mxu0 0.0
    %4616 = vmatpush1.msra.mxu0 %v4214
    %4617 = vmatprep.subr.mxu0 0.0
    %4618 = vmatpush1.msra.mxu0 %v4213
    %4619 = vmatprep.subr.mxu0 0.0
    %4620 = vmatpush2.msra.mxu0 0.0
    %4621 = vmatprep.subr.mxu0 0.0
    %4622 = vmatpush2.msra.mxu0 0.0
    %4623 = vmatprep.subr.mxu0 0.0
    %4624 = vmatpush2.msra.mxu0 0.0
    %4625 = vmatprep.subr.mxu0 0.0
    %4626 = vmatpush2.msra.mxu0 0.0
    %4627 = vmatprep.subr.mxu0 0.0
    %4628 = vmatpush2.msra.mxu0 0.0
    %4629 = vmatprep.subr.mxu0 0.0
    %4630 = vmatpush2.msra.mxu0 0.0
    %4631 = vmatprep.subr.mxu0 0.0
    %4632 = vmatpush2.msra.mxu0 0.0
    %4633 = vmatprep.subr.mxu0 0.0
    %4634 = vmatpush2.msra.mxu0 0.0
    %4635 = vmatprep.subr.mxu0 0.0
    %4636 = vmatpush2.msra.mxu0 0.0
    %4637 = vmatprep.subr.mxu0 0.0
    %4638 = vmatpush2.msra.mxu0 0.0
    %4639 = vmatprep.subr.mxu0 0.0
    %4640 = vmatpush2.msra.mxu0 0.0
    %4641 = vmatprep.subr.mxu0 0.0
    %4642 = vmatpush2.msra.mxu0 0.0
    %4643 = vmatprep.subr.mxu0 0.0
    %4644 = vmatpush2.msra.mxu0 0.0
    %4645 = vmatprep.subr.mxu0 0.0
    %4646 = vmatpush2.msra.mxu0 0.0
    %4647 = vmatprep.subr.mxu0 0.0
    %4648 = vmatpush2.msra.mxu0 0.0
    %4649 = vmatprep.subr.mxu0 0.0
    %4650 = vmatpush2.msra.mxu0 0.0
    %4651 = vmatprep.mubr.f32.mxu0 0.0
    %4652 = vmatmul.mubr.f32.gmra.mxu0 %v4585
    %v4653 = vpop.f32.mrf.mxu0
    %v4654 = vadd.f32 0.0, %v4653
    %v4655 = vpop.f32.mrf.mxu0
    %4656 = vdwg.mxu0
    %v4658 = vsel %vm606, %v4577, 0
    %4660 = vmatprep.subr.mxu0 0.0
    %4661 = vmatpush1.msra.mxu0 0.0
    %4662 = vmatprep.subr.mxu0 0.0
    %4663 = vmatpush1.msra.mxu0 0.0
    %4664 = vmatprep.subr.mxu0 0.0
    %4665 = vmatpush1.msra.mxu0 0.0
    %4666 = vmatprep.subr.mxu0 0.0
    %4667 = vmatpush1.msra.mxu0 0.0
    %4668 = vmatprep.subr.mxu0 0.0
    %4669 = vmatpush1.msra.mxu0 0.0
    %4670 = vmatprep.subr.mxu0 0.0
    %4671 = vmatpush1.msra.mxu0 0.0
    %4672 = vmatprep.subr.mxu0 0.0
    %4673 = vmatpush1.msra.mxu0 0.0
    %4674 = vmatprep.subr.mxu0 0.0
    %4675 = vmatpush1.msra.mxu0 0.0
    %4676 = vmatprep.subr.mxu0 0.0
    %4677 = vmatpush1.msra.mxu0 %v4228
    %4678 = vmatprep.subr.mxu0 0.0
    %4679 = vmatpush1.msra.mxu0 %v4227
    %4680 = vmatprep.subr.mxu0 0.0
    %4681 = vmatpush1.msra.mxu0 %v4226
    %4682 = vmatprep.subr.mxu0 0.0
    %4683 = vmatpush1.msra.mxu0 %v4225
    %4684 = vmatprep.subr.mxu0 0.0
    %4685 = vmatpush1.msra.mxu0 %v4224
    %4686 = vmatprep.subr.mxu0 0.0
    %4687 = vmatpush1.msra.mxu0 %v4223
    %4688 = vmatprep.subr.mxu0 0.0
    %4689 = vmatpush1.msra.mxu0 %v4222
    %4690 = vmatprep.subr.mxu0 0.0
    %4691 = vmatpush1.msra.mxu0 %v4221
    %4692 = vmatprep.subr.mxu0 0.0
    %4693 = vmatpush2.msra.mxu0 0.0
    %4694 = vmatprep.subr.mxu0 0.0
    %4695 = vmatpush2.msra.mxu0 0.0
    %4696 = vmatprep.subr.mxu0 0.0
    %4697 = vmatpush2.msra.mxu0 0.0
    %4698 = vmatprep.subr.mxu0 0.0
    %4699 = vmatpush2.msra.mxu0 0.0
    %4700 = vmatprep.subr.mxu0 0.0
    %4701 = vmatpush2.msra.mxu0 0.0
    %4702 = vmatprep.subr.mxu0 0.0
    %4703 = vmatpush2.msra.mxu0 0.0
    %4704 = vmatprep.subr.mxu0 0.0
    %4705 = vmatpush2.msra.mxu0 0.0
    %4706 = vmatprep.subr.mxu0 0.0
    %4707 = vmatpush2.msra.mxu0 0.0
    %4708 = vmatprep.subr.mxu0 0.0
    %4709 = vmatpush2.msra.mxu0 0.0
    %4710 = vmatprep.subr.mxu0 0.0
    %4711 = vmatpush2.msra.mxu0 0.0
    %4712 = vmatprep.subr.mxu0 0.0
    %4713 = vmatpush2.msra.mxu0 0.0
    %4714 = vmatprep.subr.mxu0 0.0
    %4715 = vmatpush2.msra.mxu0 0.0
    %4716 = vmatprep.subr.mxu0 0.0
    %4717 = vmatpush2.msra.mxu0 0.0
    %4718 = vmatprep.subr.mxu0 0.0
    %4719 = vmatpush2.msra.mxu0 0.0
    %4720 = vmatprep.subr.mxu0 0.0
    %4721 = vmatpush2.msra.mxu0 0.0
    %4722 = vmatprep.subr.mxu0 0.0
    %4723 = vmatpush2.msra.mxu0 0.0
    %4724 = vmatprep.mubr.f32.mxu0 0.0
    %4725 = vmatmul.mubr.f32.gmra.mxu0 %v4658
    %v4726 = vpop.f32.mrf.mxu0
    %v4727 = vadd.f32 0.0, %v4726
    %v4728 = vpop.f32.mrf.mxu0
    %4729 = vdwg.mxu0
    %v4731 = vsel %vm606, %v4578, 0
    %4733 = vmatprep.subr.mxu0 0.0
    %4734 = vmatpush1.msra.mxu0 0.0
    %4735 = vmatprep.subr.mxu0 0.0
    %4736 = vmatpush1.msra.mxu0 0.0
    %4737 = vmatprep.subr.mxu0 0.0
    %4738 = vmatpush1.msra.mxu0 0.0
    %4739 = vmatprep.subr.mxu0 0.0
    %4740 = vmatpush1.msra.mxu0 0.0
    %4741 = vmatprep.subr.mxu0 0.0
    %4742 = vmatpush1.msra.mxu0 0.0
    %4743 = vmatprep.subr.mxu0 0.0
    %4744 = vmatpush1.msra.mxu0 0.0
    %4745 = vmatprep.subr.mxu0 0.0
    %4746 = vmatpush1.msra.mxu0 0.0
    %4747 = vmatprep.subr.mxu0 0.0
    %4748 = vmatpush1.msra.mxu0 0.0
    %4749 = vmatprep.subr.mxu0 0.0
    %4750 = vmatpush1.msra.mxu0 %v4236
    %4751 = vmatprep.subr.mxu0 0.0
    %4752 = vmatpush1.msra.mxu0 %v4235
    %4753 = vmatprep.subr.mxu0 0.0
    %4754 = vmatpush1.msra.mxu0 %v4234
    %4755 = vmatprep.subr.mxu0 0.0
    %4756 = vmatpush1.msra.mxu0 %v4233
    %4757 = vmatprep.subr.mxu0 0.0
    %4758 = vmatpush1.msra.mxu0 %v4232
    %4759 = vmatprep.subr.mxu0 0.0
    %4760 = vmatpush1.msra.mxu0 %v4231
    %4761 = vmatprep.subr.mxu0 0.0
    %4762 = vmatpush1.msra.mxu0 %v4230
    %4763 = vmatprep.subr.mxu0 0.0
    %4764 = vmatpush1.msra.mxu0 %v4229
    %4765 = vmatprep.subr.mxu0 0.0
    %4766 = vmatpush2.msra.mxu0 0.0
    %4767 = vmatprep.subr.mxu0 0.0
    %4768 = vmatpush2.msra.mxu0 0.0
    %4769 = vmatprep.subr.mxu0 0.0
    %4770 = vmatpush2.msra.mxu0 0.0
    %4771 = vmatprep.subr.mxu0 0.0
    %4772 = vmatpush2.msra.mxu0 0.0
    %4773 = vmatprep.subr.mxu0 0.0
    %4774 = vmatpush2.msra.mxu0 0.0
    %4775 = vmatprep.subr.mxu0 0.0
    %4776 = vmatpush2.msra.mxu0 0.0
    %4777 = vmatprep.subr.mxu0 0.0
    %4778 = vmatpush2.msra.mxu0 0.0
    %4779 = vmatprep.subr.mxu0 0.0
    %4780 = vmatpush2.msra.mxu0 0.0
    %4781 = vmatprep.subr.mxu0 0.0
    %4782 = vmatpush2.msra.mxu0 0.0
    %4783 = vmatprep.subr.mxu0 0.0
    %4784 = vmatpush2.msra.mxu0 0.0
    %4785 = vmatprep.subr.mxu0 0.0
    %4786 = vmatpush2.msra.mxu0 0.0
    %4787 = vmatprep.subr.mxu0 0.0
    %4788 = vmatpush2.msra.mxu0 0.0
    %4789 = vmatprep.subr.mxu0 0.0
    %4790 = vmatpush2.msra.mxu0 0.0
    %4791 = vmatprep.subr.mxu0 0.0
    %4792 = vmatpush2.msra.mxu0 0.0
    %4793 = vmatprep.subr.mxu0 0.0
    %4794 = vmatpush2.msra.mxu0 0.0
    %4795 = vmatprep.subr.mxu0 0.0
    %4796 = vmatpush2.msra.mxu0 0.0
    %4797 = vmatprep.mubr.f32.mxu0 0.0
    %4798 = vmatmul.mubr.f32.gmra.mxu0 %v4731
    %v4799 = vpop.f32.mrf.mxu0
    %v4800 = vadd.f32 0.0, %v4799
    %v4801 = vpop.f32.mrf.mxu0
    %4802 = vdwg.mxu0
    %v4804 = vsel %vm606, %v4579, 0
    %4806 = vmatprep.subr.mxu0 0.0
    %4807 = vmatpush1.msra.mxu0 0.0
    %4808 = vmatprep.subr.mxu0 0.0
    %4809 = vmatpush1.msra.mxu0 0.0
    %4810 = vmatprep.subr.mxu0 0.0
    %4811 = vmatpush1.msra.mxu0 0.0
    %4812 = vmatprep.subr.mxu0 0.0
    %4813 = vmatpush1.msra.mxu0 0.0
    %4814 = vmatprep.subr.mxu0 0.0
    %4815 = vmatpush1.msra.mxu0 0.0
    %4816 = vmatprep.subr.mxu0 0.0
    %4817 = vmatpush1.msra.mxu0 0.0
    %4818 = vmatprep.subr.mxu0 0.0
    %4819 = vmatpush1.msra.mxu0 0.0
    %4820 = vmatprep.subr.mxu0 0.0
    %4821 = vmatpush1.msra.mxu0 0.0
    %4822 = vmatprep.subr.mxu0 0.0
    %4823 = vmatpush1.msra.mxu0 %v4244
    %4824 = vmatprep.subr.mxu0 0.0
    %4825 = vmatpush1.msra.mxu0 %v4243
    %4826 = vmatprep.subr.mxu0 0.0
    %4827 = vmatpush1.msra.mxu0 %v4242
    %4828 = vmatprep.subr.mxu0 0.0
    %4829 = vmatpush1.msra.mxu0 %v4241
    %4830 = vmatprep.subr.mxu0 0.0
    %4831 = vmatpush1.msra.mxu0 %v4240
    %4832 = vmatprep.subr.mxu0 0.0
    %4833 = vmatpush1.msra.mxu0 %v4239
    %4834 = vmatprep.subr.mxu0 0.0
    %4835 = vmatpush1.msra.mxu0 %v4238
    %4836 = vmatprep.subr.mxu0 0.0
    %4837 = vmatpush1.msra.mxu0 %v4237
    %4838 = vmatprep.subr.mxu0 0.0
    %4839 = vmatpush2.msra.mxu0 0.0
    %4840 = vmatprep.subr.mxu0 0.0
    %4841 = vmatpush2.msra.mxu0 0.0
    %4842 = vmatprep.subr.mxu0 0.0
    %4843 = vmatpush2.msra.mxu0 0.0
    %4844 = vmatprep.subr.mxu0 0.0
    %4845 = vmatpush2.msra.mxu0 0.0
    %4846 = vmatprep.subr.mxu0 0.0
    %4847 = vmatpush2.msra.mxu0 0.0
    %4848 = vmatprep.subr.mxu0 0.0
    %4849 = vmatpush2.msra.mxu0 0.0
    %4850 = vmatprep.subr.mxu0 0.0
    %4851 = vmatpush2.msra.mxu0 0.0
    %4852 = vmatprep.subr.mxu0 0.0
    %4853 = vmatpush2.msra.mxu0 0.0
    %4854 = vmatprep.subr.mxu0 0.0
    %4855 = vmatpush2.msra.mxu0 0.0
    %4856 = vmatprep.subr.mxu0 0.0
    %4857 = vmatpush2.msra.mxu0 0.0
    %4858 = vmatprep.subr.mxu0 0.0
    %4859 = vmatpush2.msra.mxu0 0.0
    %4860 = vmatprep.subr.mxu0 0.0
    %4861 = vmatpush2.msra.mxu0 0.0
    %4862 = vmatprep.subr.mxu0 0.0
    %4863 = vmatpush2.msra.mxu0 0.0
    %4864 = vmatprep.subr.mxu0 0.0
    %4865 = vmatpush2.msra.mxu0 0.0
    %4866 = vmatprep.subr.mxu0 0.0
    %4867 = vmatpush2.msra.mxu0 0.0
    %4868 = vmatprep.subr.mxu0 0.0
    %4869 = vmatpush2.msra.mxu0 0.0
    %4870 = vmatprep.mubr.f32.mxu0 0.0
    %4871 = vmatmul.mubr.f32.gmra.mxu0 %v4804
    %v4872 = vpop.f32.mrf.mxu0
    %v4873 = vadd.f32 0.0, %v4872
    %v4874 = vpop.f32.mrf.mxu0
    %4875 = vdwg.mxu0
    %v4877 = vsel %vm606, %v4580, 0
    %4879 = vmatprep.subr.mxu0 0.0
    %4880 = vmatpush1.msra.mxu0 0.0
    %4881 = vmatprep.subr.mxu0 0.0
    %4882 = vmatpush1.msra.mxu0 0.0
    %4883 = vmatprep.subr.mxu0 0.0
    %4884 = vmatpush1.msra.mxu0 0.0
    %4885 = vmatprep.subr.mxu0 0.0
    %4886 = vmatpush1.msra.mxu0 0.0
    %4887 = vmatprep.subr.mxu0 0.0
    %4888 = vmatpush1.msra.mxu0 0.0
    %4889 = vmatprep.subr.mxu0 0.0
    %4890 = vmatpush1.msra.mxu0 0.0
    %4891 = vmatprep.subr.mxu0 0.0
    %4892 = vmatpush1.msra.mxu0 0.0
    %4893 = vmatprep.subr.mxu0 0.0
    %4894 = vmatpush1.msra.mxu0 0.0
    %4895 = vmatprep.subr.mxu0 0.0
    %4896 = vmatpush1.msra.mxu0 %v4252
    %4897 = vmatprep.subr.mxu0 0.0
    %4898 = vmatpush1.msra.mxu0 %v4251
    %4899 = vmatprep.subr.mxu0 0.0
    %4900 = vmatpush1.msra.mxu0 %v4250
    %4901 = vmatprep.subr.mxu0 0.0
    %4902 = vmatpush1.msra.mxu0 %v4249
    %4903 = vmatprep.subr.mxu0 0.0
    %4904 = vmatpush1.msra.mxu0 %v4248
    %4905 = vmatprep.subr.mxu0 0.0
    %4906 = vmatpush1.msra.mxu0 %v4247
    %4907 = vmatprep.subr.mxu0 0.0
    %4908 = vmatpush1.msra.mxu0 %v4246
    %4909 = vmatprep.subr.mxu0 0.0
    %4910 = vmatpush1.msra.mxu0 %v4245
    %4911 = vmatprep.subr.mxu0 0.0
    %4912 = vmatpush2.msra.mxu0 0.0
    %4913 = vmatprep.subr.mxu0 0.0
    %4914 = vmatpush2.msra.mxu0 0.0
    %4915 = vmatprep.subr.mxu0 0.0
    %4916 = vmatpush2.msra.mxu0 0.0
    %4917 = vmatprep.subr.mxu0 0.0
    %4918 = vmatpush2.msra.mxu0 0.0
    %4919 = vmatprep.subr.mxu0 0.0
    %4920 = vmatpush2.msra.mxu0 0.0
    %4921 = vmatprep.subr.mxu0 0.0
    %4922 = vmatpush2.msra.mxu0 0.0
    %4923 = vmatprep.subr.mxu0 0.0
    %4924 = vmatpush2.msra.mxu0 0.0
    %4925 = vmatprep.subr.mxu0 0.0
    %4926 = vmatpush2.msra.mxu0 0.0
    %4927 = vmatprep.subr.mxu0 0.0
    %4928 = vmatpush2.msra.mxu0 0.0
    %4929 = vmatprep.subr.mxu0 0.0
    %4930 = vmatpush2.msra.mxu0 0.0
    %4931 = vmatprep.subr.mxu0 0.0
    %4932 = vmatpush2.msra.mxu0 0.0
    %4933 = vmatprep.subr.mxu0 0.0
    %4934 = vmatpush2.msra.mxu0 0.0
    %4935 = vmatprep.subr.mxu0 0.0
    %4936 = vmatpush2.msra.mxu0 0.0
    %4937 = vmatprep.subr.mxu0 0.0
    %4938 = vmatpush2.msra.mxu0 0.0
    %4939 = vmatprep.subr.mxu0 0.0
    %4940 = vmatpush2.msra.mxu0 0.0
    %4941 = vmatprep.subr.mxu0 0.0
    %4942 = vmatpush2.msra.mxu0 0.0
    %4943 = vmatprep.mubr.f32.mxu0 0.0
    %4944 = vmatmul.mubr.f32.gmra.mxu0 %v4877
    %v4945 = vpop.f32.mrf.mxu0
    %v4946 = vadd.f32 0.0, %v4945
    %v4947 = vpop.f32.mrf.mxu0
    %4948 = vdwg.mxu0
    %v4950 = vsel %vm606, %v4581, 0
    %4952 = vmatprep.subr.mxu0 0.0
    %4953 = vmatpush1.msra.mxu0 0.0
    %4954 = vmatprep.subr.mxu0 0.0
    %4955 = vmatpush1.msra.mxu0 0.0
    %4956 = vmatprep.subr.mxu0 0.0
    %4957 = vmatpush1.msra.mxu0 0.0
    %4958 = vmatprep.subr.mxu0 0.0
    %4959 = vmatpush1.msra.mxu0 0.0
    %4960 = vmatprep.subr.mxu0 0.0
    %4961 = vmatpush1.msra.mxu0 0.0
    %4962 = vmatprep.subr.mxu0 0.0
    %4963 = vmatpush1.msra.mxu0 0.0
    %4964 = vmatprep.subr.mxu0 0.0
    %4965 = vmatpush1.msra.mxu0 0.0
    %4966 = vmatprep.subr.mxu0 0.0
    %4967 = vmatpush1.msra.mxu0 0.0
    %4968 = vmatprep.subr.mxu0 0.0
    %4969 = vmatpush1.msra.mxu0 %v4260
    %4970 = vmatprep.subr.mxu0 0.0
    %4971 = vmatpush1.msra.mxu0 %v4259
    %4972 = vmatprep.subr.mxu0 0.0
    %4973 = vmatpush1.msra.mxu0 %v4258
    %4974 = vmatprep.subr.mxu0 0.0
    %4975 = vmatpush1.msra.mxu0 %v4257
    %4976 = vmatprep.subr.mxu0 0.0
    %4977 = vmatpush1.msra.mxu0 %v4256
    %4978 = vmatprep.subr.mxu0 0.0
    %4979 = vmatpush1.msra.mxu0 %v4255
    %4980 = vmatprep.subr.mxu0 0.0
    %4981 = vmatpush1.msra.mxu0 %v4254
    %4982 = vmatprep.subr.mxu0 0.0
    %4983 = vmatpush1.msra.mxu0 %v4253
    %4984 = vmatprep.subr.mxu0 0.0
    %4985 = vmatpush2.msra.mxu0 0.0
    %4986 = vmatprep.subr.mxu0 0.0
    %4987 = vmatpush2.msra.mxu0 0.0
    %4988 = vmatprep.subr.mxu0 0.0
    %4989 = vmatpush2.msra.mxu0 0.0
    %4990 = vmatprep.subr.mxu0 0.0
    %4991 = vmatpush2.msra.mxu0 0.0
    %4992 = vmatprep.subr.mxu0 0.0
    %4993 = vmatpush2.msra.mxu0 0.0
    %4994 = vmatprep.subr.mxu0 0.0
    %4995 = vmatpush2.msra.mxu0 0.0
    %4996 = vmatprep.subr.mxu0 0.0
    %4997 = vmatpush2.msra.mxu0 0.0
    %4998 = vmatprep.subr.mxu0 0.0
    %4999 = vmatpush2.msra.mxu0 0.0
    %5000 = vmatprep.subr.mxu0 0.0
    %5001 = vmatpush2.msra.mxu0 0.0
    %5002 = vmatprep.subr.mxu0 0.0
    %5003 = vmatpush2.msra.mxu0 0.0
    %5004 = vmatprep.subr.mxu0 0.0
    %5005 = vmatpush2.msra.mxu0 0.0
    %5006 = vmatprep.subr.mxu0 0.0
    %5007 = vmatpush2.msra.mxu0 0.0
    %5008 = vmatprep.subr.mxu0 0.0
    %5009 = vmatpush2.msra.mxu0 0.0
    %5010 = vmatprep.subr.mxu0 0.0
    %5011 = vmatpush2.msra.mxu0 0.0
    %5012 = vmatprep.subr.mxu0 0.0
    %5013 = vmatpush2.msra.mxu0 0.0
    %5014 = vmatprep.subr.mxu0 0.0
    %5015 = vmatpush2.msra.mxu0 0.0
    %5016 = vmatprep.mubr.f32.mxu0 0.0
    %5017 = vmatmul.mubr.f32.gmra.mxu0 %v4950
    %v5018 = vpop.f32.mrf.mxu0
    %v5019 = vadd.f32 0.0, %v5018
    %v5020 = vpop.f32.mrf.mxu0
    %5021 = vdwg.mxu0
    %v5023 = vsel %vm606, %v4582, 0
    %5025 = vmatprep.subr.mxu0 0.0
    %5026 = vmatpush1.msra.mxu0 0.0
    %5027 = vmatprep.subr.mxu0 0.0
    %5028 = vmatpush1.msra.mxu0 0.0
    %5029 = vmatprep.subr.mxu0 0.0
    %5030 = vmatpush1.msra.mxu0 0.0
    %5031 = vmatprep.subr.mxu0 0.0
    %5032 = vmatpush1.msra.mxu0 0.0
    %5033 = vmatprep.subr.mxu0 0.0
    %5034 = vmatpush1.msra.mxu0 0.0
    %5035 = vmatprep.subr.mxu0 0.0
    %5036 = vmatpush1.msra.mxu0 0.0
    %5037 = vmatprep.subr.mxu0 0.0
    %5038 = vmatpush1.msra.mxu0 0.0
    %5039 = vmatprep.subr.mxu0 0.0
    %5040 = vmatpush1.msra.mxu0 0.0
    %5041 = vmatprep.subr.mxu0 0.0
    %5042 = vmatpush1.msra.mxu0 %v4268
    %5043 = vmatprep.subr.mxu0 0.0
    %5044 = vmatpush1.msra.mxu0 %v4267
    %5045 = vmatprep.subr.mxu0 0.0
    %5046 = vmatpush1.msra.mxu0 %v4266
    %5047 = vmatprep.subr.mxu0 0.0
    %5048 = vmatpush1.msra.mxu0 %v4265
    %5049 = vmatprep.subr.mxu0 0.0
    %5050 = vmatpush1.msra.mxu0 %v4264
    %5051 = vmatprep.subr.mxu0 0.0
    %5052 = vmatpush1.msra.mxu0 %v4263
    %5053 = vmatprep.subr.mxu0 0.0
    %5054 = vmatpush1.msra.mxu0 %v4262
    %5055 = vmatprep.subr.mxu0 0.0
    %5056 = vmatpush1.msra.mxu0 %v4261
    %5057 = vmatprep.subr.mxu0 0.0
    %5058 = vmatpush2.msra.mxu0 0.0
    %5059 = vmatprep.subr.mxu0 0.0
    %5060 = vmatpush2.msra.mxu0 0.0
    %5061 = vmatprep.subr.mxu0 0.0
    %5062 = vmatpush2.msra.mxu0 0.0
    %5063 = vmatprep.subr.mxu0 0.0
    %5064 = vmatpush2.msra.mxu0 0.0
    %5065 = vmatprep.subr.mxu0 0.0
    %5066 = vmatpush2.msra.mxu0 0.0
    %5067 = vmatprep.subr.mxu0 0.0
    %5068 = vmatpush2.msra.mxu0 0.0
    %5069 = vmatprep.subr.mxu0 0.0
    %5070 = vmatpush2.msra.mxu0 0.0
    %5071 = vmatprep.subr.mxu0 0.0
    %5072 = vmatpush2.msra.mxu0 0.0
    %5073 = vmatprep.subr.mxu0 0.0
    %5074 = vmatpush2.msra.mxu0 0.0
    %5075 = vmatprep.subr.mxu0 0.0
    %5076 = vmatpush2.msra.mxu0 0.0
    %5077 = vmatprep.subr.mxu0 0.0
    %5078 = vmatpush2.msra.mxu0 0.0
    %5079 = vmatprep.subr.mxu0 0.0
    %5080 = vmatpush2.msra.mxu0 0.0
    %5081 = vmatprep.subr.mxu0 0.0
    %5082 = vmatpush2.msra.mxu0 0.0
    %5083 = vmatprep.subr.mxu0 0.0
    %5084 = vmatpush2.msra.mxu0 0.0
    %5085 = vmatprep.subr.mxu0 0.0
    %5086 = vmatpush2.msra.mxu0 0.0
    %5087 = vmatprep.subr.mxu0 0.0
    %5088 = vmatpush2.msra.mxu0 0.0
    %5089 = vmatprep.mubr.f32.mxu0 0.0
    %5090 = vmatmul.mubr.f32.gmra.mxu0 %v5023
    %v5091 = vpop.f32.mrf.mxu0
    %v5092 = vadd.f32 0.0, %v5091
    %v5093 = vpop.f32.mrf.mxu0
    %5094 = vdwg.mxu0
    %v5096 = vsel %vm606, %v4583, 0
    %5098 = vmatprep.subr.mxu0 0.0
    %5099 = vmatpush1.msra.mxu0 0.0
    %5100 = vmatprep.subr.mxu0 0.0
    %5101 = vmatpush1.msra.mxu0 0.0
    %5102 = vmatprep.subr.mxu0 0.0
    %5103 = vmatpush1.msra.mxu0 0.0
    %5104 = vmatprep.subr.mxu0 0.0
    %5105 = vmatpush1.msra.mxu0 0.0
    %5106 = vmatprep.subr.mxu0 0.0
    %5107 = vmatpush1.msra.mxu0 0.0
    %5108 = vmatprep.subr.mxu0 0.0
    %5109 = vmatpush1.msra.mxu0 0.0
    %5110 = vmatprep.subr.mxu0 0.0
    %5111 = vmatpush1.msra.mxu0 0.0
    %5112 = vmatprep.subr.mxu0 0.0
    %5113 = vmatpush1.msra.mxu0 0.0
    %5114 = vmatprep.subr.mxu0 0.0
    %5115 = vmatpush1.msra.mxu0 %v4276
    %5116 = vmatprep.subr.mxu0 0.0
    %5117 = vmatpush1.msra.mxu0 %v4275
    %5118 = vmatprep.subr.mxu0 0.0
    %5119 = vmatpush1.msra.mxu0 %v4274
    %5120 = vmatprep.subr.mxu0 0.0
    %5121 = vmatpush1.msra.mxu0 %v4273
    %5122 = vmatprep.subr.mxu0 0.0
    %5123 = vmatpush1.msra.mxu0 %v4272
    %5124 = vmatprep.subr.mxu0 0.0
    %5125 = vmatpush1.msra.mxu0 %v4271
    %5126 = vmatprep.subr.mxu0 0.0
    %5127 = vmatpush1.msra.mxu0 %v4270
    %5128 = vmatprep.subr.mxu0 0.0
    %5129 = vmatpush1.msra.mxu0 %v4269
    %5130 = vmatprep.subr.mxu0 0.0
    %5131 = vmatpush2.msra.mxu0 0.0
    %5132 = vmatprep.subr.mxu0 0.0
    %5133 = vmatpush2.msra.mxu0 0.0
    %5134 = vmatprep.subr.mxu0 0.0
    %5135 = vmatpush2.msra.mxu0 0.0
    %5136 = vmatprep.subr.mxu0 0.0
    %5137 = vmatpush2.msra.mxu0 0.0
    %5138 = vmatprep.subr.mxu0 0.0
    %5139 = vmatpush2.msra.mxu0 0.0
    %5140 = vmatprep.subr.mxu0 0.0
    %5141 = vmatpush2.msra.mxu0 0.0
    %5142 = vmatprep.subr.mxu0 0.0
    %5143 = vmatpush2.msra.mxu0 0.0
    %5144 = vmatprep.subr.mxu0 0.0
    %5145 = vmatpush2.msra.mxu0 0.0
    %5146 = vmatprep.subr.mxu0 0.0
    %5147 = vmatpush2.msra.mxu0 0.0
    %5148 = vmatprep.subr.mxu0 0.0
    %5149 = vmatpush2.msra.mxu0 0.0
    %5150 = vmatprep.subr.mxu0 0.0
    %5151 = vmatpush2.msra.mxu0 0.0
    %5152 = vmatprep.subr.mxu0 0.0
    %5153 = vmatpush2.msra.mxu0 0.0
    %5154 = vmatprep.subr.mxu0 0.0
    %5155 = vmatpush2.msra.mxu0 0.0
    %5156 = vmatprep.subr.mxu0 0.0
    %5157 = vmatpush2.msra.mxu0 0.0
    %5158 = vmatprep.subr.mxu0 0.0
    %5159 = vmatpush2.msra.mxu0 0.0
    %5160 = vmatprep.subr.mxu0 0.0
    %5161 = vmatpush2.msra.mxu0 0.0
    %5162 = vmatprep.mubr.f32.mxu0 0.0
    %5163 = vmatmul.mubr.f32.gmra.mxu0 %v5096
    %v5164 = vpop.f32.mrf.mxu0
    %v5165 = vadd.f32 0.0, %v5164
    %v5166 = vpop.f32.mrf.mxu0
    %5167 = vdwg.mxu0
    %5168 = vst.msk [vmem:[#allocation3] sm:$0x3] %vm1191, %v4654
    %5169 = vst.msk [vmem:[#allocation3 + $0x2] sm:$0x3] %vm1191, %v4727
    %5170 = vst.msk [vmem:[#allocation3 + $0x4] sm:$0x3] %vm1191, %v4800
    %5171 = vst.msk [vmem:[#allocation3 + $0x6] sm:$0x3] %vm1191, %v4873
    %5172 = vst.msk [vmem:[#allocation3 + $0x8] sm:$0x3] %vm1191, %v4946
    %5173 = vst.msk [vmem:[#allocation3 + $0xa] sm:$0x3] %vm1191, %v5019
    %5174 = vst.msk [vmem:[#allocation3 + $0xc] sm:$0x3] %vm1191, %v5092
    %5175 = vst.msk [vmem:[#allocation3 + $0xe] sm:$0x3] %vm1191, %v5165
    %v5177 = vlaneseq
    %v5178 = vshrl.u32 %v5177, 7
    %v5179 = vsub.s32 0, %v5178
    %v5180 = vrot.slane %v4283, %v5179
    %v5183 = vsel %vm383, %v4208, 0
    %v5186 = vsel %vm383, %v4209, 0
    %v5189 = vsel %vm383, %v4210, 0
    %v5192 = vsel %vm383, %v4211, 0
    %5194 = vmatprep.subr.mxu0 0.0
    %5195 = vmatpush1.msra.mxu0 0.0
    %5196 = vmatprep.subr.mxu0 0.0
    %5197 = vmatpush1.msra.mxu0 0.0
    %5198 = vmatprep.subr.mxu0 0.0
    %5199 = vmatpush1.msra.mxu0 0.0
    %5200 = vmatprep.subr.mxu0 0.0
    %5201 = vmatpush1.msra.mxu0 0.0
    %5202 = vmatprep.subr.mxu0 0.0
    %5203 = vmatpush1.msra.mxu0 0.0
    %5204 = vmatprep.subr.mxu0 0.0
    %5205 = vmatpush1.msra.mxu0 0.0
    %5206 = vmatprep.subr.mxu0 0.0
    %5207 = vmatpush1.msra.mxu0 0.0
    %5208 = vmatprep.subr.mxu0 0.0
    %5209 = vmatpush1.msra.mxu0 0.0
    %5210 = vmatprep.subr.mxu0 0.0
    %5211 = vmatpush1.msra.mxu0 0.0
    %5212 = vmatprep.subr.mxu0 0.0
    %5213 = vmatpush1.msra.mxu0 0.0
    %5214 = vmatprep.subr.mxu0 0.0
    %5215 = vmatpush1.msra.mxu0 0.0
    %5216 = vmatprep.subr.mxu0 0.0
    %5217 = vmatpush1.msra.mxu0 0.0
    %5218 = vmatprep.subr.mxu0 0.0
    %5219 = vmatpush1.msra.mxu0 %v4281
    %5220 = vmatprep.subr.mxu0 0.0
    %5221 = vmatpush1.msra.mxu0 %v4280
    %5222 = vmatprep.subr.mxu0 0.0
    %5223 = vmatpush1.msra.mxu0 %v4279
    %5224 = vmatprep.subr.mxu0 0.0
    %5225 = vmatpush1.msra.mxu0 %v4278
    %5226 = vmatprep.subr.mxu0 0.0
    %5227 = vmatpush2.msra.mxu0 0.0
    %5228 = vmatprep.subr.mxu0 0.0
    %5229 = vmatpush2.msra.mxu0 0.0
    %5230 = vmatprep.subr.mxu0 0.0
    %5231 = vmatpush2.msra.mxu0 0.0
    %5232 = vmatprep.subr.mxu0 0.0
    %5233 = vmatpush2.msra.mxu0 0.0
    %5234 = vmatprep.subr.mxu0 0.0
    %5235 = vmatpush2.msra.mxu0 0.0
    %5236 = vmatprep.subr.mxu0 0.0
    %5237 = vmatpush2.msra.mxu0 0.0
    %5238 = vmatprep.subr.mxu0 0.0
    %5239 = vmatpush2.msra.mxu0 0.0
    %5240 = vmatprep.subr.mxu0 0.0
    %5241 = vmatpush2.msra.mxu0 0.0
    %5242 = vmatprep.subr.mxu0 0.0
    %5243 = vmatpush2.msra.mxu0 0.0
    %5244 = vmatprep.subr.mxu0 0.0
    %5245 = vmatpush2.msra.mxu0 0.0
    %5246 = vmatprep.subr.mxu0 0.0
    %5247 = vmatpush2.msra.mxu0 0.0
    %5248 = vmatprep.subr.mxu0 0.0
    %5249 = vmatpush2.msra.mxu0 0.0
    %5250 = vmatprep.subr.mxu0 0.0
    %5251 = vmatpush2.msra.mxu0 0.0
    %5252 = vmatprep.subr.mxu0 0.0
    %5253 = vmatpush2.msra.mxu0 0.0
    %5254 = vmatprep.subr.mxu0 0.0
    %5255 = vmatpush2.msra.mxu0 0.0
    %5256 = vmatprep.subr.mxu0 0.0
    %5257 = vmatpush2.msra.mxu0 0.0
    %5258 = vmatprep.mubr.f32.mxu0 0.0
    %5259 = vmatmul.mubr.f32.gmra.mxu0 %v5183
    %v5260 = vpop.f32.mrf.mxu0
    %v5261 = vadd.f32 %v5180, %v5260
    %v5262 = vpop.f32.mrf.mxu0
    %5263 = vmatprep.mubr.f32.mxu0 0.0
    %5264 = vmatmul.mubr.f32.gmra.mxu0 %v5186
    %v5265 = vpop.f32.mrf.mxu0
    %v5266 = vadd.f32 %v5180, %v5265
    %v5267 = vpop.f32.mrf.mxu0
    %5268 = vmatprep.mubr.f32.mxu0 0.0
    %5269 = vmatmul.mubr.f32.gmra.mxu0 %v5189
    %v5270 = vpop.f32.mrf.mxu0
    %v5271 = vadd.f32 %v5180, %v5270
    %v5272 = vpop.f32.mrf.mxu0
    %5273 = vmatprep.mubr.f32.mxu0 0.0
    %5274 = vmatmul.mubr.f32.gmra.mxu0 %v5192
    %v5275 = vpop.f32.mrf.mxu0
    %v5276 = vadd.f32 %v5180, %v5275
    %v5277 = vpop.f32.mrf.mxu0
    %5278 = vdwg.mxu0
    %v5279 = vld [vmem:[#allocation3] sm:$0x1]
    %v5280 = vld [vmem:[#allocation3 + $0x2] sm:$0x1]
    %v5281 = vld [vmem:[#allocation3 + $0x4] sm:$0x1]
    %v5282 = vld [vmem:[#allocation3 + $0x6] sm:$0x1]
    %v5283 = vld [vmem:[#allocation3 + $0x8] sm:$0x1]
    %v5284 = vld [vmem:[#allocation3 + $0xa] sm:$0x1]
    %v5285 = vld [vmem:[#allocation3 + $0xc] sm:$0x1]
    %v5286 = vld [vmem:[#allocation3 + $0xe] sm:$0x1]
    %v5295 = vrot.slane %v5280, 7
    %v5296 = vsel %vm1320, %v5295, %v5279
    %v5297 = vrot.slane %v5281, 6
    %v5298 = vsel %vm1323, %v5297, %v5296
    %v5299 = vrot.slane %v5282, 5
    %v5300 = vsel %vm1326, %v5299, %v5298
    %v5301 = vrot.slane %v5283, 4
    %v5302 = vsel %vm1329, %v5301, %v5300
    %v5303 = vrot.slane %v5284, 3
    %v5304 = vsel %vm1332, %v5303, %v5302
    %v5305 = vrot.slane %v5285, 2
    %v5306 = vsel %vm1335, %v5305, %v5304
    %v5307 = vrot.slane %v5286, 1
    %v5308 = vsel %vm1338, %v5307, %v5306
    %5310 = vrot.lane.b32.xlu0 %v5308, 96
    %v5311 = vpop.permute.xlu0 %5310
    %5313 = vmatprep.subr.mxu0 0.0
    %5314 = vmatpush1.msra.mxu0 0.0
    %5315 = vmatprep.subr.mxu0 0.0
    %5316 = vmatpush1.msra.mxu0 0.0
    %5317 = vmatprep.subr.mxu0 0.0
    %5318 = vmatpush1.msra.mxu0 0.0
    %5319 = vmatprep.subr.mxu0 0.0
    %5320 = vmatpush1.msra.mxu0 0.0
    %5321 = vmatprep.subr.mxu0 0.0
    %5322 = vmatpush1.msra.mxu0 0.0
    %5323 = vmatprep.subr.mxu0 0.0
    %5324 = vmatpush1.msra.mxu0 0.0
    %5325 = vmatprep.subr.mxu0 0.0
    %5326 = vmatpush1.msra.mxu0 0.0
    %5327 = vmatprep.subr.mxu0 0.0
    %5328 = vmatpush1.msra.mxu0 0.0
    %5329 = vmatprep.subr.mxu0 0.0
    %5330 = vmatpush1.msra.mxu0 0.0
    %5331 = vmatprep.subr.mxu0 0.0
    %5332 = vmatpush1.msra.mxu0 0.0
    %5333 = vmatprep.subr.mxu0 0.0
    %5334 = vmatpush1.msra.mxu0 0.0
    %5335 = vmatprep.subr.mxu0 0.0
    %5336 = vmatpush1.msra.mxu0 0.0
    %5337 = vmatprep.subr.mxu0 0.0
    %5338 = vmatpush1.msra.mxu0 0.0
    %5339 = vmatprep.subr.mxu0 0.0
    %5340 = vmatpush1.msra.mxu0 0.0
    %5341 = vmatprep.subr.mxu0 0.0
    %5342 = vmatpush1.msra.mxu0 %v5311
    %5343 = vmatprep.subr.mxu0 0.0
    %5344 = vmatpush1.msra.mxu0 %v5308
    %5345 = vmatprep.subr.mxu0 0.0
    %5346 = vmatpush2.msra.mxu0 0.0
    %5347 = vmatprep.subr.mxu0 0.0
    %5348 = vmatpush2.msra.mxu0 0.0
    %5349 = vmatprep.subr.mxu0 0.0
    %5350 = vmatpush2.msra.mxu0 0.0
    %5351 = vmatprep.subr.mxu0 0.0
    %5352 = vmatpush2.msra.mxu0 0.0
    %5353 = vmatprep.subr.mxu0 0.0
    %5354 = vmatpush2.msra.mxu0 0.0
    %5355 = vmatprep.subr.mxu0 0.0
    %5356 = vmatpush2.msra.mxu0 0.0
    %5357 = vmatprep.subr.mxu0 0.0
    %5358 = vmatpush2.msra.mxu0 0.0
    %5359 = vmatprep.subr.mxu0 0.0
    %5360 = vmatpush2.msra.mxu0 0.0
    %5361 = vmatprep.subr.mxu0 0.0
    %5362 = vmatpush2.msra.mxu0 0.0
    %5363 = vmatprep.subr.mxu0 0.0
    %5364 = vmatpush2.msra.mxu0 0.0
    %5365 = vmatprep.subr.mxu0 0.0
    %5366 = vmatpush2.msra.mxu0 0.0
    %5367 = vmatprep.subr.mxu0 0.0
    %5368 = vmatpush2.msra.mxu0 0.0
    %5369 = vmatprep.subr.mxu0 0.0
    %5370 = vmatpush2.msra.mxu0 0.0
    %5371 = vmatprep.subr.mxu0 0.0
    %5372 = vmatpush2.msra.mxu0 0.0
    %5373 = vmatprep.subr.mxu0 0.0
    %5374 = vmatpush2.msra.mxu0 0.0
    %5375 = vmatprep.subr.mxu0 0.0
    %5376 = vmatpush2.msra.mxu0 0.0
    %5377 = vmatprep.mubr.f32.mxu0 0.0
    %5378 = vmatmul.mubr.f32.gmra.mxu0 %v1345
    %v5379 = vpop.f32.mrf.mxu0
    %v5380 = vadd.f32 %v5261, %v5379
    %v5381 = vpop.f32.mrf.mxu0
    %5382 = vmatprep.mubr.f32.mxu0 0.0
    %5383 = vmatmul.mubr.f32.gmra.mxu0 %v1348
    %v5384 = vpop.f32.mrf.mxu0
    %v5385 = vadd.f32 %v5266, %v5384
    %v5386 = vpop.f32.mrf.mxu0
    %5387 = vdwg.mxu0
    %v5388 = vld [vmem:[#allocation3 + $0x1] sm:$0x1]
    %v5389 = vld [vmem:[#allocation3 + $0x3] sm:$0x1]
    %v5390 = vld [vmem:[#allocation3 + $0x5] sm:$0x1]
    %v5391 = vld [vmem:[#allocation3 + $0x7] sm:$0x1]
    %v5392 = vld [vmem:[#allocation3 + $0x9] sm:$0x1]
    %v5393 = vld [vmem:[#allocation3 + $0xb] sm:$0x1]
    %v5394 = vld [vmem:[#allocation3 + $0xd] sm:$0x1]
    %v5395 = vld [vmem:[#allocation3 + $0xf] sm:$0x1]
    %v5404 = vrot.slane %v5389, 7
    %v5405 = vsel %vm1320, %v5404, %v5388
    %v5406 = vrot.slane %v5390, 6
    %v5407 = vsel %vm1323, %v5406, %v5405
    %v5408 = vrot.slane %v5391, 5
    %v5409 = vsel %vm1326, %v5408, %v5407
    %v5410 = vrot.slane %v5392, 4
    %v5411 = vsel %vm1329, %v5410, %v5409
    %v5412 = vrot.slane %v5393, 3
    %v5413 = vsel %vm1332, %v5412, %v5411
    %v5414 = vrot.slane %v5394, 2
    %v5415 = vsel %vm1335, %v5414, %v5413
    %v5416 = vrot.slane %v5395, 1
    %v5417 = vsel %vm1338, %v5416, %v5415
    %5419 = vrot.lane.b32.xlu0 %v5417, 96
    %v5420 = vpop.permute.xlu0 %5419
    %5422 = vmatprep.subr.mxu0 0.0
    %5423 = vmatpush1.msra.mxu0 0.0
    %5424 = vmatprep.subr.mxu0 0.0
    %5425 = vmatpush1.msra.mxu0 0.0
    %5426 = vmatprep.subr.mxu0 0.0
    %5427 = vmatpush1.msra.mxu0 0.0
    %5428 = vmatprep.subr.mxu0 0.0
    %5429 = vmatpush1.msra.mxu0 0.0
    %5430 = vmatprep.subr.mxu0 0.0
    %5431 = vmatpush1.msra.mxu0 0.0
    %5432 = vmatprep.subr.mxu0 0.0
    %5433 = vmatpush1.msra.mxu0 0.0
    %5434 = vmatprep.subr.mxu0 0.0
    %5435 = vmatpush1.msra.mxu0 0.0
    %5436 = vmatprep.subr.mxu0 0.0
    %5437 = vmatpush1.msra.mxu0 0.0
    %5438 = vmatprep.subr.mxu0 0.0
    %5439 = vmatpush1.msra.mxu0 0.0
    %5440 = vmatprep.subr.mxu0 0.0
    %5441 = vmatpush1.msra.mxu0 0.0
    %5442 = vmatprep.subr.mxu0 0.0
    %5443 = vmatpush1.msra.mxu0 0.0
    %5444 = vmatprep.subr.mxu0 0.0
    %5445 = vmatpush1.msra.mxu0 0.0
    %5446 = vmatprep.subr.mxu0 0.0
    %5447 = vmatpush1.msra.mxu0 0.0
    %5448 = vmatprep.subr.mxu0 0.0
    %5449 = vmatpush1.msra.mxu0 0.0
    %5450 = vmatprep.subr.mxu0 0.0
    %5451 = vmatpush1.msra.mxu0 %v5420
    %5452 = vmatprep.subr.mxu0 0.0
    %5453 = vmatpush1.msra.mxu0 %v5417
    %5454 = vmatprep.subr.mxu0 0.0
    %5455 = vmatpush2.msra.mxu0 0.0
    %5456 = vmatprep.subr.mxu0 0.0
    %5457 = vmatpush2.msra.mxu0 0.0
    %5458 = vmatprep.subr.mxu0 0.0
    %5459 = vmatpush2.msra.mxu0 0.0
    %5460 = vmatprep.subr.mxu0 0.0
    %5461 = vmatpush2.msra.mxu0 0.0
    %5462 = vmatprep.subr.mxu0 0.0
    %5463 = vmatpush2.msra.mxu0 0.0
    %5464 = vmatprep.subr.mxu0 0.0
    %5465 = vmatpush2.msra.mxu0 0.0
    %5466 = vmatprep.subr.mxu0 0.0
    %5467 = vmatpush2.msra.mxu0 0.0
    %5468 = vmatprep.subr.mxu0 0.0
    %5469 = vmatpush2.msra.mxu0 0.0
    %5470 = vmatprep.subr.mxu0 0.0
    %5471 = vmatpush2.msra.mxu0 0.0
    %5472 = vmatprep.subr.mxu0 0.0
    %5473 = vmatpush2.msra.mxu0 0.0
    %5474 = vmatprep.subr.mxu0 0.0
    %5475 = vmatpush2.msra.mxu0 0.0
    %5476 = vmatprep.subr.mxu0 0.0
    %5477 = vmatpush2.msra.mxu0 0.0
    %5478 = vmatprep.subr.mxu0 0.0
    %5479 = vmatpush2.msra.mxu0 0.0
    %5480 = vmatprep.subr.mxu0 0.0
    %5481 = vmatpush2.msra.mxu0 0.0
    %5482 = vmatprep.subr.mxu0 0.0
    %5483 = vmatpush2.msra.mxu0 0.0
    %5484 = vmatprep.subr.mxu0 0.0
    %5485 = vmatpush2.msra.mxu0 0.0
    %5486 = vmatprep.mubr.f32.mxu0 0.0
    %5487 = vmatmul.mubr.f32.gmra.mxu0 %v1345
    %v5488 = vpop.f32.mrf.mxu0
    %v5489 = vadd.f32 %v5271, %v5488
    %v5490 = vpop.f32.mrf.mxu0
    %5491 = vmatprep.mubr.f32.mxu0 0.0
    %5492 = vmatmul.mubr.f32.gmra.mxu0 %v1348
    %v5493 = vpop.f32.mrf.mxu0
    %v5494 = vadd.f32 %v5276, %v5493
    %v5495 = vpop.f32.mrf.mxu0
    %5496 = vdwg.mxu0
    %v5497 = vld [vmem:[%s8] sm:$0xff]
    %v5498 = vld [vmem:[%s8 + $0x8] sm:$0xff]
    %v5499 = vld [vmem:[%s8 + $0x10] sm:$0xff]
    %v5500 = vld [vmem:[%s8 + $0x18] sm:$0xff]
    %v5501 = vld [vmem:[%s9] sm:$0x1]
    %v5503 = vlaneseq
    %v5504 = vshrl.u32 %v5503, 7
    %v5505 = vsub.s32 0, %v5504
    %v5506 = vrot.slane %v5501, %v5505
    %v5509 = vsel %vm383, %v5380, 0
    %v5512 = vsel %vm383, %v5385, 0
    %v5515 = vsel %vm383, %v5489, 0
    %v5518 = vsel %vm383, %v5494, 0
    %5520 = vmatprep.subr.mxu0 0.0
    %5521 = vmatpush1.msra.mxu0 0.0
    %5522 = vmatprep.subr.mxu0 0.0
    %5523 = vmatpush1.msra.mxu0 0.0
    %5524 = vmatprep.subr.mxu0 0.0
    %5525 = vmatpush1.msra.mxu0 0.0
    %5526 = vmatprep.subr.mxu0 0.0
    %5527 = vmatpush1.msra.mxu0 0.0
    %5528 = vmatprep.subr.mxu0 0.0
    %5529 = vmatpush1.msra.mxu0 0.0
    %5530 = vmatprep.subr.mxu0 0.0
    %5531 = vmatpush1.msra.mxu0 0.0
    %5532 = vmatprep.subr.mxu0 0.0
    %5533 = vmatpush1.msra.mxu0 0.0
    %5534 = vmatprep.subr.mxu0 0.0
    %5535 = vmatpush1.msra.mxu0 0.0
    %5536 = vmatprep.subr.mxu0 0.0
    %5537 = vmatpush1.msra.mxu0 0.0
    %5538 = vmatprep.subr.mxu0 0.0
    %5539 = vmatpush1.msra.mxu0 0.0
    %5540 = vmatprep.subr.mxu0 0.0
    %5541 = vmatpush1.msra.mxu0 0.0
    %5542 = vmatprep.subr.mxu0 0.0
    %5543 = vmatpush1.msra.mxu0 0.0
    %5544 = vmatprep.subr.mxu0 0.0
    %5545 = vmatpush1.msra.mxu0 %v5500
    %5546 = vmatprep.subr.mxu0 0.0
    %5547 = vmatpush1.msra.mxu0 %v5499
    %5548 = vmatprep.subr.mxu0 0.0
    %5549 = vmatpush1.msra.mxu0 %v5498
    %5550 = vmatprep.subr.mxu0 0.0
    %5551 = vmatpush1.msra.mxu0 %v5497
    %5552 = vmatprep.subr.mxu0 0.0
    %5553 = vmatpush2.msra.mxu0 0.0
    %5554 = vmatprep.subr.mxu0 0.0
    %5555 = vmatpush2.msra.mxu0 0.0
    %5556 = vmatprep.subr.mxu0 0.0
    %5557 = vmatpush2.msra.mxu0 0.0
    %5558 = vmatprep.subr.mxu0 0.0
    %5559 = vmatpush2.msra.mxu0 0.0
    %5560 = vmatprep.subr.mxu0 0.0
    %5561 = vmatpush2.msra.mxu0 0.0
    %5562 = vmatprep.subr.mxu0 0.0
    %5563 = vmatpush2.msra.mxu0 0.0
    %5564 = vmatprep.subr.mxu0 0.0
    %5565 = vmatpush2.msra.mxu0 0.0
    %5566 = vmatprep.subr.mxu0 0.0
    %5567 = vmatpush2.msra.mxu0 0.0
    %5568 = vmatprep.subr.mxu0 0.0
    %5569 = vmatpush2.msra.mxu0 0.0
    %5570 = vmatprep.subr.mxu0 0.0
    %5571 = vmatpush2.msra.mxu0 0.0
    %5572 = vmatprep.subr.mxu0 0.0
    %5573 = vmatpush2.msra.mxu0 0.0
    %5574 = vmatprep.subr.mxu0 0.0
    %5575 = vmatpush2.msra.mxu0 0.0
    %5576 = vmatprep.subr.mxu0 0.0
    %5577 = vmatpush2.msra.mxu0 0.0
    %5578 = vmatprep.subr.mxu0 0.0
    %5579 = vmatpush2.msra.mxu0 0.0
    %5580 = vmatprep.subr.mxu0 0.0
    %5581 = vmatpush2.msra.mxu0 0.0
    %5582 = vmatprep.subr.mxu0 0.0
    %5583 = vmatpush2.msra.mxu0 0.0
    %5584 = vmatprep.mubr.f32.mxu0 0.0
    %5585 = vmatmul.mubr.f32.gmra.mxu0 %v5509
    %v5586 = vpop.f32.mrf.mxu0
    %v5587 = vadd.f32 %v5506, %v5586
    %v5588 = vpop.f32.mrf.mxu0
    %5589 = vmatprep.mubr.f32.mxu0 0.0
    %5590 = vmatmul.mubr.f32.gmra.mxu0 %v5512
    %v5591 = vpop.f32.mrf.mxu0
    %v5592 = vadd.f32 %v5506, %v5591
    %v5593 = vpop.f32.mrf.mxu0
    %5594 = vmatprep.mubr.f32.mxu0 0.0
    %5595 = vmatmul.mubr.f32.gmra.mxu0 %v5515
    %v5596 = vpop.f32.mrf.mxu0
    %v5597 = vadd.f32 %v5506, %v5596
    %v5598 = vpop.f32.mrf.mxu0
    %5599 = vmatprep.mubr.f32.mxu0 0.0
    %5600 = vmatmul.mubr.f32.gmra.mxu0 %v5518
    %v5601 = vpop.f32.mrf.mxu0
    %v5602 = vadd.f32 %v5506, %v5601
    %v5603 = vpop.f32.mrf.mxu0
    %5604 = vdwg.mxu0
    %v5605 = vmul.f32 %v5587, %v5587
    %v5606 = vmul.f32 %v5592, %v5592
    %v5607 = vmul.f32 %v5597, %v5597
    %v5608 = vmul.f32 %v5602, %v5602
    %v5609 = vmul.f32 %v5587, %v5605
    %v5610 = vmul.f32 %v5592, %v5606
    %v5611 = vmul.f32 %v5597, %v5607
    %v5612 = vmul.f32 %v5602, %v5608
    %v5613 = vmul.f32 %v5609, 0.044715
    %v5614 = vmul.f32 %v5610, 0.044715
    %v5615 = vmul.f32 %v5611, 0.044715
    %v5616 = vmul.f32 %v5612, 0.044715
    %v5617 = vadd.f32 %v5587, %v5613
    %v5618 = vadd.f32 %v5592, %v5614
    %v5619 = vadd.f32 %v5597, %v5615
    %v5620 = vadd.f32 %v5602, %v5616
    %v5621 = vmul.f32 %v5617, 0.7978846
    %v5622 = vmul.f32 %v5618, 0.7978846
    %v5623 = vmul.f32 %v5619, 0.7978846
    %v5624 = vmul.f32 %v5620, 0.7978846
    %v5625 = vtanh.pop %v5621
    %v5626 = vtanh.pop %v5622
    %v5627 = vtanh.pop %v5623
    %v5628 = vtanh.pop %v5624
    %v5629 = vadd.f32 %v5625, 1.0
    %v5630 = vadd.f32 %v5626, 1.0
    %v5631 = vadd.f32 %v5627, 1.0
    %v5632 = vadd.f32 %v5628, 1.0
    %v5633 = vmul.f32 %v5629, 0.5
    %v5634 = vmul.f32 %v5630, 0.5
    %v5635 = vmul.f32 %v5631, 0.5
    %v5636 = vmul.f32 %v5632, 0.5
    %v5637 = vmul.f32 %v5587, %v5633
    %v5638 = vmul.f32 %v5592, %v5634
    %v5639 = vmul.f32 %v5597, %v5635
    %v5640 = vmul.f32 %v5602, %v5636
    %v5641 = vld [vmem:[%s10] sm:$0x1]
    %v5642 = vld [vmem:[#allocation4] sm:$0x1]
    %5644 = vset.pattern.permute.xlu0 0
    %5645 = vperm.xlu0 %5644, %v5642
    %v5646 = vpop.permute.xlu0 %5645
    %v5648 = vlaneseq
    %v5649 = vshrl.u32 %v5648, 7
    %v5650 = vsub.s32 0, %v5649
    %v5651 = vrot.slane %v5646, %v5650
    %5652 = vmatprep.subr.mxu0 0.0
    %5653 = vmatpush1.xpose.msra.mxu0 0.0
    %5654 = vmatprep.subr.mxu0 0.0
    %5655 = vmatpush1.xpose.msra.mxu0 0.0
    %5656 = vmatprep.subr.mxu0 0.0
    %5657 = vmatpush1.xpose.msra.mxu0 0.0
    %5658 = vmatprep.subr.mxu0 0.0
    %5659 = vmatpush1.xpose.msra.mxu0 0.0
    %5660 = vmatprep.subr.mxu0 0.0
    %5661 = vmatpush1.xpose.msra.mxu0 0.0
    %5662 = vmatprep.subr.mxu0 0.0
    %5663 = vmatpush1.xpose.msra.mxu0 0.0
    %5664 = vmatprep.subr.mxu0 0.0
    %5665 = vmatpush1.xpose.msra.mxu0 0.0
    %5666 = vmatprep.subr.mxu0 0.0
    %5667 = vmatpush1.xpose.msra.mxu0 0.0
    %5668 = vmatprep.subr.mxu0 0.0
    %5669 = vmatpush1.xpose.msra.mxu0 0.0
    %5670 = vmatprep.subr.mxu0 0.0
    %5671 = vmatpush1.xpose.msra.mxu0 0.0
    %5672 = vmatprep.subr.mxu0 0.0
    %5673 = vmatpush1.xpose.msra.mxu0 0.0
    %5674 = vmatprep.subr.mxu0 0.0
    %5675 = vmatpush1.xpose.msra.mxu0 0.0
    %5676 = vmatprep.subr.mxu0 0.0
    %5677 = vmatpush1.xpose.msra.mxu0 %v5640
    %5678 = vmatprep.subr.mxu0 0.0
    %5679 = vmatpush1.xpose.msra.mxu0 %v5639
    %5680 = vmatprep.subr.mxu0 0.0
    %5681 = vmatpush1.xpose.msra.mxu0 %v5638
    %5682 = vmatprep.subr.mxu0 0.0
    %5683 = vmatpush1.xpose.msra.mxu0 %v5637
    %5684 = vmatprep.subr.mxu0 0.0
    %5685 = vmatpush2.xpose.msra.mxu0 0.0
    %5686 = vmatprep.subr.mxu0 0.0
    %5687 = vmatpush2.xpose.msra.mxu0 0.0
    %5688 = vmatprep.subr.mxu0 0.0
    %5689 = vmatpush2.xpose.msra.mxu0 0.0
    %5690 = vmatprep.subr.mxu0 0.0
    %5691 = vmatpush2.xpose.msra.mxu0 0.0
    %5692 = vmatprep.subr.mxu0 0.0
    %5693 = vmatpush2.xpose.msra.mxu0 0.0
    %5694 = vmatprep.subr.mxu0 0.0
    %5695 = vmatpush2.xpose.msra.mxu0 0.0
    %5696 = vmatprep.subr.mxu0 0.0
    %5697 = vmatpush2.xpose.msra.mxu0 0.0
    %5698 = vmatprep.subr.mxu0 0.0
    %5699 = vmatpush2.xpose.msra.mxu0 0.0
    %5700 = vmatprep.subr.mxu0 0.0
    %5701 = vmatpush2.xpose.msra.mxu0 0.0
    %5702 = vmatprep.subr.mxu0 0.0
    %5703 = vmatpush2.xpose.msra.mxu0 0.0
    %5704 = vmatprep.subr.mxu0 0.0
    %5705 = vmatpush2.xpose.msra.mxu0 0.0
    %5706 = vmatprep.subr.mxu0 0.0
    %5707 = vmatpush2.xpose.msra.mxu0 0.0
    %5708 = vmatprep.subr.mxu0 0.0
    %5709 = vmatpush2.xpose.msra.mxu0 0.0
    %5710 = vmatprep.subr.mxu0 0.0
    %5711 = vmatpush2.xpose.msra.mxu0 0.0
    %5712 = vmatprep.subr.mxu0 0.0
    %5713 = vmatpush2.xpose.msra.mxu0 0.0
    %5714 = vmatprep.subr.mxu0 0.0
    %5715 = vmatpush2.xpose.msra.mxu0 0.0
    %5716 = vmatprep.mubr.f32.mxu0 0.0
    %5717 = vmatmul.mubr.f32.gmra.mxu0 %v5641
    %v5718 = vpop.f32.mrf.mxu0
    %v5719 = vadd.f32 %v5651, %v5718
    %v5720 = vpop.f32.mrf.mxu0
    %5721 = vdwg.mxu0
    %vm5722 = vcmask 253952
    %5723 = vst.msk [vmem:[#allocation14] sm:$0x1] %vm5722, %v5719
    // Predicated region
    $region70: #{tpu_custom_call.1} parent=1 // pred_check
      _
    $region71: #{tpu_custom_call.1} parent=1 // pred_check_branch
      %5725 = sbr.rel (0) target = $region73
    $region72: #{tpu_custom_call.1} parent=1 // pred_region
      %s5727 = ssub.s32 16, 16
      %5728 = vsyncadd [#allocation7], %s5727
      %s5730 = sshll.u32 [#allocation14], 4
      %s5731 = int_to_ptr.vmem [resolvable:$true] %s5730
      %5733 = dma.vmem_to_hbm [thread:$0]  %s5731, 16, %s12, [#allocation7]
    $region73: #{tpu_custom_call.1} parent=1 // pred_fallthru
      _
    // Predicated region
    $region74: #{tpu_custom_call.1} parent=1 // pred_check
      _
    $region75: #{tpu_custom_call.1} parent=1 // pred_check_branch
      %5735 = sbr.rel (0) target = $region77
    $region76: #{tpu_custom_call.1} parent=1 // pred_region
      %5736 = dma.done [#allocation7], 16
    $region77: #{tpu_custom_call.1} parent=1 // pred_fallthru
      _
    %5737 = vsyncpa [#allocation6], 1
    %5738 = vsyncpa [#allocation9], 1
    %5739 = vsyncpa [#allocation12], 1
    %5740 = vsyncpa [#allocation7], 1

</llo_original>
